<compile_context>
chip_gen: v6e
topology: v6e:2x2x1
jax: 0.10.0
libtpu: 0.0.40
codegen_flags: <defaults>
</compile_context>

<pallas_src>
import functools
import math

import jax
import jax.numpy as jnp
from jax.experimental import pallas as pl
from jax.experimental.pallas import tpu as pltpu


def _layer_norm(x, gamma, beta, eps=1e-5):
    mean = jnp.mean(x, axis=-1, keepdims=True)
    var = jnp.mean(jnp.square(x - mean), axis=-1, keepdims=True)
    return (x - mean) * jax.lax.rsqrt(var + eps) * gamma + beta


def encoder_layer_kernel(
    src_ref,            # (S, D)  f32   full sequence for this batch element
    wqkv_ref,           # (D, 3D) bf16  [Wq | Wk | Wv]
    bqkv_ref,           # (1, 3D) f32   [bq | bk | bv]
    wo_ref,             # (D, D)  bf16
    w1_ref,             # (D, F)  bf16
    b1_ref,             # (1, F)  f32
    w2_ref,             # (F, D)  bf16
    vecs_ref,           # (8, D)  f32   rows: bo, g1, be1, b2, g2, be2, 0, 0
    out_ref,            # (tq, D) f32   output tile
    kh_ref,             # (H, S, dk) bf16 scratch (per-head K for current batch element)
    vh_ref,             # (H, S, dk) bf16 scratch (per-head V for current batch element)
    *, num_heads: int,
):
    S, D = src_ref.shape
    tq = out_ref.shape[0]
    dk = D // num_heads
    scale = 1.0 / math.sqrt(float(dk))
    qi = pl.program_id(1)

    # ---- once per batch element: per-head K/V from a single wide (S,D)x(D,2D) matmul -----------
    @pl.when(qi == 0)
    def _():
        x_all = src_ref[...].astype(jnp.bfloat16)                              # (S, D)
        kv = jnp.dot(x_all, wqkv_ref[:, D:],                                   # lane-aligned slice
                     preferred_element_type=jnp.float32) + bqkv_ref[:, D:]     # (S, 2D) f32
        for h in range(num_heads):
            kh_ref[h] = kv[:, h * dk:(h + 1) * dk].astype(jnp.bfloat16)
            vh_ref[h] = kv[:, D + h * dk:D + (h + 1) * dk].astype(jnp.bfloat16)

    # ---- Q projection for this sequence tile (full-width N=D matmul) ---------------------------
    row0 = pl.multiple_of(qi * tq, tq)
    x_q = src_ref[pl.ds(row0, tq), :]                                          # (tq, D) f32
    q = jnp.dot(x_q.astype(jnp.bfloat16), wqkv_ref[:, :D],
                preferred_element_type=jnp.float32)
    q = (q + bqkv_ref[:, :D]) * scale                                          # (tq, D) f32
    qh = jnp.stack([q[:, h * dk:(h + 1) * dk] for h in range(num_heads)],
                   axis=0).astype(jnp.bfloat16)                                # (H, tq, dk)

    # ---- scaled dot-product attention, batched over heads --------------------------------------
    scores = jnp.einsum("hqd,hkd->hqk", qh, kh_ref[...],
                        preferred_element_type=jnp.float32)                    # (H, tq, S) f32
    m = jnp.max(scores, axis=-1, keepdims=True)
    e = jnp.exp(scores - m)
    p = e * pl.reciprocal(jnp.sum(e, axis=-1, keepdims=True), approx=True)
    ctx = jnp.einsum("hqk,hkd->hqd", p.astype(jnp.bfloat16), vh_ref[...],
                     preferred_element_type=jnp.float32)                       # (H, tq, dk) f32

    # ---- output projection: merge heads back to lanes, single (tq,D)x(D,D) matmul --------------
    ctx2d = jnp.concatenate([ctx[h] for h in range(num_heads)],
                            axis=-1).astype(jnp.bfloat16)                      # (tq, D)
    attn_out = jnp.dot(ctx2d, wo_ref[...],
                       preferred_element_type=jnp.float32) + vecs_ref[0:1, :]  # + bo

    # ---- residual + LayerNorm 1 (f32) -----------------------------------------------------------
    src1 = _layer_norm(x_q + attn_out, vecs_ref[1:2, :], vecs_ref[2:3, :])     # g1, be1

    # ---- position-wise feed forward (bf16 MXU, f32 accumulation) -------------------------------
    h1 = jnp.dot(src1.astype(jnp.bfloat16), w1_ref[...],
                 preferred_element_type=jnp.float32) + b1_ref[...]
    h1 = jnp.maximum(h1, 0.0)
    ff = jnp.dot(h1.astype(jnp.bfloat16), w2_ref[...],
                 preferred_element_type=jnp.float32) + vecs_ref[3:4, :]        # + b2

    # ---- residual + LayerNorm 2 (f32) -----------------------------------------------------------
    out_ref[...] = _layer_norm(src1 + ff, vecs_ref[4:5, :], vecs_ref[5:6, :])  # g2, be2


def _vmem_limit_bytes(default=48 * 1024 * 1024):
    """Generation-aware VMEM budget (~0.65x capacity, capped), e.g. ~41 MiB on v7x."""
    try:
        cap = int(pltpu.get_tpu_info().vmem_capacity_bytes)
        return max(16 * 1024 * 1024, min(int(cap * 0.65), 100 * 1024 * 1024))
    except Exception:
        return default


def prepare_params(params, num_heads):
    """One-time weight repacking (hoisted out of the per-call wrapper)."""
    del num_heads  # head split happens via lane-aligned slicing inside the kernel
    zeros = jnp.zeros_like(params["bo"])
    return {
        "wqkv": jnp.concatenate([params["wq"], params["wk"], params["wv"]],
                                axis=1).astype(jnp.bfloat16),                  # (D, 3D)
        "bqkv": jnp.concatenate([params["bq"], params["bk"], params["bv"]]
                                ).reshape(1, -1).astype(jnp.float32),          # (1, 3D)
        "wo": params["wo"].astype(jnp.bfloat16),                               # (D, D)
        "w1": params["w1"].astype(jnp.bfloat16),                               # (D, F)
        "b1": params["b1"].reshape(1, -1).astype(jnp.float32),                 # (1, F)
        "w2": params["w2"].astype(jnp.bfloat16),                               # (F, D)
        "vecs": jnp.stack([params["bo"], params["g1"], params["be1"],
                           params["b2"], params["g2"], params["be2"],
                           zeros, zeros], axis=0).astype(jnp.float32),         # (8, D)
    }


def transformer_encoder_layer(src, prepped, num_heads, *, seq_tile=None):
    """src: (B, S, D) float32.  prepped: output of prepare_params()."""
    B, S, D = src.shape
    assert D % num_heads == 0
    if seq_tile is None:
        seq_tile = min(S, 256)     # on v6e/v5e (128 MiB VMEM) larger tiles are fine; v7x prefers <=256
    assert S % seq_tile == 0 and (seq_tile % 8 == 0 or seq_tile == S)
    dk = D // num_heads
    n_q = S // seq_tile

    args = (src, prepped["wqkv"], prepped["bqkv"], prepped["wo"],
            prepped["w1"], prepped["b1"], prepped["w2"], prepped["vecs"])

    def build(single_buffer_weights):
        def wspec(shape):
            if single_buffer_weights:
                # Grid-invariant operands: no need to double-buffer (saves weight VMEM, esp. v7x).
                return pl.BlockSpec(shape, lambda b, qi: (0, 0),
                                    pipeline_mode=pl.Buffered(1))
            return pl.BlockSpec(shape, lambda b, qi: (0, 0))

        in_specs = [pl.BlockSpec((None, S, D), lambda b, qi: (b, 0, 0))]       # src, batch squeezed
        in_specs += [wspec(a.shape) for a in args[1:]]

        return pl.pallas_call(
            functools.partial(encoder_layer_kernel, num_heads=num_heads),
            out_shape=jax.ShapeDtypeStruct((B, S, D), jnp.float32),
            grid_spec=pltpu.PrefetchScalarGridSpec(
                num_scalar_prefetch=0,
                grid=(B, n_q),
                in_specs=in_specs,
                out_specs=pl.BlockSpec((None, seq_tile, D), lambda b, qi: (b, qi, 0)),
                scratch_shapes=[pltpu.VMEM((num_heads, S, dk), jnp.bfloat16),  # per-head K
                                pltpu.VMEM((num_heads, S, dk), jnp.bfloat16)], # per-head V
            ),
            compiler_params=pltpu.CompilerParams(
                dimension_semantics=("parallel", "arbitrary"),
                vmem_limit_bytes=_vmem_limit_bytes(),
            ),
        )

    try:
        return build(True)(*args)
    except Exception:
        # Fallback if this jax build rejects pl.Buffered(1): double-buffered weights, same result.
        return build(False)(*args)


def init_params(key, d_model, d_ff):
    ks = jax.random.split(key, 12)
    u = lambda k, shape, fan_in: jax.random.uniform(
        k, shape, jnp.float32, -1.0 / math.sqrt(fan_in), 1.0 / math.sqrt(fan_in)
    )
    # nn.Linear weights stored transposed to (in, out) so kernel does x @ W + b.
    return {
        "wq": u(ks[0], (d_model, d_model), d_model), "bq": u(ks[1], (d_model,), d_model),
        "wk": u(ks[2], (d_model, d_model), d_model), "bk": u(ks[3], (d_model,), d_model),
        "wv": u(ks[4], (d_model, d_model), d_model), "bv": u(ks[5], (d_model,), d_model),
        "wo": u(ks[6], (d_model, d_model), d_model), "bo": u(ks[7], (d_model,), d_model),
        "g1": jnp.ones((d_model,), jnp.float32), "be1": jnp.zeros((d_model,), jnp.float32),
        "w1": u(ks[8], (d_model, d_ff), d_model), "b1": u(ks[9], (d_ff,), d_model),
        "w2": u(ks[10], (d_ff, d_model), d_ff), "b2": u(ks[11], (d_model,), d_ff),
        "g2": jnp.ones((d_model,), jnp.float32), "be2": jnp.zeros((d_model,), jnp.float32),
    }


def reference_forward(src, params, num_heads):
    """Pure-JAX f32 reference mirroring the PyTorch module (dropout = identity, mask = None)."""
    B, S, D = src.shape
    d_k = D // num_heads

    def lin(x, w, b):
        return jnp.einsum("bsd,df->bsf", x, w) + b

    q = lin(src, params["wq"], params["bq"]).reshape(B, S, num_heads, d_k).transpose(0, 2, 1, 3)
    k = lin(src, params["wk"], params["bk"]).reshape(B, S, num_heads, d_k).transpose(0, 2, 1, 3)
    v = lin(src, params["wv"], params["bv"]).reshape(B, S, num_heads, d_k).transpose(0, 2, 1, 3)
    scores = jnp.einsum("bhqd,bhkd->bhqk", q, k) / jnp.sqrt(jnp.float32(d_k))
    attn = jax.nn.softmax(scores, axis=-1)
    out = jnp.einsum("bhqk,bhkd->bhqd", attn, v).transpose(0, 2, 1, 3).reshape(B, S, D)
    out = lin(out, params["wo"], params["bo"])

    def ln(x, g, b, eps=1e-5):
        m = jnp.mean(x, -1, keepdims=True)
        var = jnp.mean((x - m) ** 2, -1, keepdims=True)
        return (x - m) / jnp.sqrt(var + eps) * g + b

    src1 = ln(src + out, params["g1"], params["be1"])
    ff = lin(jnp.maximum(lin(src1, params["w1"], params["b1"]), 0.0), params["w2"], params["b2"])
    return ln(src1 + ff, params["g2"], params["be2"])


if __name__ == "__main__":
    # Small, lane-dense demo shapes: D multiple of 128, S tiled into 4 steps -> grid (2, 4).
    B, S, D, H, F = 2, 64, 128, 4, 256
    key = jax.random.PRNGKey(0)
    k_param, k_src = jax.random.split(key)
    params = init_params(k_param, D, F)
    prepped = prepare_params(params, H)          # one-time weight repacking (hoisted out of the call)
    src = jax.random.normal(k_src, (B, S, D), jnp.float32)

    out = transformer_encoder_layer(src, prepped, H, seq_tile=16)
    out = jax.block_until_ready(out)

    ref = reference_forward(src, params, H)
    assert out.shape == (B, S, D)
    # bf16 MXU operands with f32 accumulation -> loosened tolerance vs pure-f32 reference.
    assert jnp.allclose(out, ref, atol=5e-2, rtol=5e-2), "mismatch vs reference"
    print("KERNEL_OK")
</pallas_src>

<mosaic_0001>
module attributes {stable_mosaic.version = 11 : i64} {
  func.func @encoder_layer_kernel(%arg0: i32, %arg1: i32, %arg2: memref<1x64x128xf32, #tpu.memory_space<vmem>>, %arg3: memref<128x384xbf16, #tpu.memory_space<vmem>>, %arg4: memref<1x384xf32, #tpu.memory_space<vmem>>, %arg5: memref<128x128xbf16, #tpu.memory_space<vmem>>, %arg6: memref<128x256xbf16, #tpu.memory_space<vmem>>, %arg7: memref<1x256xf32, #tpu.memory_space<vmem>>, %arg8: memref<256x128xbf16, #tpu.memory_space<vmem>>, %arg9: memref<8x128xf32, #tpu.memory_space<vmem>>, %arg10: memref<1x16x128xf32, #tpu.memory_space<vmem>>, %arg11: memref<4x64x32xbf16, #tpu.memory_space<vmem>>, %arg12: memref<4x64x32xbf16, #tpu.memory_space<vmem>>) attributes {dimension_semantics = [#tpu.dimension_semantics<parallel>, #tpu.dimension_semantics<arbitrary>], iteration_bounds = array<i64: 2, 4>, scalar_prefetch = 0 : i64, scratch_operands = 2 : i64, tpu.core_type = #tpu.core_type<tc>, window_params = [{transform_indices = @transform_0, window_bounds = array<i64: 1, 64, 128>}, {pipeline_mode = #tpu.pipeline_mode<synchronous>, transform_indices = @transform_1, window_bounds = array<i64: 128, 384>}, {pipeline_mode = #tpu.pipeline_mode<synchronous>, transform_indices = @transform_2, window_bounds = array<i64: 1, 384>}, {pipeline_mode = #tpu.pipeline_mode<synchronous>, transform_indices = @transform_3, window_bounds = array<i64: 128, 128>}, {pipeline_mode = #tpu.pipeline_mode<synchronous>, transform_indices = @transform_4, window_bounds = array<i64: 128, 256>}, {pipeline_mode = #tpu.pipeline_mode<synchronous>, transform_indices = @transform_5, window_bounds = array<i64: 1, 256>}, {pipeline_mode = #tpu.pipeline_mode<synchronous>, transform_indices = @transform_6, window_bounds = array<i64: 256, 128>}, {pipeline_mode = #tpu.pipeline_mode<synchronous>, transform_indices = @transform_7, window_bounds = array<i64: 8, 128>}, {transform_indices = @transform_8, window_bounds = array<i64: 1, 16, 128>}]} {
    %c0_i32 = arith.constant 0 : i32
    %0 = arith.cmpi eq, %arg1, %c0_i32 : i32
    %1 = arith.extui %0 : i1 to i32
    %c0_i32_0 = arith.constant 0 : i32
    %2 = arith.cmpi ne, %1, %c0_i32_0 : i32
    scf.if %2 {
      %c0_49 = arith.constant 0 : index
      %c0_50 = arith.constant 0 : index
      %c0_51 = arith.constant 0 : index
      %123 = vector.load %arg2[%c0_49, %c0_50, %c0_51] : memref<1x64x128xf32, #tpu.memory_space<vmem>>, vector<1x64x128xf32>
      %124 = vector.shape_cast %123 : vector<1x64x128xf32> to vector<64x128xf32>
      %125 = arith.truncf %124 : vector<64x128xf32> to vector<64x128xbf16>
      %c0_52 = arith.constant 0 : index
      %c128 = arith.constant 128 : index
      %126 = vector.load %arg3[%c0_52, %c128] : memref<128x384xbf16, #tpu.memory_space<vmem>>, vector<128x256xbf16>
      %cst_53 = arith.constant dense<0.000000e+00> : vector<64x256xf32>
      %127 = tpu.matmul %125, %126, %cst_53 {dimension_numbers = #tpu.dot_dimension_numbers<[1], [0], [0], [1], [0, 0, 1, 1], [], []>} : vector<64x128xbf16>, vector<128x256xbf16>, vector<64x256xf32> -> vector<64x256xf32>
      %c0_54 = arith.constant 0 : index
      %c128_55 = arith.constant 128 : index
      %128 = vector.load %arg4[%c0_54, %c128_55] : memref<1x384xf32, #tpu.memory_space<vmem>>, vector<1x256xf32>
      %129 = vector.broadcast %128 : vector<1x256xf32> to vector<64x256xf32>
      %130 = arith.addf %127, %129 : vector<64x256xf32>
      %131 = vector.extract_strided_slice %130 {offsets = [0, 0], sizes = [64, 32], strides = [1, 1]} : vector<64x256xf32> to vector<64x32xf32>
      %132 = arith.truncf %131 : vector<64x32xf32> to vector<64x32xbf16>
      %c0_56 = arith.constant 0 : index
      %c0_57 = arith.constant 0 : index
      %c0_58 = arith.constant 0 : index
      %133 = vector.load %arg11[%c0_56, %c0_57, %c0_58] : memref<4x64x32xbf16, #tpu.memory_space<vmem>>, vector<1x64x32xbf16>
      %134 = vector.shape_cast %133 : vector<1x64x32xbf16> to vector<64x32xbf16>
      %135 = vector.shape_cast %132 : vector<64x32xbf16> to vector<1x64x32xbf16>
      tpu.vector_store %arg11[%c0_56, %c0_57, %c0_58], %135 {strides = array<i32>} : memref<4x64x32xbf16, #tpu.memory_space<vmem>>, vector<1x64x32xbf16>,
      %136 = vector.extract_strided_slice %130 {offsets = [0, 128], sizes = [64, 32], strides = [1, 1]} : vector<64x256xf32> to vector<64x32xf32>
      %137 = arith.truncf %136 : vector<64x32xf32> to vector<64x32xbf16>
      %c0_59 = arith.constant 0 : index
      %c0_60 = arith.constant 0 : index
      %c0_61 = arith.constant 0 : index
      %138 = vector.load %arg12[%c0_59, %c0_60, %c0_61] : memref<4x64x32xbf16, #tpu.memory_space<vmem>>, vector<1x64x32xbf16>
      %139 = vector.shape_cast %138 : vector<1x64x32xbf16> to vector<64x32xbf16>
      %140 = vector.shape_cast %137 : vector<64x32xbf16> to vector<1x64x32xbf16>
      tpu.vector_store %arg12[%c0_59, %c0_60, %c0_61], %140 {strides = array<i32>} : memref<4x64x32xbf16, #tpu.memory_space<vmem>>, vector<1x64x32xbf16>,
      %141 = vector.extract_strided_slice %130 {offsets = [0, 32], sizes = [64, 32], strides = [1, 1]} : vector<64x256xf32> to vector<64x32xf32>
      %142 = arith.truncf %141 : vector<64x32xf32> to vector<64x32xbf16>
      %c1_62 = arith.constant 1 : index
      %c0_63 = arith.constant 0 : index
      %c0_64 = arith.constant 0 : index
      %143 = vector.load %arg11[%c1_62, %c0_63, %c0_64] : memref<4x64x32xbf16, #tpu.memory_space<vmem>>, vector<1x64x32xbf16>
      %144 = vector.shape_cast %143 : vector<1x64x32xbf16> to vector<64x32xbf16>
      %145 = vector.shape_cast %142 : vector<64x32xbf16> to vector<1x64x32xbf16>
      tpu.vector_store %arg11[%c1_62, %c0_63, %c0_64], %145 {strides = array<i32>} : memref<4x64x32xbf16, #tpu.memory_space<vmem>>, vector<1x64x32xbf16>,
      %146 = vector.extract_strided_slice %130 {offsets = [0, 160], sizes = [64, 32], strides = [1, 1]} : vector<64x256xf32> to vector<64x32xf32>
      %147 = arith.truncf %146 : vector<64x32xf32> to vector<64x32xbf16>
      %c1_65 = arith.constant 1 : index
      %c0_66 = arith.constant 0 : index
      %c0_67 = arith.constant 0 : index
      %148 = vector.load %arg12[%c1_65, %c0_66, %c0_67] : memref<4x64x32xbf16, #tpu.memory_space<vmem>>, vector<1x64x32xbf16>
      %149 = vector.shape_cast %148 : vector<1x64x32xbf16> to vector<64x32xbf16>
      %150 = vector.shape_cast %147 : vector<64x32xbf16> to vector<1x64x32xbf16>
      tpu.vector_store %arg12[%c1_65, %c0_66, %c0_67], %150 {strides = array<i32>} : memref<4x64x32xbf16, #tpu.memory_space<vmem>>, vector<1x64x32xbf16>,
      %151 = vector.extract_strided_slice %130 {offsets = [0, 64], sizes = [64, 32], strides = [1, 1]} : vector<64x256xf32> to vector<64x32xf32>
      %152 = arith.truncf %151 : vector<64x32xf32> to vector<64x32xbf16>
      %c2_68 = arith.constant 2 : index
      %c0_69 = arith.constant 0 : index
      %c0_70 = arith.constant 0 : index
      %153 = vector.load %arg11[%c2_68, %c0_69, %c0_70] : memref<4x64x32xbf16, #tpu.memory_space<vmem>>, vector<1x64x32xbf16>
      %154 = vector.shape_cast %153 : vector<1x64x32xbf16> to vector<64x32xbf16>
      %155 = vector.shape_cast %152 : vector<64x32xbf16> to vector<1x64x32xbf16>
      tpu.vector_store %arg11[%c2_68, %c0_69, %c0_70], %155 {strides = array<i32>} : memref<4x64x32xbf16, #tpu.memory_space<vmem>>, vector<1x64x32xbf16>,
      %156 = vector.extract_strided_slice %130 {offsets = [0, 192], sizes = [64, 32], strides = [1, 1]} : vector<64x256xf32> to vector<64x32xf32>
      %157 = arith.truncf %156 : vector<64x32xf32> to vector<64x32xbf16>
      %c2_71 = arith.constant 2 : index
      %c0_72 = arith.constant 0 : index
      %c0_73 = arith.constant 0 : index
      %158 = vector.load %arg12[%c2_71, %c0_72, %c0_73] : memref<4x64x32xbf16, #tpu.memory_space<vmem>>, vector<1x64x32xbf16>
      %159 = vector.shape_cast %158 : vector<1x64x32xbf16> to vector<64x32xbf16>
      %160 = vector.shape_cast %157 : vector<64x32xbf16> to vector<1x64x32xbf16>
      tpu.vector_store %arg12[%c2_71, %c0_72, %c0_73], %160 {strides = array<i32>} : memref<4x64x32xbf16, #tpu.memory_space<vmem>>, vector<1x64x32xbf16>,
      %161 = vector.extract_strided_slice %130 {offsets = [0, 96], sizes = [64, 32], strides = [1, 1]} : vector<64x256xf32> to vector<64x32xf32>
      %162 = arith.truncf %161 : vector<64x32xf32> to vector<64x32xbf16>
      %c3_74 = arith.constant 3 : index
      %c0_75 = arith.constant 0 : index
      %c0_76 = arith.constant 0 : index
      %163 = vector.load %arg11[%c3_74, %c0_75, %c0_76] : memref<4x64x32xbf16, #tpu.memory_space<vmem>>, vector<1x64x32xbf16>
      %164 = vector.shape_cast %163 : vector<1x64x32xbf16> to vector<64x32xbf16>
      %165 = vector.shape_cast %162 : vector<64x32xbf16> to vector<1x64x32xbf16>
      tpu.vector_store %arg11[%c3_74, %c0_75, %c0_76], %165 {strides = array<i32>} : memref<4x64x32xbf16, #tpu.memory_space<vmem>>, vector<1x64x32xbf16>,
      %166 = vector.extract_strided_slice %130 {offsets = [0, 224], sizes = [64, 32], strides = [1, 1]} : vector<64x256xf32> to vector<64x32xf32>
      %167 = arith.truncf %166 : vector<64x32xf32> to vector<64x32xbf16>
      %c3_77 = arith.constant 3 : index
      %c0_78 = arith.constant 0 : index
      %c0_79 = arith.constant 0 : index
      %168 = vector.load %arg12[%c3_77, %c0_78, %c0_79] : memref<4x64x32xbf16, #tpu.memory_space<vmem>>, vector<1x64x32xbf16>
      %169 = vector.shape_cast %168 : vector<1x64x32xbf16> to vector<64x32xbf16>
      %170 = vector.shape_cast %167 : vector<64x32xbf16> to vector<1x64x32xbf16>
      tpu.vector_store %arg12[%c3_77, %c0_78, %c0_79], %170 {strides = array<i32>} : memref<4x64x32xbf16, #tpu.memory_space<vmem>>, vector<1x64x32xbf16>,
    } else {
    }
    %c16_i32 = arith.constant 16 : i32
    %3 = arith.muli %arg1, %c16_i32 : i32
    %4 = tpu.assume_multiple %3, 16 : i32
    %c0 = arith.constant 0 : index
    %5 = arith.index_cast %4 : i32 to index
    %c0_1 = arith.constant 0 : index
    %6 = vector.load %arg2[%c0, %5, %c0_1] : memref<1x64x128xf32, #tpu.memory_space<vmem>>, vector<1x16x128xf32>
    %7 = vector.shape_cast %6 : vector<1x16x128xf32> to vector<16x128xf32>
    %8 = arith.truncf %7 : vector<16x128xf32> to vector<16x128xbf16>
    %c0_2 = arith.constant 0 : index
    %c0_3 = arith.constant 0 : index
    %9 = vector.load %arg3[%c0_2, %c0_3] : memref<128x384xbf16, #tpu.memory_space<vmem>>, vector<128x128xbf16>
    %cst = arith.constant dense<0.000000e+00> : vector<16x128xf32>
    %10 = tpu.matmul %8, %9, %cst {dimension_numbers = #tpu.dot_dimension_numbers<[1], [0], [0], [1], [0, 0, 1, 1], [], []>} : vector<16x128xbf16>, vector<128x128xbf16>, vector<16x128xf32> -> vector<16x128xf32>
    %c0_4 = arith.constant 0 : index
    %c0_5 = arith.constant 0 : index
    %11 = vector.load %arg4[%c0_4, %c0_5] : memref<1x384xf32, #tpu.memory_space<vmem>>, vector<1x128xf32>
    %12 = vector.broadcast %11 : vector<1x128xf32> to vector<16x128xf32>
    %13 = arith.addf %10, %12 : vector<16x128xf32>
    %cst_6 = arith.constant 0.176776692 : f32
    %14 = vector.broadcast %cst_6 : f32 to vector<16x128xf32>
    %15 = arith.mulf %13, %14 : vector<16x128xf32>
    %16 = vector.extract_strided_slice %15 {offsets = [0, 0], sizes = [16, 32], strides = [1, 1]} : vector<16x128xf32> to vector<16x32xf32>
    %17 = vector.extract_strided_slice %15 {offsets = [0, 32], sizes = [16, 32], strides = [1, 1]} : vector<16x128xf32> to vector<16x32xf32>
    %18 = vector.extract_strided_slice %15 {offsets = [0, 64], sizes = [16, 32], strides = [1, 1]} : vector<16x128xf32> to vector<16x32xf32>
    %19 = vector.extract_strided_slice %15 {offsets = [0, 96], sizes = [16, 32], strides = [1, 1]} : vector<16x128xf32> to vector<16x32xf32>
    %20 = vector.shape_cast %16 : vector<16x32xf32> to vector<1x16x32xf32>
    %21 = vector.shape_cast %17 : vector<16x32xf32> to vector<1x16x32xf32>
    %22 = vector.shape_cast %18 : vector<16x32xf32> to vector<1x16x32xf32>
    %23 = vector.shape_cast %19 : vector<16x32xf32> to vector<1x16x32xf32>
    %24 = tpu.concatenate %20, %21, %22, %23 in 0 : vector<1x16x32xf32>, vector<1x16x32xf32>, vector<1x16x32xf32>, vector<1x16x32xf32> -> vector<4x16x32xf32>
    %25 = arith.truncf %24 : vector<4x16x32xf32> to vector<4x16x32xbf16>
    %c0_7 = arith.constant 0 : index
    %c0_8 = arith.constant 0 : index
    %c0_9 = arith.constant 0 : index
    %26 = vector.load %arg11[%c0_7, %c0_8, %c0_9] : memref<4x64x32xbf16, #tpu.memory_space<vmem>>, vector<4x64x32xbf16>
    "tpu.trace_start"() <{level = 10 : i32, message = "hqd,hkd->hqk"}> : () -> ()
    %cst_10 = arith.constant dense<0.000000e+00> : vector<4x16x64xf32>
    %27 = tpu.matmul %25, %26, %cst_10 {dimension_numbers = #tpu.dot_dimension_numbers<[2], [2], [1], [1], [0, 0, 0, 1, 1, 1], [0], [0]>} : vector<4x16x32xbf16>, vector<4x64x32xbf16>, vector<4x16x64xf32> -> vector<4x16x64xf32>
    "tpu.trace_stop"() : () -> ()
    %cst_11 = arith.constant dense<0xFF800000> : vector<4x16xf32>
    %28 = vector.multi_reduction <maximumf>, %27, %cst_11 [2] : vector<4x16x64xf32> to vector<4x16xf32>
    %29 = vector.shape_cast %28 : vector<4x16xf32> to vector<4x16x1xf32>
    %30 = vector.broadcast %29 : vector<4x16x1xf32> to vector<4x16x64xf32>
    %31 = arith.subf %27, %30 : vector<4x16x64xf32>
    %32 = math.exp %31 : vector<4x16x64xf32>
    %cst_12 = arith.constant dense<0.000000e+00> : vector<4x16xf32>
    %33 = vector.multi_reduction <add>, %32, %cst_12 [2] : vector<4x16x64xf32> to vector<4x16xf32>
    %34 = vector.shape_cast %33 : vector<4x16xf32> to vector<4x16x1xf32>
    %35 = tpu.reciprocal %34 {approx = true} : vector<4x16x1xf32> -> vector<4x16x1xf32>
    %36 = vector.broadcast %35 : vector<4x16x1xf32> to vector<4x16x64xf32>
    %37 = arith.mulf %32, %36 : vector<4x16x64xf32>
    %38 = arith.truncf %37 : vector<4x16x64xf32> to vector<4x16x64xbf16>
    %c0_13 = arith.constant 0 : index
    %c0_14 = arith.constant 0 : index
    %c0_15 = arith.constant 0 : index
    %39 = vector.load %arg12[%c0_13, %c0_14, %c0_15] : memref<4x64x32xbf16, #tpu.memory_space<vmem>>, vector<4x64x32xbf16>
    "tpu.trace_start"() <{level = 10 : i32, message = "hqk,hkd->hqd"}> : () -> ()
    %cst_16 = arith.constant dense<0.000000e+00> : vector<4x16x32xf32>
    %40 = tpu.matmul %38, %39, %cst_16 {dimension_numbers = #tpu.dot_dimension_numbers<[2], [1], [1], [2], [0, 0, 0, 1, 1, 2], [0], [0]>} : vector<4x16x64xbf16>, vector<4x64x32xbf16>, vector<4x16x32xf32> -> vector<4x16x32xf32>
    "tpu.trace_stop"() : () -> ()
    %41 = vector.extract_strided_slice %40 {offsets = [0, 0, 0], sizes = [1, 16, 32], strides = [1, 1, 1]} : vector<4x16x32xf32> to vector<1x16x32xf32>
    %42 = vector.shape_cast %41 : vector<1x16x32xf32> to vector<16x32xf32>
    %43 = vector.extract_strided_slice %40 {offsets = [1, 0, 0], sizes = [1, 16, 32], strides = [1, 1, 1]} : vector<4x16x32xf32> to vector<1x16x32xf32>
    %44 = vector.shape_cast %43 : vector<1x16x32xf32> to vector<16x32xf32>
    %45 = vector.extract_strided_slice %40 {offsets = [2, 0, 0], sizes = [1, 16, 32], strides = [1, 1, 1]} : vector<4x16x32xf32> to vector<1x16x32xf32>
    %46 = vector.shape_cast %45 : vector<1x16x32xf32> to vector<16x32xf32>
    %47 = vector.extract_strided_slice %40 {offsets = [3, 0, 0], sizes = [1, 16, 32], strides = [1, 1, 1]} : vector<4x16x32xf32> to vector<1x16x32xf32>
    %48 = vector.shape_cast %47 : vector<1x16x32xf32> to vector<16x32xf32>
    %49 = tpu.concatenate %42, %44, %46, %48 in 1 : vector<16x32xf32>, vector<16x32xf32>, vector<16x32xf32>, vector<16x32xf32> -> vector<16x128xf32>
    %50 = arith.truncf %49 : vector<16x128xf32> to vector<16x128xbf16>
    %c0_17 = arith.constant 0 : index
    %c0_18 = arith.constant 0 : index
    %51 = vector.load %arg5[%c0_17, %c0_18] : memref<128x128xbf16, #tpu.memory_space<vmem>>, vector<128x128xbf16>
    %cst_19 = arith.constant dense<0.000000e+00> : vector<16x128xf32>
    %52 = tpu.matmul %50, %51, %cst_19 {dimension_numbers = #tpu.dot_dimension_numbers<[1], [0], [0], [1], [0, 0, 1, 1], [], []>} : vector<16x128xbf16>, vector<128x128xbf16>, vector<16x128xf32> -> vector<16x128xf32>
    %c0_20 = arith.constant 0 : index
    %c0_21 = arith.constant 0 : index
    %53 = vector.load %arg9[%c0_20, %c0_21] : memref<8x128xf32, #tpu.memory_space<vmem>>, vector<1x128xf32>
    %54 = vector.broadcast %53 : vector<1x128xf32> to vector<16x128xf32>
    %55 = arith.addf %52, %54 : vector<16x128xf32>
    %56 = arith.addf %7, %55 : vector<16x128xf32>
    %c1 = arith.constant 1 : index
    %c0_22 = arith.constant 0 : index
    %57 = vector.load %arg9[%c1, %c0_22] : memref<8x128xf32, #tpu.memory_space<vmem>>, vector<1x128xf32>
    %c2 = arith.constant 2 : index
    %c0_23 = arith.constant 0 : index
    %58 = vector.load %arg9[%c2, %c0_23] : memref<8x128xf32, #tpu.memory_space<vmem>>, vector<1x128xf32>
    %cst_24 = arith.constant dense<0.000000e+00> : vector<16xf32>
    %59 = vector.multi_reduction <add>, %56, %cst_24 [1] : vector<16x128xf32> to vector<16xf32>
    %60 = vector.shape_cast %59 : vector<16xf32> to vector<16x1xf32>
    %cst_25 = arith.constant 1.280000e+02 : f32
    %61 = vector.broadcast %cst_25 : f32 to vector<16x1xf32>
    %62 = arith.divf %60, %61 : vector<16x1xf32>
    %63 = vector.broadcast %62 : vector<16x1xf32> to vector<16x128xf32>
    %64 = arith.subf %56, %63 : vector<16x128xf32>
    %65 = arith.mulf %64, %64 : vector<16x128xf32>
    %cst_26 = arith.constant dense<0.000000e+00> : vector<16xf32>
    %66 = vector.multi_reduction <add>, %65, %cst_26 [1] : vector<16x128xf32> to vector<16xf32>
    %67 = vector.shape_cast %66 : vector<16xf32> to vector<16x1xf32>
    %cst_27 = arith.constant 1.280000e+02 : f32
    %68 = vector.broadcast %cst_27 : f32 to vector<16x1xf32>
    %69 = arith.divf %67, %68 : vector<16x1xf32>
    %70 = vector.broadcast %62 : vector<16x1xf32> to vector<16x128xf32>
    %71 = arith.subf %56, %70 : vector<16x128xf32>
    %cst_28 = arith.constant 9.99999974E-6 : f32
    %72 = vector.broadcast %cst_28 : f32 to vector<16x1xf32>
    %73 = arith.addf %69, %72 : vector<16x1xf32>
    %74 = math.rsqrt %73 : vector<16x1xf32>
    %75 = vector.broadcast %74 : vector<16x1xf32> to vector<16x128xf32>
    %76 = arith.mulf %71, %75 : vector<16x128xf32>
    %77 = vector.broadcast %57 : vector<1x128xf32> to vector<16x128xf32>
    %78 = arith.mulf %76, %77 : vector<16x128xf32>
    %79 = vector.broadcast %58 : vector<1x128xf32> to vector<16x128xf32>
    %80 = arith.addf %78, %79 : vector<16x128xf32>
    %81 = arith.truncf %80 : vector<16x128xf32> to vector<16x128xbf16>
    %c0_29 = arith.constant 0 : index
    %c0_30 = arith.constant 0 : index
    %82 = vector.load %arg6[%c0_29, %c0_30] : memref<128x256xbf16, #tpu.memory_space<vmem>>, vector<128x256xbf16>
    %cst_31 = arith.constant dense<0.000000e+00> : vector<16x256xf32>
    %83 = tpu.matmul %81, %82, %cst_31 {dimension_numbers = #tpu.dot_dimension_numbers<[1], [0], [0], [1], [0, 0, 1, 1], [], []>} : vector<16x128xbf16>, vector<128x256xbf16>, vector<16x256xf32> -> vector<16x256xf32>
    %c0_32 = arith.constant 0 : index
    %c0_33 = arith.constant 0 : index
    %84 = vector.load %arg7[%c0_32, %c0_33] : memref<1x256xf32, #tpu.memory_space<vmem>>, vector<1x256xf32>
    %85 = vector.broadcast %84 : vector<1x256xf32> to vector<16x256xf32>
    %86 = arith.addf %83, %85 : vector<16x256xf32>
    %cst_34 = arith.constant 0.000000e+00 : f32
    %87 = vector.broadcast %cst_34 : f32 to vector<16x256xf32>
    %88 = arith.maximumf %86, %87 : vector<16x256xf32>
    %89 = arith.truncf %88 : vector<16x256xf32> to vector<16x256xbf16>
    %c0_35 = arith.constant 0 : index
    %c0_36 = arith.constant 0 : index
    %90 = vector.load %arg8[%c0_35, %c0_36] : memref<256x128xbf16, #tpu.memory_space<vmem>>, vector<256x128xbf16>
    %cst_37 = arith.constant dense<0.000000e+00> : vector<16x128xf32>
    %91 = tpu.matmul %89, %90, %cst_37 {dimension_numbers = #tpu.dot_dimension_numbers<[1], [0], [0], [1], [0, 0, 1, 1], [], []>} : vector<16x256xbf16>, vector<256x128xbf16>, vector<16x128xf32> -> vector<16x128xf32>
    %c3 = arith.constant 3 : index
    %c0_38 = arith.constant 0 : index
    %92 = vector.load %arg9[%c3, %c0_38] : memref<8x128xf32, #tpu.memory_space<vmem>>, vector<1x128xf32>
    %93 = vector.broadcast %92 : vector<1x128xf32> to vector<16x128xf32>
    %94 = arith.addf %91, %93 : vector<16x128xf32>
    %95 = arith.addf %80, %94 : vector<16x128xf32>
    %c4 = arith.constant 4 : index
    %c0_39 = arith.constant 0 : index
    %96 = vector.load %arg9[%c4, %c0_39] : memref<8x128xf32, #tpu.memory_space<vmem>>, vector<1x128xf32>
    %c5 = arith.constant 5 : index
    %c0_40 = arith.constant 0 : index
    %97 = vector.load %arg9[%c5, %c0_40] : memref<8x128xf32, #tpu.memory_space<vmem>>, vector<1x128xf32>
    %cst_41 = arith.constant dense<0.000000e+00> : vector<16xf32>
    %98 = vector.multi_reduction <add>, %95, %cst_41 [1] : vector<16x128xf32> to vector<16xf32>
    %99 = vector.shape_cast %98 : vector<16xf32> to vector<16x1xf32>
    %cst_42 = arith.constant 1.280000e+02 : f32
    %100 = vector.broadcast %cst_42 : f32 to vector<16x1xf32>
    %101 = arith.divf %99, %100 : vector<16x1xf32>
    %102 = vector.broadcast %101 : vector<16x1xf32> to vector<16x128xf32>
    %103 = arith.subf %95, %102 : vector<16x128xf32>
    %104 = arith.mulf %103, %103 : vector<16x128xf32>
    %cst_43 = arith.constant dense<0.000000e+00> : vector<16xf32>
    %105 = vector.multi_reduction <add>, %104, %cst_43 [1] : vector<16x128xf32> to vector<16xf32>
    %106 = vector.shape_cast %105 : vector<16xf32> to vector<16x1xf32>
    %cst_44 = arith.constant 1.280000e+02 : f32
    %107 = vector.broadcast %cst_44 : f32 to vector<16x1xf32>
    %108 = arith.divf %106, %107 : vector<16x1xf32>
    %109 = vector.broadcast %101 : vector<16x1xf32> to vector<16x128xf32>
    %110 = arith.subf %95, %109 : vector<16x128xf32>
    %cst_45 = arith.constant 9.99999974E-6 : f32
    %111 = vector.broadcast %cst_45 : f32 to vector<16x1xf32>
    %112 = arith.addf %108, %111 : vector<16x1xf32>
    %113 = math.rsqrt %112 : vector<16x1xf32>
    %114 = vector.broadcast %113 : vector<16x1xf32> to vector<16x128xf32>
    %115 = arith.mulf %110, %114 : vector<16x128xf32>
    %116 = vector.broadcast %96 : vector<1x128xf32> to vector<16x128xf32>
    %117 = arith.mulf %115, %116 : vector<16x128xf32>
    %118 = vector.broadcast %97 : vector<1x128xf32> to vector<16x128xf32>
    %119 = arith.addf %117, %118 : vector<16x128xf32>
    %c0_46 = arith.constant 0 : index
    %c0_47 = arith.constant 0 : index
    %c0_48 = arith.constant 0 : index
    %120 = vector.load %arg10[%c0_46, %c0_47, %c0_48] : memref<1x16x128xf32, #tpu.memory_space<vmem>>, vector<1x16x128xf32>
    %121 = vector.shape_cast %120 : vector<1x16x128xf32> to vector<16x128xf32>
    %122 = vector.shape_cast %119 : vector<16x128xf32> to vector<1x16x128xf32>
    tpu.vector_store %arg10[%c0_46, %c0_47, %c0_48], %122 {strides = array<i32>} : memref<1x16x128xf32, #tpu.memory_space<vmem>>, vector<1x16x128xf32>,
    return
  }
  func.func @transform_0(%arg0: i32, %arg1: i32) -> (i32, i32, i32) {
    %c0_i32 = arith.constant 0 : i32
    %c0_i32_0 = arith.constant 0 : i32
    %c0_i32_1 = arith.constant 0 : i32
    return %arg0, %c0_i32, %c0_i32_0 : i32, i32, i32
  }
  func.func @transform_1(%arg0: i32, %arg1: i32) -> (i32, i32) {
    %c0_i32 = arith.constant 0 : i32
    %c0_i32_0 = arith.constant 0 : i32
    %c0_i32_1 = arith.constant 0 : i32
    return %c0_i32, %c0_i32_0 : i32, i32
  }
  func.func @transform_2(%arg0: i32, %arg1: i32) -> (i32, i32) {
    %c0_i32 = arith.constant 0 : i32
    %c0_i32_0 = arith.constant 0 : i32
    %c0_i32_1 = arith.constant 0 : i32
    return %c0_i32, %c0_i32_0 : i32, i32
  }
  func.func @transform_3(%arg0: i32, %arg1: i32) -> (i32, i32) {
    %c0_i32 = arith.constant 0 : i32
    %c0_i32_0 = arith.constant 0 : i32
    %c0_i32_1 = arith.constant 0 : i32
    return %c0_i32, %c0_i32_0 : i32, i32
  }
  func.func @transform_4(%arg0: i32, %arg1: i32) -> (i32, i32) {
    %c0_i32 = arith.constant 0 : i32
    %c0_i32_0 = arith.constant 0 : i32
    %c0_i32_1 = arith.constant 0 : i32
    return %c0_i32, %c0_i32_0 : i32, i32
  }
  func.func @transform_5(%arg0: i32, %arg1: i32) -> (i32, i32) {
    %c0_i32 = arith.constant 0 : i32
    %c0_i32_0 = arith.constant 0 : i32
    %c0_i32_1 = arith.constant 0 : i32
    return %c0_i32, %c0_i32_0 : i32, i32
  }
  func.func @transform_6(%arg0: i32, %arg1: i32) -> (i32, i32) {
    %c0_i32 = arith.constant 0 : i32
    %c0_i32_0 = arith.constant 0 : i32
    %c0_i32_1 = arith.constant 0 : i32
    return %c0_i32, %c0_i32_0 : i32, i32
  }
  func.func @transform_7(%arg0: i32, %arg1: i32) -> (i32, i32) {
    %c0_i32 = arith.constant 0 : i32
    %c0_i32_0 = arith.constant 0 : i32
    %c0_i32_1 = arith.constant 0 : i32
    return %c0_i32, %c0_i32_0 : i32, i32
  }
  func.func @transform_8(%arg0: i32, %arg1: i32) -> (i32, i32, i32) {
    %c0_i32 = arith.constant 0 : i32
    %c0_i32_0 = arith.constant 0 : i32
    return %arg0, %arg1, %c0_i32 : i32, i32, i32
  }
}

module attributes {stable_mosaic.version = 11 : i64} {
  func.func @encoder_layer_kernel(%arg0: i32, %arg1: i32, %arg2: memref<1x64x128xf32, #tpu.memory_space<vmem>>, %arg3: memref<128x384xbf16, #tpu.memory_space<vmem>>, %arg4: memref<1x384xf32, #tpu.memory_space<vmem>>, %arg5: memref<128x128xbf16, #tpu.memory_space<vmem>>, %arg6: memref<128x256xbf16, #tpu.memory_space<vmem>>, %arg7: memref<1x256xf32, #tpu.memory_space<vmem>>, %arg8: memref<256x128xbf16, #tpu.memory_space<vmem>>, %arg9: memref<8x128xf32, #tpu.memory_space<vmem>>, %arg10: memref<1x16x128xf32, #tpu.memory_space<vmem>>, %arg11: memref<4x64x32xbf16, #tpu.memory_space<vmem>>, %arg12: memref<4x64x32xbf16, #tpu.memory_space<vmem>>) attributes {dimension_semantics = [#tpu.dimension_semantics<parallel>, #tpu.dimension_semantics<arbitrary>], iteration_bounds = array<i64: 2, 4>, scalar_prefetch = 0 : i64, scratch_operands = 2 : i64, tpu.core_type = #tpu.core_type<tc>, window_params = [{transform_indices = @transform_0, window_bounds = array<i64: 1, 64, 128>}, {pipeline_mode = #tpu.pipeline_mode<synchronous>, transform_indices = @transform_1, window_bounds = array<i64: 128, 384>}, {pipeline_mode = #tpu.pipeline_mode<synchronous>, transform_indices = @transform_2, window_bounds = array<i64: 1, 384>}, {pipeline_mode = #tpu.pipeline_mode<synchronous>, transform_indices = @transform_3, window_bounds = array<i64: 128, 128>}, {pipeline_mode = #tpu.pipeline_mode<synchronous>, transform_indices = @transform_4, window_bounds = array<i64: 128, 256>}, {pipeline_mode = #tpu.pipeline_mode<synchronous>, transform_indices = @transform_5, window_bounds = array<i64: 1, 256>}, {pipeline_mode = #tpu.pipeline_mode<synchronous>, transform_indices = @transform_6, window_bounds = array<i64: 256, 128>}, {pipeline_mode = #tpu.pipeline_mode<synchronous>, transform_indices = @transform_7, window_bounds = array<i64: 8, 128>}, {transform_indices = @transform_8, window_bounds = array<i64: 1, 16, 128>}]} {
    %c0_i32 = arith.constant 0 : i32
    %0 = arith.cmpi eq, %arg1, %c0_i32 : i32
    %1 = arith.extui %0 : i1 to i32
    %c0_i32_0 = arith.constant 0 : i32
    %2 = arith.cmpi ne, %1, %c0_i32_0 : i32
    scf.if %2 {
      %c0_49 = arith.constant 0 : index
      %c0_50 = arith.constant 0 : index
      %c0_51 = arith.constant 0 : index
      %123 = vector.load %arg2[%c0_49, %c0_50, %c0_51] : memref<1x64x128xf32, #tpu.memory_space<vmem>>, vector<1x64x128xf32>
      %124 = vector.shape_cast %123 : vector<1x64x128xf32> to vector<64x128xf32>
      %125 = arith.truncf %124 : vector<64x128xf32> to vector<64x128xbf16>
      %c0_52 = arith.constant 0 : index
      %c128 = arith.constant 128 : index
      %126 = vector.load %arg3[%c0_52, %c128] : memref<128x384xbf16, #tpu.memory_space<vmem>>, vector<128x256xbf16>
      %cst_53 = arith.constant dense<0.000000e+00> : vector<64x256xf32>
      %127 = tpu.matmul %125, %126, %cst_53 {dimension_numbers = #tpu.dot_dimension_numbers<[1], [0], [0], [1], [0, 0, 1, 1], [], []>} : vector<64x128xbf16>, vector<128x256xbf16>, vector<64x256xf32> -> vector<64x256xf32>
      %c0_54 = arith.constant 0 : index
      %c128_55 = arith.constant 128 : index
      %128 = vector.load %arg4[%c0_54, %c128_55] : memref<1x384xf32, #tpu.memory_space<vmem>>, vector<1x256xf32>
      %129 = vector.broadcast %128 : vector<1x256xf32> to vector<64x256xf32>
      %130 = arith.addf %127, %129 : vector<64x256xf32>
      %131 = vector.extract_strided_slice %130 {offsets = [0, 0], sizes = [64, 32], strides = [1, 1]} : vector<64x256xf32> to vector<64x32xf32>
      %132 = arith.truncf %131 : vector<64x32xf32> to vector<64x32xbf16>
      %c0_56 = arith.constant 0 : index
      %c0_57 = arith.constant 0 : index
      %c0_58 = arith.constant 0 : index
      %133 = vector.load %arg11[%c0_56, %c0_57, %c0_58] : memref<4x64x32xbf16, #tpu.memory_space<vmem>>, vector<1x64x32xbf16>
      %134 = vector.shape_cast %133 : vector<1x64x32xbf16> to vector<64x32xbf16>
      %135 = vector.shape_cast %132 : vector<64x32xbf16> to vector<1x64x32xbf16>
      tpu.vector_store %arg11[%c0_56, %c0_57, %c0_58], %135 {strides = array<i32>} : memref<4x64x32xbf16, #tpu.memory_space<vmem>>, vector<1x64x32xbf16>,
      %136 = vector.extract_strided_slice %130 {offsets = [0, 128], sizes = [64, 32], strides = [1, 1]} : vector<64x256xf32> to vector<64x32xf32>
      %137 = arith.truncf %136 : vector<64x32xf32> to vector<64x32xbf16>
      %c0_59 = arith.constant 0 : index
      %c0_60 = arith.constant 0 : index
      %c0_61 = arith.constant 0 : index
      %138 = vector.load %arg12[%c0_59, %c0_60, %c0_61] : memref<4x64x32xbf16, #tpu.memory_space<vmem>>, vector<1x64x32xbf16>
      %139 = vector.shape_cast %138 : vector<1x64x32xbf16> to vector<64x32xbf16>
      %140 = vector.shape_cast %137 : vector<64x32xbf16> to vector<1x64x32xbf16>
      tpu.vector_store %arg12[%c0_59, %c0_60, %c0_61], %140 {strides = array<i32>} : memref<4x64x32xbf16, #tpu.memory_space<vmem>>, vector<1x64x32xbf16>,
      %141 = vector.extract_strided_slice %130 {offsets = [0, 32], sizes = [64, 32], strides = [1, 1]} : vector<64x256xf32> to vector<64x32xf32>
      %142 = arith.truncf %141 : vector<64x32xf32> to vector<64x32xbf16>
      %c1_62 = arith.constant 1 : index
      %c0_63 = arith.constant 0 : index
      %c0_64 = arith.constant 0 : index
      %143 = vector.load %arg11[%c1_62, %c0_63, %c0_64] : memref<4x64x32xbf16, #tpu.memory_space<vmem>>, vector<1x64x32xbf16>
      %144 = vector.shape_cast %143 : vector<1x64x32xbf16> to vector<64x32xbf16>
      %145 = vector.shape_cast %142 : vector<64x32xbf16> to vector<1x64x32xbf16>
      tpu.vector_store %arg11[%c1_62, %c0_63, %c0_64], %145 {strides = array<i32>} : memref<4x64x32xbf16, #tpu.memory_space<vmem>>, vector<1x64x32xbf16>,
      %146 = vector.extract_strided_slice %130 {offsets = [0, 160], sizes = [64, 32], strides = [1, 1]} : vector<64x256xf32> to vector<64x32xf32>
      %147 = arith.truncf %146 : vector<64x32xf32> to vector<64x32xbf16>
      %c1_65 = arith.constant 1 : index
      %c0_66 = arith.constant 0 : index
      %c0_67 = arith.constant 0 : index
      %148 = vector.load %arg12[%c1_65, %c0_66, %c0_67] : memref<4x64x32xbf16, #tpu.memory_space<vmem>>, vector<1x64x32xbf16>
      %149 = vector.shape_cast %148 : vector<1x64x32xbf16> to vector<64x32xbf16>
      %150 = vector.shape_cast %147 : vector<64x32xbf16> to vector<1x64x32xbf16>
      tpu.vector_store %arg12[%c1_65, %c0_66, %c0_67], %150 {strides = array<i32>} : memref<4x64x32xbf16, #tpu.memory_space<vmem>>, vector<1x64x32xbf16>,
      %151 = vector.extract_strided_slice %130 {offsets = [0, 64], sizes = [64, 32], strides = [1, 1]} : vector<64x256xf32> to vector<64x32xf32>
      %152 = arith.truncf %151 : vector<64x32xf32> to vector<64x32xbf16>
      %c2_68 = arith.constant 2 : index
      %c0_69 = arith.constant 0 : index
      %c0_70 = arith.constant 0 : index
      %153 = vector.load %arg11[%c2_68, %c0_69, %c0_70] : memref<4x64x32xbf16, #tpu.memory_space<vmem>>, vector<1x64x32xbf16>
      %154 = vector.shape_cast %153 : vector<1x64x32xbf16> to vector<64x32xbf16>
      %155 = vector.shape_cast %152 : vector<64x32xbf16> to vector<1x64x32xbf16>
      tpu.vector_store %arg11[%c2_68, %c0_69, %c0_70], %155 {strides = array<i32>} : memref<4x64x32xbf16, #tpu.memory_space<vmem>>, vector<1x64x32xbf16>,
      %156 = vector.extract_strided_slice %130 {offsets = [0, 192], sizes = [64, 32], strides = [1, 1]} : vector<64x256xf32> to vector<64x32xf32>
      %157 = arith.truncf %156 : vector<64x32xf32> to vector<64x32xbf16>
      %c2_71 = arith.constant 2 : index
      %c0_72 = arith.constant 0 : index
      %c0_73 = arith.constant 0 : index
      %158 = vector.load %arg12[%c2_71, %c0_72, %c0_73] : memref<4x64x32xbf16, #tpu.memory_space<vmem>>, vector<1x64x32xbf16>
      %159 = vector.shape_cast %158 : vector<1x64x32xbf16> to vector<64x32xbf16>
      %160 = vector.shape_cast %157 : vector<64x32xbf16> to vector<1x64x32xbf16>
      tpu.vector_store %arg12[%c2_71, %c0_72, %c0_73], %160 {strides = array<i32>} : memref<4x64x32xbf16, #tpu.memory_space<vmem>>, vector<1x64x32xbf16>,
      %161 = vector.extract_strided_slice %130 {offsets = [0, 96], sizes = [64, 32], strides = [1, 1]} : vector<64x256xf32> to vector<64x32xf32>
      %162 = arith.truncf %161 : vector<64x32xf32> to vector<64x32xbf16>
      %c3_74 = arith.constant 3 : index
      %c0_75 = arith.constant 0 : index
      %c0_76 = arith.constant 0 : index
      %163 = vector.load %arg11[%c3_74, %c0_75, %c0_76] : memref<4x64x32xbf16, #tpu.memory_space<vmem>>, vector<1x64x32xbf16>
      %164 = vector.shape_cast %163 : vector<1x64x32xbf16> to vector<64x32xbf16>
      %165 = vector.shape_cast %162 : vector<64x32xbf16> to vector<1x64x32xbf16>
      tpu.vector_store %arg11[%c3_74, %c0_75, %c0_76], %165 {strides = array<i32>} : memref<4x64x32xbf16, #tpu.memory_space<vmem>>, vector<1x64x32xbf16>,
      %166 = vector.extract_strided_slice %130 {offsets = [0, 224], sizes = [64, 32], strides = [1, 1]} : vector<64x256xf32> to vector<64x32xf32>
      %167 = arith.truncf %166 : vector<64x32xf32> to vector<64x32xbf16>
      %c3_77 = arith.constant 3 : index
      %c0_78 = arith.constant 0 : index
      %c0_79 = arith.constant 0 : index
      %168 = vector.load %arg12[%c3_77, %c0_78, %c0_79] : memref<4x64x32xbf16, #tpu.memory_space<vmem>>, vector<1x64x32xbf16>
      %169 = vector.shape_cast %168 : vector<1x64x32xbf16> to vector<64x32xbf16>
      %170 = vector.shape_cast %167 : vector<64x32xbf16> to vector<1x64x32xbf16>
      tpu.vector_store %arg12[%c3_77, %c0_78, %c0_79], %170 {strides = array<i32>} : memref<4x64x32xbf16, #tpu.memory_space<vmem>>, vector<1x64x32xbf16>,
    } else {
    }
    %c16_i32 = arith.constant 16 : i32
    %3 = arith.muli %arg1, %c16_i32 : i32
    %4 = tpu.assume_multiple %3, 16 : i32
    %c0 = arith.constant 0 : index
    %5 = arith.index_cast %4 : i32 to index
    %c0_1 = arith.constant 0 : index
    %6 = vector.load %arg2[%c0, %5, %c0_1] : memref<1x64x128xf32, #tpu.memory_space<vmem>>, vector<1x16x128xf32>
    %7 = vector.shape_cast %6 : vector<1x16x128xf32> to vector<16x128xf32>
    %8 = arith.truncf %7 : vector<16x128xf32> to vector<16x128xbf16>
    %c0_2 = arith.constant 0 : index
    %c0_3 = arith.constant 0 : index
    %9 = vector.load %arg3[%c0_2, %c0_3] : memref<128x384xbf16, #tpu.memory_space<vmem>>, vector<128x128xbf16>
    %cst = arith.constant dense<0.000000e+00> : vector<16x128xf32>
    %10 = tpu.matmul %8, %9, %cst {dimension_numbers = #tpu.dot_dimension_numbers<[1], [0], [0], [1], [0, 0, 1, 1], [], []>} : vector<16x128xbf16>, vector<128x128xbf16>, vector<16x128xf32> -> vector<16x128xf32>
    %c0_4 = arith.constant 0 : index
    %c0_5 = arith.constant 0 : index
    %11 = vector.load %arg4[%c0_4, %c0_5] : memref<1x384xf32, #tpu.memory_space<vmem>>, vector<1x128xf32>
    %12 = vector.broadcast %11 : vector<1x128xf32> to vector<16x128xf32>
    %13 = arith.addf %10, %12 : vector<16x128xf32>
    %cst_6 = arith.constant 0.176776692 : f32
    %14 = vector.broadcast %cst_6 : f32 to vector<16x128xf32>
    %15 = arith.mulf %13, %14 : vector<16x128xf32>
    %16 = vector.extract_strided_slice %15 {offsets = [0, 0], sizes = [16, 32], strides = [1, 1]} : vector<16x128xf32> to vector<16x32xf32>
    %17 = vector.extract_strided_slice %15 {offsets = [0, 32], sizes = [16, 32], strides = [1, 1]} : vector<16x128xf32> to vector<16x32xf32>
    %18 = vector.extract_strided_slice %15 {offsets = [0, 64], sizes = [16, 32], strides = [1, 1]} : vector<16x128xf32> to vector<16x32xf32>
    %19 = vector.extract_strided_slice %15 {offsets = [0, 96], sizes = [16, 32], strides = [1, 1]} : vector<16x128xf32> to vector<16x32xf32>
    %20 = vector.shape_cast %16 : vector<16x32xf32> to vector<1x16x32xf32>
    %21 = vector.shape_cast %17 : vector<16x32xf32> to vector<1x16x32xf32>
    %22 = vector.shape_cast %18 : vector<16x32xf32> to vector<1x16x32xf32>
    %23 = vector.shape_cast %19 : vector<16x32xf32> to vector<1x16x32xf32>
    %24 = tpu.concatenate %20, %21, %22, %23 in 0 : vector<1x16x32xf32>, vector<1x16x32xf32>, vector<1x16x32xf32>, vector<1x16x32xf32> -> vector<4x16x32xf32>
    %25 = arith.truncf %24 : vector<4x16x32xf32> to vector<4x16x32xbf16>
    %c0_7 = arith.constant 0 : index
    %c0_8 = arith.constant 0 : index
    %c0_9 = arith.constant 0 : index
    %26 = vector.load %arg11[%c0_7, %c0_8, %c0_9] : memref<4x64x32xbf16, #tpu.memory_space<vmem>>, vector<4x64x32xbf16>
    "tpu.trace_start"() <{level = 10 : i32, message = "hqd,hkd->hqk"}> : () -> ()
    %cst_10 = arith.constant dense<0.000000e+00> : vector<4x16x64xf32>
    %27 = tpu.matmul %25, %26, %cst_10 {dimension_numbers = #tpu.dot_dimension_numbers<[2], [2], [1], [1], [0, 0, 0, 1, 1, 1], [0], [0]>} : vector<4x16x32xbf16>, vector<4x64x32xbf16>, vector<4x16x64xf32> -> vector<4x16x64xf32>
    "tpu.trace_stop"() : () -> ()
    %cst_11 = arith.constant dense<0xFF800000> : vector<4x16xf32>
    %28 = vector.multi_reduction <maximumf>, %27, %cst_11 [2] : vector<4x16x64xf32> to vector<4x16xf32>
    %29 = vector.shape_cast %28 : vector<4x16xf32> to vector<4x16x1xf32>
    %30 = vector.broadcast %29 : vector<4x16x1xf32> to vector<4x16x64xf32>
    %31 = arith.subf %27, %30 : vector<4x16x64xf32>
    %32 = math.exp %31 : vector<4x16x64xf32>
    %cst_12 = arith.constant dense<0.000000e+00> : vector<4x16xf32>
    %33 = vector.multi_reduction <add>, %32, %cst_12 [2] : vector<4x16x64xf32> to vector<4x16xf32>
    %34 = vector.shape_cast %33 : vector<4x16xf32> to vector<4x16x1xf32>
    %35 = tpu.reciprocal %34 {approx = true} : vector<4x16x1xf32> -> vector<4x16x1xf32>
    %36 = vector.broadcast %35 : vector<4x16x1xf32> to vector<4x16x64xf32>
    %37 = arith.mulf %32, %36 : vector<4x16x64xf32>
    %38 = arith.truncf %37 : vector<4x16x64xf32> to vector<4x16x64xbf16>
    %c0_13 = arith.constant 0 : index
    %c0_14 = arith.constant 0 : index
    %c0_15 = arith.constant 0 : index
    %39 = vector.load %arg12[%c0_13, %c0_14, %c0_15] : memref<4x64x32xbf16, #tpu.memory_space<vmem>>, vector<4x64x32xbf16>
    "tpu.trace_start"() <{level = 10 : i32, message = "hqk,hkd->hqd"}> : () -> ()
    %cst_16 = arith.constant dense<0.000000e+00> : vector<4x16x32xf32>
    %40 = tpu.matmul %38, %39, %cst_16 {dimension_numbers = #tpu.dot_dimension_numbers<[2], [1], [1], [2], [0, 0, 0, 1, 1, 2], [0], [0]>} : vector<4x16x64xbf16>, vector<4x64x32xbf16>, vector<4x16x32xf32> -> vector<4x16x32xf32>
    "tpu.trace_stop"() : () -> ()
    %41 = vector.extract_strided_slice %40 {offsets = [0, 0, 0], sizes = [1, 16, 32], strides = [1, 1, 1]} : vector<4x16x32xf32> to vector<1x16x32xf32>
    %42 = vector.shape_cast %41 : vector<1x16x32xf32> to vector<16x32xf32>
    %43 = vector.extract_strided_slice %40 {offsets = [1, 0, 0], sizes = [1, 16, 32], strides = [1, 1, 1]} : vector<4x16x32xf32> to vector<1x16x32xf32>
    %44 = vector.shape_cast %43 : vector<1x16x32xf32> to vector<16x32xf32>
    %45 = vector.extract_strided_slice %40 {offsets = [2, 0, 0], sizes = [1, 16, 32], strides = [1, 1, 1]} : vector<4x16x32xf32> to vector<1x16x32xf32>
    %46 = vector.shape_cast %45 : vector<1x16x32xf32> to vector<16x32xf32>
    %47 = vector.extract_strided_slice %40 {offsets = [3, 0, 0], sizes = [1, 16, 32], strides = [1, 1, 1]} : vector<4x16x32xf32> to vector<1x16x32xf32>
    %48 = vector.shape_cast %47 : vector<1x16x32xf32> to vector<16x32xf32>
    %49 = tpu.concatenate %42, %44, %46, %48 in 1 : vector<16x32xf32>, vector<16x32xf32>, vector<16x32xf32>, vector<16x32xf32> -> vector<16x128xf32>
    %50 = arith.truncf %49 : vector<16x128xf32> to vector<16x128xbf16>
    %c0_17 = arith.constant 0 : index
    %c0_18 = arith.constant 0 : index
    %51 = vector.load %arg5[%c0_17, %c0_18] : memref<128x128xbf16, #tpu.memory_space<vmem>>, vector<128x128xbf16>
    %cst_19 = arith.constant dense<0.000000e+00> : vector<16x128xf32>
    %52 = tpu.matmul %50, %51, %cst_19 {dimension_numbers = #tpu.dot_dimension_numbers<[1], [0], [0], [1], [0, 0, 1, 1], [], []>} : vector<16x128xbf16>, vector<128x128xbf16>, vector<16x128xf32> -> vector<16x128xf32>
    %c0_20 = arith.constant 0 : index
    %c0_21 = arith.constant 0 : index
    %53 = vector.load %arg9[%c0_20, %c0_21] : memref<8x128xf32, #tpu.memory_space<vmem>>, vector<1x128xf32>
    %54 = vector.broadcast %53 : vector<1x128xf32> to vector<16x128xf32>
    %55 = arith.addf %52, %54 : vector<16x128xf32>
    %56 = arith.addf %7, %55 : vector<16x128xf32>
    %c1 = arith.constant 1 : index
    %c0_22 = arith.constant 0 : index
    %57 = vector.load %arg9[%c1, %c0_22] : memref<8x128xf32, #tpu.memory_space<vmem>>, vector<1x128xf32>
    %c2 = arith.constant 2 : index
    %c0_23 = arith.constant 0 : index
    %58 = vector.load %arg9[%c2, %c0_23] : memref<8x128xf32, #tpu.memory_space<vmem>>, vector<1x128xf32>
    %cst_24 = arith.constant dense<0.000000e+00> : vector<16xf32>
    %59 = vector.multi_reduction <add>, %56, %cst_24 [1] : vector<16x128xf32> to vector<16xf32>
    %60 = vector.shape_cast %59 : vector<16xf32> to vector<16x1xf32>
    %cst_25 = arith.constant 1.280000e+02 : f32
    %61 = vector.broadcast %cst_25 : f32 to vector<16x1xf32>
    %62 = arith.divf %60, %61 : vector<16x1xf32>
    %63 = vector.broadcast %62 : vector<16x1xf32> to vector<16x128xf32>
    %64 = arith.subf %56, %63 : vector<16x128xf32>
    %65 = arith.mulf %64, %64 : vector<16x128xf32>
    %cst_26 = arith.constant dense<0.000000e+00> : vector<16xf32>
    %66 = vector.multi_reduction <add>, %65, %cst_26 [1] : vector<16x128xf32> to vector<16xf32>
    %67 = vector.shape_cast %66 : vector<16xf32> to vector<16x1xf32>
    %cst_27 = arith.constant 1.280000e+02 : f32
    %68 = vector.broadcast %cst_27 : f32 to vector<16x1xf32>
    %69 = arith.divf %67, %68 : vector<16x1xf32>
    %70 = vector.broadcast %62 : vector<16x1xf32> to vector<16x128xf32>
    %71 = arith.subf %56, %70 : vector<16x128xf32>
    %cst_28 = arith.constant 9.99999974E-6 : f32
    %72 = vector.broadcast %cst_28 : f32 to vector<16x1xf32>
    %73 = arith.addf %69, %72 : vector<16x1xf32>
    %74 = math.rsqrt %73 : vector<16x1xf32>
    %75 = vector.broadcast %74 : vector<16x1xf32> to vector<16x128xf32>
    %76 = arith.mulf %71, %75 : vector<16x128xf32>
    %77 = vector.broadcast %57 : vector<1x128xf32> to vector<16x128xf32>
    %78 = arith.mulf %76, %77 : vector<16x128xf32>
    %79 = vector.broadcast %58 : vector<1x128xf32> to vector<16x128xf32>
    %80 = arith.addf %78, %79 : vector<16x128xf32>
    %81 = arith.truncf %80 : vector<16x128xf32> to vector<16x128xbf16>
    %c0_29 = arith.constant 0 : index
    %c0_30 = arith.constant 0 : index
    %82 = vector.load %arg6[%c0_29, %c0_30] : memref<128x256xbf16, #tpu.memory_space<vmem>>, vector<128x256xbf16>
    %cst_31 = arith.constant dense<0.000000e+00> : vector<16x256xf32>
    %83 = tpu.matmul %81, %82, %cst_31 {dimension_numbers = #tpu.dot_dimension_numbers<[1], [0], [0], [1], [0, 0, 1, 1], [], []>} : vector<16x128xbf16>, vector<128x256xbf16>, vector<16x256xf32> -> vector<16x256xf32>
    %c0_32 = arith.constant 0 : index
    %c0_33 = arith.constant 0 : index
    %84 = vector.load %arg7[%c0_32, %c0_33] : memref<1x256xf32, #tpu.memory_space<vmem>>, vector<1x256xf32>
    %85 = vector.broadcast %84 : vector<1x256xf32> to vector<16x256xf32>
    %86 = arith.addf %83, %85 : vector<16x256xf32>
    %cst_34 = arith.constant 0.000000e+00 : f32
    %87 = vector.broadcast %cst_34 : f32 to vector<16x256xf32>
    %88 = arith.maximumf %86, %87 : vector<16x256xf32>
    %89 = arith.truncf %88 : vector<16x256xf32> to vector<16x256xbf16>
    %c0_35 = arith.constant 0 : index
    %c0_36 = arith.constant 0 : index
    %90 = vector.load %arg8[%c0_35, %c0_36] : memref<256x128xbf16, #tpu.memory_space<vmem>>, vector<256x128xbf16>
    %cst_37 = arith.constant dense<0.000000e+00> : vector<16x128xf32>
    %91 = tpu.matmul %89, %90, %cst_37 {dimension_numbers = #tpu.dot_dimension_numbers<[1], [0], [0], [1], [0, 0, 1, 1], [], []>} : vector<16x256xbf16>, vector<256x128xbf16>, vector<16x128xf32> -> vector<16x128xf32>
    %c3 = arith.constant 3 : index
    %c0_38 = arith.constant 0 : index
    %92 = vector.load %arg9[%c3, %c0_38] : memref<8x128xf32, #tpu.memory_space<vmem>>, vector<1x128xf32>
    %93 = vector.broadcast %92 : vector<1x128xf32> to vector<16x128xf32>
    %94 = arith.addf %91, %93 : vector<16x128xf32>
    %95 = arith.addf %80, %94 : vector<16x128xf32>
    %c4 = arith.constant 4 : index
    %c0_39 = arith.constant 0 : index
    %96 = vector.load %arg9[%c4, %c0_39] : memref<8x128xf32, #tpu.memory_space<vmem>>, vector<1x128xf32>
    %c5 = arith.constant 5 : index
    %c0_40 = arith.constant 0 : index
    %97 = vector.load %arg9[%c5, %c0_40] : memref<8x128xf32, #tpu.memory_space<vmem>>, vector<1x128xf32>
    %cst_41 = arith.constant dense<0.000000e+00> : vector<16xf32>
    %98 = vector.multi_reduction <add>, %95, %cst_41 [1] : vector<16x128xf32> to vector<16xf32>
    %99 = vector.shape_cast %98 : vector<16xf32> to vector<16x1xf32>
    %cst_42 = arith.constant 1.280000e+02 : f32
    %100 = vector.broadcast %cst_42 : f32 to vector<16x1xf32>
    %101 = arith.divf %99, %100 : vector<16x1xf32>
    %102 = vector.broadcast %101 : vector<16x1xf32> to vector<16x128xf32>
    %103 = arith.subf %95, %102 : vector<16x128xf32>
    %104 = arith.mulf %103, %103 : vector<16x128xf32>
    %cst_43 = arith.constant dense<0.000000e+00> : vector<16xf32>
    %105 = vector.multi_reduction <add>, %104, %cst_43 [1] : vector<16x128xf32> to vector<16xf32>
    %106 = vector.shape_cast %105 : vector<16xf32> to vector<16x1xf32>
    %cst_44 = arith.constant 1.280000e+02 : f32
    %107 = vector.broadcast %cst_44 : f32 to vector<16x1xf32>
    %108 = arith.divf %106, %107 : vector<16x1xf32>
    %109 = vector.broadcast %101 : vector<16x1xf32> to vector<16x128xf32>
    %110 = arith.subf %95, %109 : vector<16x128xf32>
    %cst_45 = arith.constant 9.99999974E-6 : f32
    %111 = vector.broadcast %cst_45 : f32 to vector<16x1xf32>
    %112 = arith.addf %108, %111 : vector<16x1xf32>
    %113 = math.rsqrt %112 : vector<16x1xf32>
    %114 = vector.broadcast %113 : vector<16x1xf32> to vector<16x128xf32>
    %115 = arith.mulf %110, %114 : vector<16x128xf32>
    %116 = vector.broadcast %96 : vector<1x128xf32> to vector<16x128xf32>
    %117 = arith.mulf %115, %116 : vector<16x128xf32>
    %118 = vector.broadcast %97 : vector<1x128xf32> to vector<16x128xf32>
    %119 = arith.addf %117, %118 : vector<16x128xf32>
    %c0_46 = arith.constant 0 : index
    %c0_47 = arith.constant 0 : index
    %c0_48 = arith.constant 0 : index
    %120 = vector.load %arg10[%c0_46, %c0_47, %c0_48] : memref<1x16x128xf32, #tpu.memory_space<vmem>>, vector<1x16x128xf32>
    %121 = vector.shape_cast %120 : vector<1x16x128xf32> to vector<16x128xf32>
    %122 = vector.shape_cast %119 : vector<16x128xf32> to vector<1x16x128xf32>
    tpu.vector_store %arg10[%c0_46, %c0_47, %c0_48], %122 {strides = array<i32>} : memref<1x16x128xf32, #tpu.memory_space<vmem>>, vector<1x16x128xf32>,
    return
  }
  func.func @transform_0(%arg0: i32, %arg1: i32) -> (i32, i32, i32) {
    %c0_i32 = arith.constant 0 : i32
    %c0_i32_0 = arith.constant 0 : i32
    %c0_i32_1 = arith.constant 0 : i32
    return %arg0, %c0_i32, %c0_i32_0 : i32, i32, i32
  }
  func.func @transform_1(%arg0: i32, %arg1: i32) -> (i32, i32) {
    %c0_i32 = arith.constant 0 : i32
    %c0_i32_0 = arith.constant 0 : i32
    %c0_i32_1 = arith.constant 0 : i32
    return %c0_i32, %c0_i32_0 : i32, i32
  }
  func.func @transform_2(%arg0: i32, %arg1: i32) -> (i32, i32) {
    %c0_i32 = arith.constant 0 : i32
    %c0_i32_0 = arith.constant 0 : i32
    %c0_i32_1 = arith.constant 0 : i32
    return %c0_i32, %c0_i32_0 : i32, i32
  }
  func.func @transform_3(%arg0: i32, %arg1: i32) -> (i32, i32) {
    %c0_i32 = arith.constant 0 : i32
    %c0_i32_0 = arith.constant 0 : i32
    %c0_i32_1 = arith.constant 0 : i32
    return %c0_i32, %c0_i32_0 : i32, i32
  }
  func.func @transform_4(%arg0: i32, %arg1: i32) -> (i32, i32) {
    %c0_i32 = arith.constant 0 : i32
    %c0_i32_0 = arith.constant 0 : i32
    %c0_i32_1 = arith.constant 0 : i32
    return %c0_i32, %c0_i32_0 : i32, i32
  }
  func.func @transform_5(%arg0: i32, %arg1: i32) -> (i32, i32) {
    %c0_i32 = arith.constant 0 : i32
    %c0_i32_0 = arith.constant 0 : i32
    %c0_i32_1 = arith.constant 0 : i32
    return %c0_i32, %c0_i32_0 : i32, i32
  }
  func.func @transform_6(%arg0: i32, %arg1: i32) -> (i32, i32) {
    %c0_i32 = arith.constant 0 : i32
    %c0_i32_0 = arith.constant 0 : i32
    %c0_i32_1 = arith.constant 0 : i32
    return %c0_i32, %c0_i32_0 : i32, i32
  }
  func.func @transform_7(%arg0: i32, %arg1: i32) -> (i32, i32) {
    %c0_i32 = arith.constant 0 : i32
    %c0_i32_0 = arith.constant 0 : i32
    %c0_i32_1 = arith.constant 0 : i32
    return %c0_i32, %c0_i32_0 : i32, i32
  }
  func.func @transform_8(%arg0: i32, %arg1: i32) -> (i32, i32, i32) {
    %c0_i32 = arith.constant 0 : i32
    %c0_i32_0 = arith.constant 0 : i32
    return %arg0, %arg1, %c0_i32 : i32, i32, i32
  }
}

</mosaic_0001>

<llo_original>
// kernel: tpu_custom_call.1
$region0: #{tpu_custom_call.1}
  #allocation0 [shape = 'u32[]', space=smem, size = 0x4, offset = 0x4, fixed_abs, tag = 'smem constant byte address 0x4 - core index']
  #allocation1 [shape = 'u32[144,128]{1,0:T(1,128)}', space=vmem, size = 0x12000, scoped, tag = 'internal scratch']
  #allocation2 [shape = 'bf16[4,64,32]{2,1,0:T(8,128)(2,1)}', space=vmem, size = 0x10000, scoped, tag = 'scratch operand']
  #allocation3 [shape = 'bf16[4,64,32]{2,1,0:T(8,128)(2,1)}', space=vmem, size = 0x10000, scoped, tag = 'scratch operand']
  %s0 = inlined_call_operand.hbm [shape: f32[2,64,128], index: 0, kind: input, shape index: {}]
  %s1 = inlined_call_operand.hbm [shape: bf16[128,384], index: 1, kind: input, shape index: {}]
  %s2 = inlined_call_operand.vmem [shape: f32[1,384], index: 2, kind: input, shape index: {}]
  %s3 = inlined_call_operand.hbm [shape: bf16[128,128], index: 3, kind: input, shape index: {}]
  %s4 = inlined_call_operand.hbm [shape: bf16[128,256], index: 4, kind: input, shape index: {}]
  %s5 = inlined_call_operand.hbm [shape: f32[1,256], index: 5, kind: input, shape index: {}]
  %s6 = inlined_call_operand.hbm [shape: bf16[256,128], index: 6, kind: input, shape index: {}]
  %s7 = inlined_call_operand.vmem [shape: f32[8,128], index: 7, kind: input, shape index: {}]
  %s8 = inlined_call_operand.hbm [shape: f32[2,64,128], index: 8, kind: output, shape index: {}]
  %s9 = sld [smem:[#allocation0]]
  $region93: #{tpu_custom_call.1} parent=0
    _
  %s11 = ssub.s32 1, %s9
  %s12 = scalar_select 0, %s11, %s9
  $region1: #{tpu_custom_call.1} parent=0
    #allocation4 [shape = 'u8[65536]{0}', space=vmem, size = 0x10000, scoped, tag = 'input window, operand 0']
    #allocation5 [shape = 's32[2]{0}', space=sflag, size = 0x8, scoped, tag = 'scoped memory for tpu_custom_call.1']
    #allocation6 [shape = 's32[2]{0}', space=sflag, size = 0x8, scoped, tag = 'scoped memory for tpu_custom_call.1']
    #allocation7 [shape = 'u8[98304]{0}', space=vmem, size = 0x18000, scoped, tag = 'input window, operand 1, single buffered']
    #allocation8 [shape = 's32[1]{0}', space=sflag, size = 0x4, scoped, tag = 'scoped memory for tpu_custom_call.1']
    #allocation9 [shape = 'u8[32768]{0}', space=vmem, size = 0x8000, scoped, tag = 'input window, operand 3, single buffered']
    #allocation10 [shape = 'u8[65536]{0}', space=vmem, size = 0x10000, scoped, tag = 'input window, operand 4, single buffered']
    #allocation11 [shape = 's32[1]{0}', space=sflag, size = 0x4, scoped, tag = 'scoped memory for tpu_custom_call.1']
    #allocation12 [shape = 'u8[1024]{0}', space=vmem, size = 0x400, scoped, tag = 'input window, operand 5, single buffered']
    #allocation13 [shape = 'u8[65536]{0}', space=vmem, size = 0x10000, scoped, tag = 'input window, operand 6, single buffered']
    #allocation14 [shape = 's32[1]{0}', space=sflag, size = 0x4, scoped, tag = 'scoped memory for tpu_custom_call.1']
    #allocation15 [shape = 'u8[16384]{0}', space=vmem, size = 0x4000, scoped, tag = 'output window, operand 0']
    %13 = vsyncpa [#allocation5], 0
    %s14 = scalar_lea.sflag [#allocation5], 1
    %15 = vsyncpa %s14, 0
    %16 = vsyncpa [#allocation8], 0
    %17 = vsyncpa [#allocation11], 0
    %18 = vsyncpa [#allocation14], 0
    %19 = vsyncpa [#allocation6], 0
    %s20 = scalar_lea.sflag [#allocation6], 1
    %21 = vsyncpa %s20, 0
    loop: start=0, step=1, limit=10
    $region2: #{tpu_custom_call.1} parent=1 // loop_pre_header
      _
    $region3: #{tpu_custom_call.1} parent=1 // loop_header
      %s23 = sphi 0, %s27
      %p24 = scmp.ge.s32.totalorder %s23, 10
      %s30 = sphi 0, %s42
      %s31 = sphi 0, %s38
      %s32 = sphi 0, %s30
      %s33 = sphi 0, %s31
      %s34 = sphi 0, %s32
      %s35 = sphi 0, %s33
      %s45 = sphi 0, %s47
      %s48 = sphi 0, %s45
      %s49 = sphi 0, %s48
      %s65 = sphi 0, %s49
      %s69 = sphi 0, %s69
      %s71 = sphi 0, %s69
      %s72 = sphi 0, %s71
      %s86 = sphi 0, %s72
      %s90 = sphi 0, %s90
      %s92 = sphi 0, %s90
      %s93 = sphi 0, %s92
      %s107 = sphi 0, %s93
      %s111 = sphi 0, %s111
      %s113 = sphi 0, %s111
      %s114 = sphi 0, %s113
      %s128 = sphi 0, %s114
      %s132 = sphi 0, %s132
      %s134 = sphi 0, %s132
      %s135 = sphi 0, %s134
      %s149 = sphi 0, %s135
      %s153 = sphi 0, %s153
      %s155 = sphi 0, %s153
      %s156 = sphi 0, %s155
      %s170 = sphi 0, %s156
      %s174 = sphi 0, %s174
      %s176 = sphi 0, %s174
      %s177 = sphi 0, %s176
      %s191 = sphi 0, %s177
      %s195 = sphi 0, %s195
      %s197 = sphi 0, %s195
      %s198 = sphi 0, %s197
      %s212 = sphi 0, %s198
      %s220 = sphi 0, %s222
      %s223 = sphi 0, %s220
      %s224 = sphi 0, %s223
      %s240 = sphi 0, %s224
    $region4: #{tpu_custom_call.1} parent=1 // loop_header_branch
      %26 = sbr.rel (%p24) target = $region8
    $region5: #{tpu_custom_call.1} parent=1 // loop_body
      %s28 = ssub.s32 %s23, 1
      %s29 = ssub.s32 %s23, 2
      %s36 = sadd.s32 1, %s31
      %p37 = scmp.ge.s32.totalorder %s36, 4
      %s38 = scalar_select %p37, 0, %s36
      %s39 = sadd.s32 1, %s30
      %s40 = scalar_select %p37, %s39, %s30
      %p41 = scmp.ge.s32.totalorder %s40, 2
      %s42 = scalar_select %p41, 0, %s40
      %s43 = ssub.s32 %s30, %s42
      %p44 = scmp.eq.s32.totalorder %s43, 0
      %s46 = sadd.s32 %s45, 1
      %s47 = scalar_select %p44, %s45, %s46
      %p50 = pneg %p44
      %p51 = scmp.eq.s32.totalorder %s23, 7
      %p52 = por %p50, %p51
      %p53 = scmp.ne.s32.totalorder %s45, %s48
      %p54 = scmp.eq.s32.totalorder %s23, 0
      %p55 = por %p53, %p54
      %p56 = scmp.ne.s32.totalorder %s45, %s48
      %p57 = scmp.eq.s32.totalorder %s28, 7
      %p58 = por %p56, %p57
      %p59 = scmp.ne.s32.totalorder %s48, %s49
      %p60 = scmp.eq.s32.totalorder %s28, 0
      %p61 = por %p59, %p60
      %p62 = scmp.ne.s32.totalorder %s48, %s49
      %p63 = scmp.eq.s32.totalorder %s29, 7
      %p64 = por %p62, %p63
      %p66 = scmp.ne.s32.totalorder %s49, %s65
      %p67 = scmp.eq.s32.totalorder %s29, 0
      %p68 = por %p66, %p67
      %s70 = sadd.s32 %s69, 1
      %p73 = scmp.eq.s32.totalorder %s23, 7
      %p74 = scmp.ne.s32.totalorder %s69, %s71
      %p75 = scmp.eq.s32.totalorder %s23, 0
      %p76 = por %p74, %p75
      %p77 = scmp.ne.s32.totalorder %s69, %s71
      %p78 = scmp.eq.s32.totalorder %s28, 7
      %p79 = por %p77, %p78
      %p80 = scmp.ne.s32.totalorder %s71, %s72
      %p81 = scmp.eq.s32.totalorder %s28, 0
      %p82 = por %p80, %p81
      %p83 = scmp.ne.s32.totalorder %s71, %s72
      %p84 = scmp.eq.s32.totalorder %s29, 7
      %p85 = por %p83, %p84
      %p87 = scmp.ne.s32.totalorder %s72, %s86
      %p88 = scmp.eq.s32.totalorder %s29, 0
      %p89 = por %p87, %p88
      %s91 = sadd.s32 %s90, 1
      %p94 = scmp.eq.s32.totalorder %s23, 7
      %p95 = scmp.ne.s32.totalorder %s90, %s92
      %p96 = scmp.eq.s32.totalorder %s23, 0
      %p97 = por %p95, %p96
      %p98 = scmp.ne.s32.totalorder %s90, %s92
      %p99 = scmp.eq.s32.totalorder %s28, 7
      %p100 = por %p98, %p99
      %p101 = scmp.ne.s32.totalorder %s92, %s93
      %p102 = scmp.eq.s32.totalorder %s28, 0
      %p103 = por %p101, %p102
      %p104 = scmp.ne.s32.totalorder %s92, %s93
      %p105 = scmp.eq.s32.totalorder %s29, 7
      %p106 = por %p104, %p105
      %p108 = scmp.ne.s32.totalorder %s93, %s107
      %p109 = scmp.eq.s32.totalorder %s29, 0
      %p110 = por %p108, %p109
      %s112 = sadd.s32 %s111, 1
      %p115 = scmp.eq.s32.totalorder %s23, 7
      %p116 = scmp.ne.s32.totalorder %s111, %s113
      %p117 = scmp.eq.s32.totalorder %s23, 0
      %p118 = por %p116, %p117
      %p119 = scmp.ne.s32.totalorder %s111, %s113
      %p120 = scmp.eq.s32.totalorder %s28, 7
      %p121 = por %p119, %p120
      %p122 = scmp.ne.s32.totalorder %s113, %s114
      %p123 = scmp.eq.s32.totalorder %s28, 0
      %p124 = por %p122, %p123
      %p125 = scmp.ne.s32.totalorder %s113, %s114
      %p126 = scmp.eq.s32.totalorder %s29, 7
      %p127 = por %p125, %p126
      %p129 = scmp.ne.s32.totalorder %s114, %s128
      %p130 = scmp.eq.s32.totalorder %s29, 0
      %p131 = por %p129, %p130
      %s133 = sadd.s32 %s132, 1
      %p136 = scmp.eq.s32.totalorder %s23, 7
      %p137 = scmp.ne.s32.totalorder %s132, %s134
      %p138 = scmp.eq.s32.totalorder %s23, 0
      %p139 = por %p137, %p138
      %p140 = scmp.ne.s32.totalorder %s132, %s134
      %p141 = scmp.eq.s32.totalorder %s28, 7
      %p142 = por %p140, %p141
      %p143 = scmp.ne.s32.totalorder %s134, %s135
      %p144 = scmp.eq.s32.totalorder %s28, 0
      %p145 = por %p143, %p144
      %p146 = scmp.ne.s32.totalorder %s134, %s135
      %p147 = scmp.eq.s32.totalorder %s29, 7
      %p148 = por %p146, %p147
      %p150 = scmp.ne.s32.totalorder %s135, %s149
      %p151 = scmp.eq.s32.totalorder %s29, 0
      %p152 = por %p150, %p151
      %s154 = sadd.s32 %s153, 1
      %p157 = scmp.eq.s32.totalorder %s23, 7
      %p158 = scmp.ne.s32.totalorder %s153, %s155
      %p159 = scmp.eq.s32.totalorder %s23, 0
      %p160 = por %p158, %p159
      %p161 = scmp.ne.s32.totalorder %s153, %s155
      %p162 = scmp.eq.s32.totalorder %s28, 7
      %p163 = por %p161, %p162
      %p164 = scmp.ne.s32.totalorder %s155, %s156
      %p165 = scmp.eq.s32.totalorder %s28, 0
      %p166 = por %p164, %p165
      %p167 = scmp.ne.s32.totalorder %s155, %s156
      %p168 = scmp.eq.s32.totalorder %s29, 7
      %p169 = por %p167, %p168
      %p171 = scmp.ne.s32.totalorder %s156, %s170
      %p172 = scmp.eq.s32.totalorder %s29, 0
      %p173 = por %p171, %p172
      %s175 = sadd.s32 %s174, 1
      %p178 = scmp.eq.s32.totalorder %s23, 7
      %p179 = scmp.ne.s32.totalorder %s174, %s176
      %p180 = scmp.eq.s32.totalorder %s23, 0
      %p181 = por %p179, %p180
      %p182 = scmp.ne.s32.totalorder %s174, %s176
      %p183 = scmp.eq.s32.totalorder %s28, 7
      %p184 = por %p182, %p183
      %p185 = scmp.ne.s32.totalorder %s176, %s177
      %p186 = scmp.eq.s32.totalorder %s28, 0
      %p187 = por %p185, %p186
      %p188 = scmp.ne.s32.totalorder %s176, %s177
      %p189 = scmp.eq.s32.totalorder %s29, 7
      %p190 = por %p188, %p189
      %p192 = scmp.ne.s32.totalorder %s177, %s191
      %p193 = scmp.eq.s32.totalorder %s29, 0
      %p194 = por %p192, %p193
      %s196 = sadd.s32 %s195, 1
      %p199 = scmp.eq.s32.totalorder %s23, 7
      %p200 = scmp.ne.s32.totalorder %s195, %s197
      %p201 = scmp.eq.s32.totalorder %s23, 0
      %p202 = por %p200, %p201
      %p203 = scmp.ne.s32.totalorder %s195, %s197
      %p204 = scmp.eq.s32.totalorder %s28, 7
      %p205 = por %p203, %p204
      %p206 = scmp.ne.s32.totalorder %s197, %s198
      %p207 = scmp.eq.s32.totalorder %s28, 0
      %p208 = por %p206, %p207
      %p209 = scmp.ne.s32.totalorder %s197, %s198
      %p210 = scmp.eq.s32.totalorder %s29, 7
      %p211 = por %p209, %p210
      %p213 = scmp.ne.s32.totalorder %s198, %s212
      %p214 = scmp.eq.s32.totalorder %s29, 0
      %p215 = por %p213, %p214
      %s216 = ssub.s32 %s30, %s42
      %s217 = ssub.s32 %s31, %s38
      %s218 = sor.u32 %s216, %s217
      %p219 = scmp.eq.s32.totalorder %s218, 0
      %s221 = sadd.s32 %s220, 1
      %s222 = scalar_select %p219, %s220, %s221
      %p225 = pneg %p219
      %p226 = scmp.eq.s32.totalorder %s23, 7
      %p227 = por %p225, %p226
      %p228 = scmp.ne.s32.totalorder %s220, %s223
      %p229 = scmp.eq.s32.totalorder %s23, 0
      %p230 = por %p228, %p229
      %p231 = scmp.ne.s32.totalorder %s220, %s223
      %p232 = scmp.eq.s32.totalorder %s28, 7
      %p233 = por %p231, %p232
      %p234 = scmp.ne.s32.totalorder %s223, %s224
      %p235 = scmp.eq.s32.totalorder %s28, 0
      %p236 = por %p234, %p235
      %p237 = scmp.ne.s32.totalorder %s223, %s224
      %p238 = scmp.eq.s32.totalorder %s29, 7
      %p239 = por %p237, %p238
      %p241 = scmp.ne.s32.totalorder %s224, %s240
      %p242 = scmp.eq.s32.totalorder %s29, 0
      %p243 = por %p241, %p242
      %p244 = scmp.le.s32.totalorder 1, %s23
      %p245 = scmp.lt.s32.totalorder %s23, 9
      %p246 = pnand %p244, %p245
      %p247 = pneg %p246
      // Predicated region
      $region9: #{tpu_custom_call.1} parent=5 // pred_check
        _
      $region10: #{tpu_custom_call.1} parent=5 // pred_check_branch
        %249 = sbr.rel (%p246) target = $region12
      $region11: #{tpu_custom_call.1} parent=5 // pred_region
        %s250 = ssub.s32 %s23, 1
        // Predicated region
        $region13: #{tpu_custom_call.1} parent=11 // pred_check
          %p251 = pneg %p82
        $region14: #{tpu_custom_call.1} parent=11 // pred_check_branch
          %253 = sbr.rel (%p251) target = $region16
        $region15: #{tpu_custom_call.1} parent=11 // pred_region
          %s255 = ssub.s32 3072, 3072
          %256 = vsyncadd [#allocation8], %s255
          %s257 = sshll.u32 [#allocation7], 4
          %s258 = int_to_ptr.vmem [resolvable:$true] %s257
          %263 = dma.hbm_to_vmem [thread:$0]  %s1, 3072, %s258, [#allocation8], 192, 192, 12
        $region16: #{tpu_custom_call.1} parent=11 // pred_fallthru
          _
        // Predicated region
        $region17: #{tpu_custom_call.1} parent=11 // pred_check
          %p264 = pneg %p103
        $region18: #{tpu_custom_call.1} parent=11 // pred_check_branch
          %266 = sbr.rel (%p264) target = $region20
        $region19: #{tpu_custom_call.1} parent=11 // pred_region
          _
        $region20: #{tpu_custom_call.1} parent=11 // pred_fallthru
          _
        // Predicated region
        $region21: #{tpu_custom_call.1} parent=11 // pred_check
          %p267 = pneg %p124
        $region22: #{tpu_custom_call.1} parent=11 // pred_check_branch
          %269 = sbr.rel (%p267) target = $region24
        $region23: #{tpu_custom_call.1} parent=11 // pred_region
          %s271 = ssub.s32 1024, 1024
          %272 = vsyncadd [#allocation8], %s271
          %s273 = sshll.u32 [#allocation9], 4
          %s274 = int_to_ptr.vmem [resolvable:$true] %s273
          %279 = dma.hbm_to_vmem [thread:$0]  %s3, 1024, %s274, [#allocation8], 64, 64, 4
        $region24: #{tpu_custom_call.1} parent=11 // pred_fallthru
          _
        // Predicated region
        $region25: #{tpu_custom_call.1} parent=11 // pred_check
          %p280 = pneg %p145
        $region26: #{tpu_custom_call.1} parent=11 // pred_check_branch
          %282 = sbr.rel (%p280) target = $region28
        $region27: #{tpu_custom_call.1} parent=11 // pred_region
          %s284 = ssub.s32 2048, 2048
          %285 = vsyncadd [#allocation11], %s284
          %s286 = sshll.u32 [#allocation10], 4
          %s287 = int_to_ptr.vmem [resolvable:$true] %s286
          %292 = dma.hbm_to_vmem [thread:$0]  %s4, 2048, %s287, [#allocation11], 128, 128, 8
        $region28: #{tpu_custom_call.1} parent=11 // pred_fallthru
          _
        // Predicated region
        $region29: #{tpu_custom_call.1} parent=11 // pred_check
          %p293 = pneg %p166
        $region30: #{tpu_custom_call.1} parent=11 // pred_check_branch
          %295 = sbr.rel (%p293) target = $region32
        $region31: #{tpu_custom_call.1} parent=11 // pred_region
          %s297 = ssub.s32 32, 32
          %298 = vsyncadd [#allocation11], %s297
          %s300 = sshll.u32 [#allocation12], 4
          %s301 = int_to_ptr.vmem [resolvable:$true] %s300
          %303 = dma.hbm_to_vmem [thread:$0]  %s5, 32, %s301, [#allocation11]
        $region32: #{tpu_custom_call.1} parent=11 // pred_fallthru
          _
        // Predicated region
        $region33: #{tpu_custom_call.1} parent=11 // pred_check
          %p304 = pneg %p187
        $region34: #{tpu_custom_call.1} parent=11 // pred_check_branch
          %306 = sbr.rel (%p304) target = $region36
        $region35: #{tpu_custom_call.1} parent=11 // pred_region
          %s308 = ssub.s32 2048, 2048
          %309 = vsyncadd [#allocation14], %s308
          %s310 = sshll.u32 [#allocation13], 4
          %s311 = int_to_ptr.vmem [resolvable:$true] %s310
          %316 = dma.hbm_to_vmem [thread:$0]  %s6, 2048, %s311, [#allocation14], 64, 64, 4
        $region36: #{tpu_custom_call.1} parent=11 // pred_fallthru
          _
        // Predicated region
        $region37: #{tpu_custom_call.1} parent=11 // pred_check
          %p317 = pneg %p208
        $region38: #{tpu_custom_call.1} parent=11 // pred_check_branch
          %319 = sbr.rel (%p317) target = $region40
        $region39: #{tpu_custom_call.1} parent=11 // pred_region
          _
        $region40: #{tpu_custom_call.1} parent=11 // pred_fallthru
          _
      $region12: #{tpu_custom_call.1} parent=5 // pred_fallthru
        _
      %p320 = scmp.lt.s32.totalorder %s23, 8
      // Predicated region
      $region41: #{tpu_custom_call.1} parent=5 // pred_check
        %p321 = pneg %p320
      $region42: #{tpu_custom_call.1} parent=5 // pred_check_branch
        %323 = sbr.rel (%p321) target = $region44
      $region43: #{tpu_custom_call.1} parent=5 // pred_region
        // Predicated region
        $region45: #{tpu_custom_call.1} parent=43 // pred_check
          %p324 = pneg %p55
        $region46: #{tpu_custom_call.1} parent=43 // pred_check_branch
          %326 = sbr.rel (%p324) target = $region48
        $region47: #{tpu_custom_call.1} parent=43 // pred_region
          %s327 = sand.u32 %s45, 1
          %s328 = scalar_lea.sflag [#allocation5], %s327
          %s329 = sand.u32 %s45, 1
          %s330 = smul.addr %s329, 64
          %s331 = scalar_lea.vmem [#allocation4], %s330
          %s333 = ssub.s32 1024, 1024
          %334 = vsyncadd %s328, %s333
          %s335 = smul.addr %s30, 8
          %s336 = smul.addr %s335, 128
          %s337 = scalar_lea.hbm %s0, %s336
          %s338 = sshll.u32 %s331, 4
          %s339 = int_to_ptr.vmem [resolvable:$true] %s338
          %344 = dma.hbm_to_vmem [thread:$0]  %s337, 1024, %s339, %s328, 128, 128, 8
        $region48: #{tpu_custom_call.1} parent=43 // pred_fallthru
          _
      $region44: #{tpu_custom_call.1} parent=5 // pred_fallthru
        _
      %p345 = scmp.le.s32.totalorder 1, %s23
      %p346 = scmp.lt.s32.totalorder %s23, 9
      %p347 = pnand %p345, %p346
      %p348 = pneg %p347
      // Predicated region
      $region49: #{tpu_custom_call.1} parent=5 // pred_check
        _
      $region50: #{tpu_custom_call.1} parent=5 // pred_check_branch
        %350 = sbr.rel (%p347) target = $region52
      $region51: #{tpu_custom_call.1} parent=5 // pred_region
        %s351 = ssub.s32 %s23, 1
        %s352 = sand.u32 %s48, 1
        %s353 = scalar_lea.sflag [#allocation5], %s352
        %s354 = sand.u32 %s48, 1
        %s355 = smul.addr %s354, 64
        %s356 = scalar_lea.vmem [#allocation4], %s355
        // Predicated region
        $region53: #{tpu_custom_call.1} parent=51 // pred_check
          %p357 = pneg %p61
        $region54: #{tpu_custom_call.1} parent=51 // pred_check_branch
          %359 = sbr.rel (%p357) target = $region56
        $region55: #{tpu_custom_call.1} parent=51 // pred_region
          %360 = dma.done %s353, 1024
        $region56: #{tpu_custom_call.1} parent=51 // pred_fallthru
          _
        // Predicated region
        $region57: #{tpu_custom_call.1} parent=51 // pred_check
          %p361 = pneg %p82
        $region58: #{tpu_custom_call.1} parent=51 // pred_check_branch
          %363 = sbr.rel (%p361) target = $region60
        $region59: #{tpu_custom_call.1} parent=51 // pred_region
          %364 = dma.done [#allocation8], 3072
        $region60: #{tpu_custom_call.1} parent=51 // pred_fallthru
          _
        // Predicated region
        $region61: #{tpu_custom_call.1} parent=51 // pred_check
          %p365 = pneg %p124
        $region62: #{tpu_custom_call.1} parent=51 // pred_check_branch
          %367 = sbr.rel (%p365) target = $region64
        $region63: #{tpu_custom_call.1} parent=51 // pred_region
          %368 = dma.done [#allocation8], 1024
        $region64: #{tpu_custom_call.1} parent=51 // pred_fallthru
          _
        // Predicated region
        $region65: #{tpu_custom_call.1} parent=51 // pred_check
          %p369 = pneg %p145
        $region66: #{tpu_custom_call.1} parent=51 // pred_check_branch
          %371 = sbr.rel (%p369) target = $region68
        $region67: #{tpu_custom_call.1} parent=51 // pred_region
          %372 = dma.done [#allocation11], 2048
        $region68: #{tpu_custom_call.1} parent=51 // pred_fallthru
          _
        // Predicated region
        $region69: #{tpu_custom_call.1} parent=51 // pred_check
          %p373 = pneg %p166
        $region70: #{tpu_custom_call.1} parent=51 // pred_check_branch
          %375 = sbr.rel (%p373) target = $region72
        $region71: #{tpu_custom_call.1} parent=51 // pred_region
          %376 = dma.done [#allocation11], 32
        $region72: #{tpu_custom_call.1} parent=51 // pred_fallthru
          _
        // Predicated region
        $region73: #{tpu_custom_call.1} parent=51 // pred_check
          %p377 = pneg %p187
        $region74: #{tpu_custom_call.1} parent=51 // pred_check_branch
          %379 = sbr.rel (%p377) target = $region76
        $region75: #{tpu_custom_call.1} parent=51 // pred_region
          %380 = dma.done [#allocation14], 2048
        $region76: #{tpu_custom_call.1} parent=51 // pred_fallthru
          _
        %s381 = sand.u32 %s48, 1
        %s382 = scalar_lea.sflag [#allocation5], %s381
        %s383 = sand.u32 %s48, 1
        %s384 = smul.addr %s383, 64
        %s385 = scalar_lea.vmem [#allocation4], %s384
        %p386 = pneg %p61
        %p387 = pneg %p58
        %p388 = pneg %p82
        %p389 = pneg %p79
        %p390 = pneg %p103
        %p391 = pneg %p100
        %p392 = pneg %p124
        %p393 = pneg %p121
        %p394 = pneg %p145
        %p395 = pneg %p142
        %p396 = pneg %p166
        %p397 = pneg %p163
        %p398 = pneg %p187
        %p399 = pneg %p184
        %p400 = pneg %p208
        %p401 = pneg %p205
        %p402 = pneg %p236
        %p403 = pneg %p233
        %s404 = sand.u32 %s223, 1
        %s405 = scalar_lea.sflag [#allocation6], %s404
        %s406 = sand.u32 %s223, 1
        %s407 = smul.addr %s406, 16
        %s408 = scalar_lea.vmem [#allocation15], %s407
        %s409 = smul.u32 2, %s33
        %p411 = scmp.eq.s32.totalorder %s33, 0
        // Predicated region
        $region77: #{tpu_custom_call.1} parent=51 // pred_check
          %p412 = pneg %p411
        $region78: #{tpu_custom_call.1} parent=51 // pred_check_branch
          %414 = sbr.rel (%p412) target = $region80
        $region79: #{tpu_custom_call.1} parent=51 // pred_region
          %v415 = vld [vmem:[%s356] sm:$0xff]
          %v416 = vld [vmem:[%s356 + $0x8] sm:$0xff]
          %v417 = vld [vmem:[%s356 + $0x10] sm:$0xff]
          %v418 = vld [vmem:[%s356 + $0x18] sm:$0xff]
          %v419 = vld [vmem:[%s356 + $0x20] sm:$0xff]
          %v420 = vld [vmem:[%s356 + $0x28] sm:$0xff]
          %v421 = vld [vmem:[%s356 + $0x30] sm:$0xff]
          %v422 = vld [vmem:[%s356 + $0x38] sm:$0xff]
          %v423 = vpack.c.bf16 %v416, %v415
          %v424 = vpack.c.bf16 %v418, %v417
          %v425 = vpack.c.bf16 %v420, %v419
          %v426 = vpack.c.bf16 %v422, %v421
          %v427 = vld [vmem:[#allocation7 + $0x4] sm:$0xff]
          %v428 = vld [vmem:[#allocation7 + $0x10] sm:$0xff]
          %v429 = vld [vmem:[#allocation7 + $0x1c] sm:$0xff]
          %v430 = vld [vmem:[#allocation7 + $0x28] sm:$0xff]
          %v431 = vld [vmem:[#allocation7 + $0x34] sm:$0xff]
          %v432 = vld [vmem:[#allocation7 + $0x40] sm:$0xff]
          %v433 = vld [vmem:[#allocation7 + $0x4c] sm:$0xff]
          %v434 = vld [vmem:[#allocation7 + $0x58] sm:$0xff]
          %v435 = vld [vmem:[#allocation7 + $0x64] sm:$0xff]
          %v436 = vld [vmem:[#allocation7 + $0x70] sm:$0xff]
          %v437 = vld [vmem:[#allocation7 + $0x7c] sm:$0xff]
          %v438 = vld [vmem:[#allocation7 + $0x88] sm:$0xff]
          %v439 = vld [vmem:[#allocation7 + $0x94] sm:$0xff]
          %v440 = vld [vmem:[#allocation7 + $0xa0] sm:$0xff]
          %v441 = vld [vmem:[#allocation7 + $0xac] sm:$0xff]
          %v442 = vld [vmem:[#allocation7 + $0xb8] sm:$0xff]
          %v443 = vld [vmem:[%s2 + $0x1] sm:$0x3]
          %v445 = vlaneseq
          %v446 = vshrl.u32 %v445, 7
          %v447 = vsub.s32 0, %v446
          %v448 = vrot.slane %v443, %v447
          %v449 = vlaneseq
          %v450 = vshrl.u32 %v449, 7
          %v451 = vsub.s32 1, %v450
          %v452 = vrot.slane %v443, %v451
          %v471 = vunpack.c.l.b16 %v427
          %v472 = vunpack.c.h.b16 %v427
          %v473 = vunpack.c.l.b16 %v428
          %v474 = vunpack.c.h.b16 %v428
          %v475 = vunpack.c.l.b16 %v429
          %v476 = vunpack.c.h.b16 %v429
          %v477 = vunpack.c.l.b16 %v430
          %v478 = vunpack.c.h.b16 %v430
          %v479 = vunpack.c.l.b16 %v431
          %v480 = vunpack.c.h.b16 %v431
          %v481 = vunpack.c.l.b16 %v432
          %v482 = vunpack.c.h.b16 %v432
          %v483 = vunpack.c.l.b16 %v433
          %v484 = vunpack.c.h.b16 %v433
          %v485 = vunpack.c.l.b16 %v434
          %v486 = vunpack.c.h.b16 %v434
          %v487 = vunpack.c.l.b16 %v435
          %v488 = vunpack.c.h.b16 %v435
          %v489 = vunpack.c.l.b16 %v436
          %v490 = vunpack.c.h.b16 %v436
          %v491 = vunpack.c.l.b16 %v437
          %v492 = vunpack.c.h.b16 %v437
          %v493 = vunpack.c.l.b16 %v438
          %v494 = vunpack.c.h.b16 %v438
          %v495 = vunpack.c.l.b16 %v439
          %v496 = vunpack.c.h.b16 %v439
          %v497 = vunpack.c.l.b16 %v440
          %v498 = vunpack.c.h.b16 %v440
          %v499 = vunpack.c.l.b16 %v441
          %v500 = vunpack.c.h.b16 %v441
          %v501 = vunpack.c.l.b16 %v442
          %v502 = vunpack.c.h.b16 %v442
          %v503 = vpack.c.b16 %v473, %v471
          %v504 = vpack.c.b16 %v474, %v472
          %v505 = vpack.c.b16 %v477, %v475
          %v506 = vpack.c.b16 %v478, %v476
          %v507 = vpack.c.b16 %v481, %v479
          %v508 = vpack.c.b16 %v482, %v480
          %v509 = vpack.c.b16 %v485, %v483
          %v510 = vpack.c.b16 %v486, %v484
          %v511 = vpack.c.b16 %v489, %v487
          %v512 = vpack.c.b16 %v490, %v488
          %v513 = vpack.c.b16 %v493, %v491
          %v514 = vpack.c.b16 %v494, %v492
          %v515 = vpack.c.b16 %v497, %v495
          %v516 = vpack.c.b16 %v498, %v496
          %v517 = vpack.c.b16 %v501, %v499
          %v518 = vpack.c.b16 %v502, %v500
          %535 = vmatprep.subr.bf16.mxu0 %v518
          %536 = vmatpush1.bf16.msra.mxu0 %v517
          %537 = vmatprep.subr.bf16.mxu0 %v516
          %538 = vmatpush1.bf16.msra.mxu0 %v515
          %539 = vmatprep.subr.bf16.mxu0 %v514
          %540 = vmatpush1.bf16.msra.mxu0 %v513
          %541 = vmatprep.subr.bf16.mxu0 %v512
          %542 = vmatpush1.bf16.msra.mxu0 %v511
          %543 = vmatprep.subr.bf16.mxu0 %v510
          %544 = vmatpush1.bf16.msra.mxu0 %v509
          %545 = vmatprep.subr.bf16.mxu0 %v508
          %546 = vmatpush1.bf16.msra.mxu0 %v507
          %547 = vmatprep.subr.bf16.mxu0 %v506
          %548 = vmatpush1.bf16.msra.mxu0 %v505
          %549 = vmatprep.subr.bf16.mxu0 %v504
          %550 = vmatpush1.bf16.msra.mxu0 %v503
          %551 = vmatprep.subr.bf16.mxu0 0
          %552 = vmatpush2.bf16.msra.mxu0 0
          %553 = vmatprep.subr.bf16.mxu0 0
          %554 = vmatpush2.bf16.msra.mxu0 0
          %555 = vmatprep.subr.bf16.mxu0 0
          %556 = vmatpush2.bf16.msra.mxu0 0
          %557 = vmatprep.subr.bf16.mxu0 0
          %558 = vmatpush2.bf16.msra.mxu0 0
          %559 = vmatprep.subr.bf16.mxu0 0
          %560 = vmatpush2.bf16.msra.mxu0 0
          %561 = vmatprep.subr.bf16.mxu0 0
          %562 = vmatpush2.bf16.msra.mxu0 0
          %563 = vmatprep.subr.bf16.mxu0 0
          %564 = vmatpush2.bf16.msra.mxu0 0
          %565 = vmatprep.subr.bf16.mxu0 0
          %566 = vmatpush2.bf16.msra.mxu0 0
          %567 = vmatprep.mubr.bf16.mxu0 0
          %568 = vmatmul.mubr.bf16.gmra.mxu0 %v423
          %v569 = vpop.f32.mrf.mxu0
          %v570 = vadd.f32 %v448, %v569
          %v571 = vpop.f32.mrf.mxu0
          %v572 = vadd.f32 %v452, %v571
          %v573 = vpop.f32.mrf.mxu0
          %v574 = vadd.f32 %v448, %v573
          %v575 = vpop.f32.mrf.mxu0
          %v576 = vadd.f32 %v452, %v575
          %577 = vmatprep.mubr.bf16.mxu0 0
          %578 = vmatmul.mubr.bf16.gmra.mxu0 %v424
          %v579 = vpop.f32.mrf.mxu0
          %v580 = vadd.f32 %v448, %v579
          %v581 = vpop.f32.mrf.mxu0
          %v582 = vadd.f32 %v452, %v581
          %v583 = vpop.f32.mrf.mxu0
          %v584 = vadd.f32 %v448, %v583
          %v585 = vpop.f32.mrf.mxu0
          %v586 = vadd.f32 %v452, %v585
          %587 = vmatprep.mubr.bf16.mxu0 0
          %588 = vmatmul.mubr.bf16.gmra.mxu0 %v425
          %v589 = vpop.f32.mrf.mxu0
          %v590 = vadd.f32 %v448, %v589
          %v591 = vpop.f32.mrf.mxu0
          %v592 = vadd.f32 %v452, %v591
          %v593 = vpop.f32.mrf.mxu0
          %v594 = vadd.f32 %v448, %v593
          %v595 = vpop.f32.mrf.mxu0
          %v596 = vadd.f32 %v452, %v595
          %597 = vmatprep.mubr.bf16.mxu0 0
          %598 = vmatmul.mubr.bf16.gmra.mxu0 %v426
          %v599 = vpop.f32.mrf.mxu0
          %v600 = vadd.f32 %v448, %v599
          %v601 = vpop.f32.mrf.mxu0
          %v602 = vadd.f32 %v452, %v601
          %v603 = vpop.f32.mrf.mxu0
          %v604 = vadd.f32 %v448, %v603
          %v605 = vpop.f32.mrf.mxu0
          %v606 = vadd.f32 %v452, %v605
          %607 = vdwg.mxu0
          %v608 = vpack.c.bf16 %v574, %v570
          %v609 = vpack.c.bf16 %v584, %v580
          %v610 = vpack.c.bf16 %v594, %v590
          %v611 = vpack.c.bf16 %v604, %v600
          %v616 = vunpack.c.l.b16 %v608
          %v617 = vunpack.c.h.b16 %v608
          %v618 = vunpack.c.l.b16 %v609
          %v619 = vunpack.c.h.b16 %v609
          %v620 = vunpack.c.l.b16 %v610
          %v621 = vunpack.c.h.b16 %v610
          %v622 = vunpack.c.l.b16 %v611
          %v623 = vunpack.c.h.b16 %v611
          %v624 = vpack.c.b16 %v616, %v616
          %v625 = vpack.c.b16 %v617, %v617
          %v626 = vpack.c.b16 %v618, %v618
          %v627 = vpack.c.b16 %v619, %v619
          %v628 = vpack.c.b16 %v620, %v620
          %v629 = vpack.c.b16 %v621, %v621
          %v630 = vpack.c.b16 %v622, %v622
          %v631 = vpack.c.b16 %v623, %v623
          %vm640 = vcmask 257024
          %641 = vst.msk [vmem:[#allocation2] sm:$0xf] %vm640, %v624
          %642 = vst.msk [vmem:[#allocation2 + $0x4] sm:$0xf] %vm640, %v625
          %643 = vst.msk [vmem:[#allocation2 + $0x8] sm:$0xf] %vm640, %v626
          %644 = vst.msk [vmem:[#allocation2 + $0xc] sm:$0xf] %vm640, %v627
          %645 = vst.msk [vmem:[#allocation2 + $0x10] sm:$0xf] %vm640, %v628
          %646 = vst.msk [vmem:[#allocation2 + $0x14] sm:$0xf] %vm640, %v629
          %647 = vst.msk [vmem:[#allocation2 + $0x18] sm:$0xf] %vm640, %v630
          %648 = vst.msk [vmem:[#allocation2 + $0x1c] sm:$0xf] %vm640, %v631
          %v649 = vpack.c.bf16 %v576, %v572
          %v650 = vpack.c.bf16 %v586, %v582
          %v651 = vpack.c.bf16 %v596, %v592
          %v652 = vpack.c.bf16 %v606, %v602
          %v657 = vunpack.c.l.b16 %v649
          %v658 = vunpack.c.h.b16 %v649
          %v659 = vunpack.c.l.b16 %v650
          %v660 = vunpack.c.h.b16 %v650
          %v661 = vunpack.c.l.b16 %v651
          %v662 = vunpack.c.h.b16 %v651
          %v663 = vunpack.c.l.b16 %v652
          %v664 = vunpack.c.h.b16 %v652
          %v665 = vpack.c.b16 %v657, %v657
          %v666 = vpack.c.b16 %v658, %v658
          %v667 = vpack.c.b16 %v659, %v659
          %v668 = vpack.c.b16 %v660, %v660
          %v669 = vpack.c.b16 %v661, %v661
          %v670 = vpack.c.b16 %v662, %v662
          %v671 = vpack.c.b16 %v663, %v663
          %v672 = vpack.c.b16 %v664, %v664
          %681 = vst.msk [vmem:[#allocation3] sm:$0xf] %vm640, %v665
          %682 = vst.msk [vmem:[#allocation3 + $0x4] sm:$0xf] %vm640, %v666
          %683 = vst.msk [vmem:[#allocation3 + $0x8] sm:$0xf] %vm640, %v667
          %684 = vst.msk [vmem:[#allocation3 + $0xc] sm:$0xf] %vm640, %v668
          %685 = vst.msk [vmem:[#allocation3 + $0x10] sm:$0xf] %vm640, %v669
          %686 = vst.msk [vmem:[#allocation3 + $0x14] sm:$0xf] %vm640, %v670
          %687 = vst.msk [vmem:[#allocation3 + $0x18] sm:$0xf] %vm640, %v671
          %688 = vst.msk [vmem:[#allocation3 + $0x1c] sm:$0xf] %vm640, %v672
          %689 = vrot.lane.b32.xlu0 %v624, 96
          %v690 = vpop.permute.xlu0 %689
          %691 = vrot.lane.b32.xlu0 %v625, 96
          %v692 = vpop.permute.xlu0 %691
          %693 = vrot.lane.b32.xlu0 %v626, 96
          %v694 = vpop.permute.xlu0 %693
          %695 = vrot.lane.b32.xlu0 %v627, 96
          %v696 = vpop.permute.xlu0 %695
          %697 = vrot.lane.b32.xlu0 %v628, 96
          %v698 = vpop.permute.xlu0 %697
          %699 = vrot.lane.b32.xlu0 %v629, 96
          %v700 = vpop.permute.xlu0 %699
          %701 = vrot.lane.b32.xlu0 %v630, 96
          %v702 = vpop.permute.xlu0 %701
          %703 = vrot.lane.b32.xlu0 %v631, 96
          %v704 = vpop.permute.xlu0 %703
          %s713 = scalar_lea.vmem [#allocation2], 32
          %714 = vst.msk [vmem:[%s713] sm:$0xf] %vm640, %v690
          %715 = vst.msk [vmem:[%s713 + $0x4] sm:$0xf] %vm640, %v692
          %716 = vst.msk [vmem:[%s713 + $0x8] sm:$0xf] %vm640, %v694
          %717 = vst.msk [vmem:[%s713 + $0xc] sm:$0xf] %vm640, %v696
          %718 = vst.msk [vmem:[%s713 + $0x10] sm:$0xf] %vm640, %v698
          %719 = vst.msk [vmem:[%s713 + $0x14] sm:$0xf] %vm640, %v700
          %720 = vst.msk [vmem:[%s713 + $0x18] sm:$0xf] %vm640, %v702
          %721 = vst.msk [vmem:[%s713 + $0x1c] sm:$0xf] %vm640, %v704
          %722 = vrot.lane.b32.xlu0 %v665, 96
          %v723 = vpop.permute.xlu0 %722
          %724 = vrot.lane.b32.xlu0 %v666, 96
          %v725 = vpop.permute.xlu0 %724
          %726 = vrot.lane.b32.xlu0 %v667, 96
          %v727 = vpop.permute.xlu0 %726
          %728 = vrot.lane.b32.xlu0 %v668, 96
          %v729 = vpop.permute.xlu0 %728
          %730 = vrot.lane.b32.xlu0 %v669, 96
          %v731 = vpop.permute.xlu0 %730
          %732 = vrot.lane.b32.xlu0 %v670, 96
          %v733 = vpop.permute.xlu0 %732
          %734 = vrot.lane.b32.xlu0 %v671, 96
          %v735 = vpop.permute.xlu0 %734
          %736 = vrot.lane.b32.xlu0 %v672, 96
          %v737 = vpop.permute.xlu0 %736
          %s746 = scalar_lea.vmem [#allocation3], 32
          %747 = vst.msk [vmem:[%s746] sm:$0xf] %vm640, %v723
          %748 = vst.msk [vmem:[%s746 + $0x4] sm:$0xf] %vm640, %v725
          %749 = vst.msk [vmem:[%s746 + $0x8] sm:$0xf] %vm640, %v727
          %750 = vst.msk [vmem:[%s746 + $0xc] sm:$0xf] %vm640, %v729
          %751 = vst.msk [vmem:[%s746 + $0x10] sm:$0xf] %vm640, %v731
          %752 = vst.msk [vmem:[%s746 + $0x14] sm:$0xf] %vm640, %v733
          %753 = vst.msk [vmem:[%s746 + $0x18] sm:$0xf] %vm640, %v735
          %754 = vst.msk [vmem:[%s746 + $0x1c] sm:$0xf] %vm640, %v737
          %755 = vrot.lane.b32.xlu0 %v624, 64
          %v756 = vpop.permute.xlu0 %755
          %757 = vrot.lane.b32.xlu0 %v625, 64
          %v758 = vpop.permute.xlu0 %757
          %759 = vrot.lane.b32.xlu0 %v626, 64
          %v760 = vpop.permute.xlu0 %759
          %761 = vrot.lane.b32.xlu0 %v627, 64
          %v762 = vpop.permute.xlu0 %761
          %763 = vrot.lane.b32.xlu0 %v628, 64
          %v764 = vpop.permute.xlu0 %763
          %765 = vrot.lane.b32.xlu0 %v629, 64
          %v766 = vpop.permute.xlu0 %765
          %767 = vrot.lane.b32.xlu0 %v630, 64
          %v768 = vpop.permute.xlu0 %767
          %769 = vrot.lane.b32.xlu0 %v631, 64
          %v770 = vpop.permute.xlu0 %769
          %s779 = scalar_lea.vmem [#allocation2], 64
          %780 = vst.msk [vmem:[%s779] sm:$0xf] %vm640, %v756
          %781 = vst.msk [vmem:[%s779 + $0x4] sm:$0xf] %vm640, %v758
          %782 = vst.msk [vmem:[%s779 + $0x8] sm:$0xf] %vm640, %v760
          %783 = vst.msk [vmem:[%s779 + $0xc] sm:$0xf] %vm640, %v762
          %784 = vst.msk [vmem:[%s779 + $0x10] sm:$0xf] %vm640, %v764
          %785 = vst.msk [vmem:[%s779 + $0x14] sm:$0xf] %vm640, %v766
          %786 = vst.msk [vmem:[%s779 + $0x18] sm:$0xf] %vm640, %v768
          %787 = vst.msk [vmem:[%s779 + $0x1c] sm:$0xf] %vm640, %v770
          %788 = vrot.lane.b32.xlu0 %v665, 64
          %v789 = vpop.permute.xlu0 %788
          %790 = vrot.lane.b32.xlu0 %v666, 64
          %v791 = vpop.permute.xlu0 %790
          %792 = vrot.lane.b32.xlu0 %v667, 64
          %v793 = vpop.permute.xlu0 %792
          %794 = vrot.lane.b32.xlu0 %v668, 64
          %v795 = vpop.permute.xlu0 %794
          %796 = vrot.lane.b32.xlu0 %v669, 64
          %v797 = vpop.permute.xlu0 %796
          %798 = vrot.lane.b32.xlu0 %v670, 64
          %v799 = vpop.permute.xlu0 %798
          %800 = vrot.lane.b32.xlu0 %v671, 64
          %v801 = vpop.permute.xlu0 %800
          %802 = vrot.lane.b32.xlu0 %v672, 64
          %v803 = vpop.permute.xlu0 %802
          %s812 = scalar_lea.vmem [#allocation3], 64
          %813 = vst.msk [vmem:[%s812] sm:$0xf] %vm640, %v789
          %814 = vst.msk [vmem:[%s812 + $0x4] sm:$0xf] %vm640, %v791
          %815 = vst.msk [vmem:[%s812 + $0x8] sm:$0xf] %vm640, %v793
          %816 = vst.msk [vmem:[%s812 + $0xc] sm:$0xf] %vm640, %v795
          %817 = vst.msk [vmem:[%s812 + $0x10] sm:$0xf] %vm640, %v797
          %818 = vst.msk [vmem:[%s812 + $0x14] sm:$0xf] %vm640, %v799
          %819 = vst.msk [vmem:[%s812 + $0x18] sm:$0xf] %vm640, %v801
          %820 = vst.msk [vmem:[%s812 + $0x1c] sm:$0xf] %vm640, %v803
          %821 = vrot.lane.b32.xlu0 %v624, 32
          %v822 = vpop.permute.xlu0 %821
          %823 = vrot.lane.b32.xlu0 %v625, 32
          %v824 = vpop.permute.xlu0 %823
          %825 = vrot.lane.b32.xlu0 %v626, 32
          %v826 = vpop.permute.xlu0 %825
          %827 = vrot.lane.b32.xlu0 %v627, 32
          %v828 = vpop.permute.xlu0 %827
          %829 = vrot.lane.b32.xlu0 %v628, 32
          %v830 = vpop.permute.xlu0 %829
          %831 = vrot.lane.b32.xlu0 %v629, 32
          %v832 = vpop.permute.xlu0 %831
          %833 = vrot.lane.b32.xlu0 %v630, 32
          %v834 = vpop.permute.xlu0 %833
          %835 = vrot.lane.b32.xlu0 %v631, 32
          %v836 = vpop.permute.xlu0 %835
          %s845 = scalar_lea.vmem [#allocation2], 96
          %846 = vst.msk [vmem:[%s845] sm:$0xf] %vm640, %v822
          %847 = vst.msk [vmem:[%s845 + $0x4] sm:$0xf] %vm640, %v824
          %848 = vst.msk [vmem:[%s845 + $0x8] sm:$0xf] %vm640, %v826
          %849 = vst.msk [vmem:[%s845 + $0xc] sm:$0xf] %vm640, %v828
          %850 = vst.msk [vmem:[%s845 + $0x10] sm:$0xf] %vm640, %v830
          %851 = vst.msk [vmem:[%s845 + $0x14] sm:$0xf] %vm640, %v832
          %852 = vst.msk [vmem:[%s845 + $0x18] sm:$0xf] %vm640, %v834
          %853 = vst.msk [vmem:[%s845 + $0x1c] sm:$0xf] %vm640, %v836
          %854 = vrot.lane.b32.xlu0 %v665, 32
          %v855 = vpop.permute.xlu0 %854
          %856 = vrot.lane.b32.xlu0 %v666, 32
          %v857 = vpop.permute.xlu0 %856
          %858 = vrot.lane.b32.xlu0 %v667, 32
          %v859 = vpop.permute.xlu0 %858
          %860 = vrot.lane.b32.xlu0 %v668, 32
          %v861 = vpop.permute.xlu0 %860
          %862 = vrot.lane.b32.xlu0 %v669, 32
          %v863 = vpop.permute.xlu0 %862
          %864 = vrot.lane.b32.xlu0 %v670, 32
          %v865 = vpop.permute.xlu0 %864
          %866 = vrot.lane.b32.xlu0 %v671, 32
          %v867 = vpop.permute.xlu0 %866
          %868 = vrot.lane.b32.xlu0 %v672, 32
          %v869 = vpop.permute.xlu0 %868
          %s878 = scalar_lea.vmem [#allocation3], 96
          %879 = vst.msk [vmem:[%s878] sm:$0xf] %vm640, %v855
          %880 = vst.msk [vmem:[%s878 + $0x4] sm:$0xf] %vm640, %v857
          %881 = vst.msk [vmem:[%s878 + $0x8] sm:$0xf] %vm640, %v859
          %882 = vst.msk [vmem:[%s878 + $0xc] sm:$0xf] %vm640, %v861
          %883 = vst.msk [vmem:[%s878 + $0x10] sm:$0xf] %vm640, %v863
          %884 = vst.msk [vmem:[%s878 + $0x14] sm:$0xf] %vm640, %v865
          %885 = vst.msk [vmem:[%s878 + $0x18] sm:$0xf] %vm640, %v867
          %886 = vst.msk [vmem:[%s878 + $0x1c] sm:$0xf] %vm640, %v869
        $region80: #{tpu_custom_call.1} parent=51 // pred_fallthru
          _
        %s887 = smul.u32 %s33, 16
        %s888 = scalar_lea.vmem %s356, %s887 [#allocation4]
        %v889 = vld [vmem:[%s888] sm:$0xff]
        %v890 = vld [vmem:[%s888 + $0x8] sm:$0xff]
        %v891 = vpack.c.bf16 %v890, %v889
        %v892 = vld [vmem:[#allocation7] sm:$0xf]
        %v893 = vld [vmem:[#allocation7 + $0xc] sm:$0xf]
        %v894 = vld [vmem:[#allocation7 + $0x18] sm:$0xf]
        %v895 = vld [vmem:[#allocation7 + $0x24] sm:$0xf]
        %v896 = vld [vmem:[#allocation7 + $0x30] sm:$0xf]
        %v897 = vld [vmem:[#allocation7 + $0x3c] sm:$0xf]
        %v898 = vld [vmem:[#allocation7 + $0x48] sm:$0xf]
        %v899 = vld [vmem:[#allocation7 + $0x54] sm:$0xf]
        %v900 = vld [vmem:[#allocation7 + $0x60] sm:$0xf]
        %v901 = vld [vmem:[#allocation7 + $0x6c] sm:$0xf]
        %v902 = vld [vmem:[#allocation7 + $0x78] sm:$0xf]
        %v903 = vld [vmem:[#allocation7 + $0x84] sm:$0xf]
        %v904 = vld [vmem:[#allocation7 + $0x90] sm:$0xf]
        %v905 = vld [vmem:[#allocation7 + $0x9c] sm:$0xf]
        %v906 = vld [vmem:[#allocation7 + $0xa8] sm:$0xf]
        %v907 = vld [vmem:[#allocation7 + $0xb4] sm:$0xf]
        %v908 = vld [vmem:[%s2] sm:$0x1]
        %v910 = vlaneseq
        %v911 = vshrl.u32 %v910, 7
        %v912 = vsub.s32 0, %v911
        %v913 = vrot.slane %v908, %v912
        %v931 = vunpack.c.l.b16 %v892
        %v932 = vunpack.c.l.b16 %v893
        %v933 = vunpack.c.l.b16 %v894
        %v934 = vunpack.c.l.b16 %v895
        %v935 = vunpack.c.l.b16 %v896
        %v936 = vunpack.c.l.b16 %v897
        %v937 = vunpack.c.l.b16 %v898
        %v938 = vunpack.c.l.b16 %v899
        %v939 = vunpack.c.l.b16 %v900
        %v940 = vunpack.c.l.b16 %v901
        %v941 = vunpack.c.l.b16 %v902
        %v942 = vunpack.c.l.b16 %v903
        %v943 = vunpack.c.l.b16 %v904
        %v944 = vunpack.c.l.b16 %v905
        %v945 = vunpack.c.l.b16 %v906
        %v946 = vunpack.c.l.b16 %v907
        %v947 = vpack.c.b16 %v932, %v931
        %v948 = vpack.c.b16 %v934, %v933
        %v949 = vpack.c.b16 %v936, %v935
        %v950 = vpack.c.b16 %v938, %v937
        %v951 = vpack.c.b16 %v940, %v939
        %v952 = vpack.c.b16 %v942, %v941
        %v953 = vpack.c.b16 %v944, %v943
        %v954 = vpack.c.b16 %v946, %v945
        %963 = vmatprep.subr.bf16.mxu0 0
        %964 = vmatpush1.bf16.msra.mxu0 %v954
        %965 = vmatprep.subr.bf16.mxu0 0
        %966 = vmatpush1.bf16.msra.mxu0 %v953
        %967 = vmatprep.subr.bf16.mxu0 0
        %968 = vmatpush1.bf16.msra.mxu0 %v952
        %969 = vmatprep.subr.bf16.mxu0 0
        %970 = vmatpush1.bf16.msra.mxu0 %v951
        %971 = vmatprep.subr.bf16.mxu0 0
        %972 = vmatpush1.bf16.msra.mxu0 %v950
        %973 = vmatprep.subr.bf16.mxu0 0
        %974 = vmatpush1.bf16.msra.mxu0 %v949
        %975 = vmatprep.subr.bf16.mxu0 0
        %976 = vmatpush1.bf16.msra.mxu0 %v948
        %977 = vmatprep.subr.bf16.mxu0 0
        %978 = vmatpush1.bf16.msra.mxu0 %v947
        %979 = vmatprep.subr.bf16.mxu0 0
        %980 = vmatpush2.bf16.msra.mxu0 0
        %981 = vmatprep.subr.bf16.mxu0 0
        %982 = vmatpush2.bf16.msra.mxu0 0
        %983 = vmatprep.subr.bf16.mxu0 0
        %984 = vmatpush2.bf16.msra.mxu0 0
        %985 = vmatprep.subr.bf16.mxu0 0
        %986 = vmatpush2.bf16.msra.mxu0 0
        %987 = vmatprep.subr.bf16.mxu0 0
        %988 = vmatpush2.bf16.msra.mxu0 0
        %989 = vmatprep.subr.bf16.mxu0 0
        %990 = vmatpush2.bf16.msra.mxu0 0
        %991 = vmatprep.subr.bf16.mxu0 0
        %992 = vmatpush2.bf16.msra.mxu0 0
        %993 = vmatprep.subr.bf16.mxu0 0
        %994 = vmatpush2.bf16.msra.mxu0 0
        %995 = vmatprep.mubr.bf16.mxu0 0
        %996 = vmatmul.mubr.bf16.gmra.mxu0 %v891
        %v997 = vpop.f32.mrf.mxu0
        %v998 = vadd.f32 %v913, %v997
        %v999 = vpop.f32.mrf.mxu0
        %v1000 = vpop.f32.mrf.mxu0
        %v1001 = vadd.f32 %v913, %v1000
        %v1002 = vpop.f32.mrf.mxu0
        %1003 = vdwg.mxu0
        %v1004 = vmul.f32 %v998, 0.17677669
        %v1005 = vmul.f32 %v1001, 0.17677669
        %1008 = vrot.lane.b32.xlu0 %v1004, 96
        %v1009 = vpop.permute.xlu0 %1008
        %1010 = vrot.lane.b32.xlu0 %v1005, 96
        %v1011 = vpop.permute.xlu0 %1010
        %1014 = vrot.lane.b32.xlu0 %v1004, 64
        %v1015 = vpop.permute.xlu0 %1014
        %1016 = vrot.lane.b32.xlu0 %v1005, 64
        %v1017 = vpop.permute.xlu0 %1016
        %1020 = vrot.lane.b32.xlu0 %v1004, 32
        %v1021 = vpop.permute.xlu0 %1020
        %1022 = vrot.lane.b32.xlu0 %v1005, 32
        %v1023 = vpop.permute.xlu0 %1022
        %v1026 = vpack.c.bf16 %v1005, %v1004
        %v1027 = vpack.c.bf16 %v1011, %v1009
        %v1028 = vpack.c.bf16 %v1017, %v1015
        %v1029 = vpack.c.bf16 %v1023, %v1021
        %v1030 = vld [vmem:[#allocation2] sm:$0xf]
        %v1031 = vld [vmem:[#allocation2 + $0x4] sm:$0xf]
        %v1032 = vld [vmem:[#allocation2 + $0x8] sm:$0xf]
        %v1033 = vld [vmem:[#allocation2 + $0xc] sm:$0xf]
        %v1034 = vld [vmem:[#allocation2 + $0x10] sm:$0xf]
        %v1035 = vld [vmem:[#allocation2 + $0x14] sm:$0xf]
        %v1036 = vld [vmem:[#allocation2 + $0x18] sm:$0xf]
        %v1037 = vld [vmem:[#allocation2 + $0x1c] sm:$0xf]
        %v1038 = vld [vmem:[#allocation2 + $0x20] sm:$0xf]
        %v1039 = vld [vmem:[#allocation2 + $0x24] sm:$0xf]
        %v1040 = vld [vmem:[#allocation2 + $0x28] sm:$0xf]
        %v1041 = vld [vmem:[#allocation2 + $0x2c] sm:$0xf]
        %v1042 = vld [vmem:[#allocation2 + $0x30] sm:$0xf]
        %v1043 = vld [vmem:[#allocation2 + $0x34] sm:$0xf]
        %v1044 = vld [vmem:[#allocation2 + $0x38] sm:$0xf]
        %v1045 = vld [vmem:[#allocation2 + $0x3c] sm:$0xf]
        %v1046 = vld [vmem:[#allocation2 + $0x40] sm:$0xf]
        %v1047 = vld [vmem:[#allocation2 + $0x44] sm:$0xf]
        %v1048 = vld [vmem:[#allocation2 + $0x48] sm:$0xf]
        %v1049 = vld [vmem:[#allocation2 + $0x4c] sm:$0xf]
        %v1050 = vld [vmem:[#allocation2 + $0x50] sm:$0xf]
        %v1051 = vld [vmem:[#allocation2 + $0x54] sm:$0xf]
        %v1052 = vld [vmem:[#allocation2 + $0x58] sm:$0xf]
        %v1053 = vld [vmem:[#allocation2 + $0x5c] sm:$0xf]
        %v1054 = vld [vmem:[#allocation2 + $0x60] sm:$0xf]
        %v1055 = vld [vmem:[#allocation2 + $0x64] sm:$0xf]
        %v1056 = vld [vmem:[#allocation2 + $0x68] sm:$0xf]
        %v1057 = vld [vmem:[#allocation2 + $0x6c] sm:$0xf]
        %v1058 = vld [vmem:[#allocation2 + $0x70] sm:$0xf]
        %v1059 = vld [vmem:[#allocation2 + $0x74] sm:$0xf]
        %v1060 = vld [vmem:[#allocation2 + $0x78] sm:$0xf]
        %v1061 = vld [vmem:[#allocation2 + $0x7c] sm:$0xf]
        %v1070 = vunpack.c.l.b16 %v1030
        %v1071 = vunpack.c.l.b16 %v1031
        %v1072 = vunpack.c.l.b16 %v1032
        %v1073 = vunpack.c.l.b16 %v1033
        %v1074 = vunpack.c.l.b16 %v1034
        %v1075 = vunpack.c.l.b16 %v1035
        %v1076 = vunpack.c.l.b16 %v1036
        %v1077 = vunpack.c.l.b16 %v1037
        %v1078 = vpack.c.b16 %v1071, %v1070
        %v1079 = vpack.c.b16 %v1073, %v1072
        %v1080 = vpack.c.b16 %v1075, %v1074
        %v1081 = vpack.c.b16 %v1077, %v1076
        %vm1082 = vcmask 261120
        %v1084 = vsel %vm1082, %v1026, 0
        %v1087 = vsel %vm1082, %v1078, 0
        %v1090 = vsel %vm1082, %v1079, 0
        %v1093 = vsel %vm1082, %v1080, 0
        %v1096 = vsel %vm1082, %v1081, 0
        %1098 = vmatprep.subr.bf16.mxu0 0
        %1099 = vmatpush1.bf16.xpose.msra.mxu0 0
        %1100 = vmatprep.subr.bf16.mxu0 0
        %1101 = vmatpush1.bf16.xpose.msra.mxu0 0
        %1102 = vmatprep.subr.bf16.mxu0 0
        %1103 = vmatpush1.bf16.xpose.msra.mxu0 0
        %1104 = vmatprep.subr.bf16.mxu0 0
        %1105 = vmatpush1.bf16.xpose.msra.mxu0 0
        %1106 = vmatprep.subr.bf16.mxu0 0
        %1107 = vmatpush1.bf16.xpose.msra.mxu0 %v1096
        %1108 = vmatprep.subr.bf16.mxu0 0
        %1109 = vmatpush1.bf16.xpose.msra.mxu0 %v1093
        %1110 = vmatprep.subr.bf16.mxu0 0
        %1111 = vmatpush1.bf16.xpose.msra.mxu0 %v1090
        %1112 = vmatprep.subr.bf16.mxu0 0
        %1113 = vmatpush1.bf16.xpose.msra.mxu0 %v1087
        %1114 = vmatprep.subr.bf16.mxu0 0
        %1115 = vmatpush2.bf16.xpose.msra.mxu0 0
        %1116 = vmatprep.subr.bf16.mxu0 0
        %1117 = vmatpush2.bf16.xpose.msra.mxu0 0
        %1118 = vmatprep.subr.bf16.mxu0 0
        %1119 = vmatpush2.bf16.xpose.msra.mxu0 0
        %1120 = vmatprep.subr.bf16.mxu0 0
        %1121 = vmatpush2.bf16.xpose.msra.mxu0 0
        %1122 = vmatprep.subr.bf16.mxu0 0
        %1123 = vmatpush2.bf16.xpose.msra.mxu0 0
        %1124 = vmatprep.subr.bf16.mxu0 0
        %1125 = vmatpush2.bf16.xpose.msra.mxu0 0
        %1126 = vmatprep.subr.bf16.mxu0 0
        %1127 = vmatpush2.bf16.xpose.msra.mxu0 0
        %1128 = vmatprep.subr.bf16.mxu0 0
        %1129 = vmatpush2.bf16.xpose.msra.mxu0 0
        %1130 = vmatprep.mubr.bf16.mxu0 0
        %1131 = vmatmul.mubr.bf16.gmra.mxu0 %v1084
        %v1132 = vpop.f32.mrf.mxu0
        %v1133 = vadd.f32 0.0, %v1132
        %v1134 = vpop.f32.mrf.mxu0
        %v1135 = vpop.f32.mrf.mxu0
        %v1136 = vadd.f32 0.0, %v1135
        %v1137 = vpop.f32.mrf.mxu0
        %1138 = vdwg.mxu0
        %v1147 = vunpack.c.l.b16 %v1038
        %v1148 = vunpack.c.l.b16 %v1039
        %v1149 = vunpack.c.l.b16 %v1040
        %v1150 = vunpack.c.l.b16 %v1041
        %v1151 = vunpack.c.l.b16 %v1042
        %v1152 = vunpack.c.l.b16 %v1043
        %v1153 = vunpack.c.l.b16 %v1044
        %v1154 = vunpack.c.l.b16 %v1045
        %v1155 = vpack.c.b16 %v1148, %v1147
        %v1156 = vpack.c.b16 %v1150, %v1149
        %v1157 = vpack.c.b16 %v1152, %v1151
        %v1158 = vpack.c.b16 %v1154, %v1153
        %v1160 = vsel %vm1082, %v1027, 0
        %v1163 = vsel %vm1082, %v1155, 0
        %v1166 = vsel %vm1082, %v1156, 0
        %v1169 = vsel %vm1082, %v1157, 0
        %v1172 = vsel %vm1082, %v1158, 0
        %1174 = vmatprep.subr.bf16.mxu0 0
        %1175 = vmatpush1.bf16.xpose.msra.mxu0 0
        %1176 = vmatprep.subr.bf16.mxu0 0
        %1177 = vmatpush1.bf16.xpose.msra.mxu0 0
        %1178 = vmatprep.subr.bf16.mxu0 0
        %1179 = vmatpush1.bf16.xpose.msra.mxu0 0
        %1180 = vmatprep.subr.bf16.mxu0 0
        %1181 = vmatpush1.bf16.xpose.msra.mxu0 0
        %1182 = vmatprep.subr.bf16.mxu0 0
        %1183 = vmatpush1.bf16.xpose.msra.mxu0 %v1172
        %1184 = vmatprep.subr.bf16.mxu0 0
        %1185 = vmatpush1.bf16.xpose.msra.mxu0 %v1169
        %1186 = vmatprep.subr.bf16.mxu0 0
        %1187 = vmatpush1.bf16.xpose.msra.mxu0 %v1166
        %1188 = vmatprep.subr.bf16.mxu0 0
        %1189 = vmatpush1.bf16.xpose.msra.mxu0 %v1163
        %1190 = vmatprep.subr.bf16.mxu0 0
        %1191 = vmatpush2.bf16.xpose.msra.mxu0 0
        %1192 = vmatprep.subr.bf16.mxu0 0
        %1193 = vmatpush2.bf16.xpose.msra.mxu0 0
        %1194 = vmatprep.subr.bf16.mxu0 0
        %1195 = vmatpush2.bf16.xpose.msra.mxu0 0
        %1196 = vmatprep.subr.bf16.mxu0 0
        %1197 = vmatpush2.bf16.xpose.msra.mxu0 0
        %1198 = vmatprep.subr.bf16.mxu0 0
        %1199 = vmatpush2.bf16.xpose.msra.mxu0 0
        %1200 = vmatprep.subr.bf16.mxu0 0
        %1201 = vmatpush2.bf16.xpose.msra.mxu0 0
        %1202 = vmatprep.subr.bf16.mxu0 0
        %1203 = vmatpush2.bf16.xpose.msra.mxu0 0
        %1204 = vmatprep.subr.bf16.mxu0 0
        %1205 = vmatpush2.bf16.xpose.msra.mxu0 0
        %1206 = vmatprep.mubr.bf16.mxu0 0
        %1207 = vmatmul.mubr.bf16.gmra.mxu0 %v1160
        %v1208 = vpop.f32.mrf.mxu0
        %v1209 = vadd.f32 0.0, %v1208
        %v1210 = vpop.f32.mrf.mxu0
        %v1211 = vpop.f32.mrf.mxu0
        %v1212 = vadd.f32 0.0, %v1211
        %v1213 = vpop.f32.mrf.mxu0
        %1214 = vdwg.mxu0
        %v1223 = vunpack.c.l.b16 %v1046
        %v1224 = vunpack.c.l.b16 %v1047
        %v1225 = vunpack.c.l.b16 %v1048
        %v1226 = vunpack.c.l.b16 %v1049
        %v1227 = vunpack.c.l.b16 %v1050
        %v1228 = vunpack.c.l.b16 %v1051
        %v1229 = vunpack.c.l.b16 %v1052
        %v1230 = vunpack.c.l.b16 %v1053
        %v1231 = vpack.c.b16 %v1224, %v1223
        %v1232 = vpack.c.b16 %v1226, %v1225
        %v1233 = vpack.c.b16 %v1228, %v1227
        %v1234 = vpack.c.b16 %v1230, %v1229
        %v1236 = vsel %vm1082, %v1028, 0
        %v1239 = vsel %vm1082, %v1231, 0
        %v1242 = vsel %vm1082, %v1232, 0
        %v1245 = vsel %vm1082, %v1233, 0
        %v1248 = vsel %vm1082, %v1234, 0
        %1250 = vmatprep.subr.bf16.mxu0 0
        %1251 = vmatpush1.bf16.xpose.msra.mxu0 0
        %1252 = vmatprep.subr.bf16.mxu0 0
        %1253 = vmatpush1.bf16.xpose.msra.mxu0 0
        %1254 = vmatprep.subr.bf16.mxu0 0
        %1255 = vmatpush1.bf16.xpose.msra.mxu0 0
        %1256 = vmatprep.subr.bf16.mxu0 0
        %1257 = vmatpush1.bf16.xpose.msra.mxu0 0
        %1258 = vmatprep.subr.bf16.mxu0 0
        %1259 = vmatpush1.bf16.xpose.msra.mxu0 %v1248
        %1260 = vmatprep.subr.bf16.mxu0 0
        %1261 = vmatpush1.bf16.xpose.msra.mxu0 %v1245
        %1262 = vmatprep.subr.bf16.mxu0 0
        %1263 = vmatpush1.bf16.xpose.msra.mxu0 %v1242
        %1264 = vmatprep.subr.bf16.mxu0 0
        %1265 = vmatpush1.bf16.xpose.msra.mxu0 %v1239
        %1266 = vmatprep.subr.bf16.mxu0 0
        %1267 = vmatpush2.bf16.xpose.msra.mxu0 0
        %1268 = vmatprep.subr.bf16.mxu0 0
        %1269 = vmatpush2.bf16.xpose.msra.mxu0 0
        %1270 = vmatprep.subr.bf16.mxu0 0
        %1271 = vmatpush2.bf16.xpose.msra.mxu0 0
        %1272 = vmatprep.subr.bf16.mxu0 0
        %1273 = vmatpush2.bf16.xpose.msra.mxu0 0
        %1274 = vmatprep.subr.bf16.mxu0 0
        %1275 = vmatpush2.bf16.xpose.msra.mxu0 0
        %1276 = vmatprep.subr.bf16.mxu0 0
        %1277 = vmatpush2.bf16.xpose.msra.mxu0 0
        %1278 = vmatprep.subr.bf16.mxu0 0
        %1279 = vmatpush2.bf16.xpose.msra.mxu0 0
        %1280 = vmatprep.subr.bf16.mxu0 0
        %1281 = vmatpush2.bf16.xpose.msra.mxu0 0
        %1282 = vmatprep.mubr.bf16.mxu0 0
        %1283 = vmatmul.mubr.bf16.gmra.mxu0 %v1236
        %v1284 = vpop.f32.mrf.mxu0
        %v1285 = vadd.f32 0.0, %v1284
        %v1286 = vpop.f32.mrf.mxu0
        %v1287 = vpop.f32.mrf.mxu0
        %v1288 = vadd.f32 0.0, %v1287
        %v1289 = vpop.f32.mrf.mxu0
        %1290 = vdwg.mxu0
        %v1299 = vunpack.c.l.b16 %v1054
        %v1300 = vunpack.c.l.b16 %v1055
        %v1301 = vunpack.c.l.b16 %v1056
        %v1302 = vunpack.c.l.b16 %v1057
        %v1303 = vunpack.c.l.b16 %v1058
        %v1304 = vunpack.c.l.b16 %v1059
        %v1305 = vunpack.c.l.b16 %v1060
        %v1306 = vunpack.c.l.b16 %v1061
        %v1307 = vpack.c.b16 %v1300, %v1299
        %v1308 = vpack.c.b16 %v1302, %v1301
        %v1309 = vpack.c.b16 %v1304, %v1303
        %v1310 = vpack.c.b16 %v1306, %v1305
        %v1312 = vsel %vm1082, %v1029, 0
        %v1315 = vsel %vm1082, %v1307, 0
        %v1318 = vsel %vm1082, %v1308, 0
        %v1321 = vsel %vm1082, %v1309, 0
        %v1324 = vsel %vm1082, %v1310, 0
        %1326 = vmatprep.subr.bf16.mxu0 0
        %1327 = vmatpush1.bf16.xpose.msra.mxu0 0
        %1328 = vmatprep.subr.bf16.mxu0 0
        %1329 = vmatpush1.bf16.xpose.msra.mxu0 0
        %1330 = vmatprep.subr.bf16.mxu0 0
        %1331 = vmatpush1.bf16.xpose.msra.mxu0 0
        %1332 = vmatprep.subr.bf16.mxu0 0
        %1333 = vmatpush1.bf16.xpose.msra.mxu0 0
        %1334 = vmatprep.subr.bf16.mxu0 0
        %1335 = vmatpush1.bf16.xpose.msra.mxu0 %v1324
        %1336 = vmatprep.subr.bf16.mxu0 0
        %1337 = vmatpush1.bf16.xpose.msra.mxu0 %v1321
        %1338 = vmatprep.subr.bf16.mxu0 0
        %1339 = vmatpush1.bf16.xpose.msra.mxu0 %v1318
        %1340 = vmatprep.subr.bf16.mxu0 0
        %1341 = vmatpush1.bf16.xpose.msra.mxu0 %v1315
        %1342 = vmatprep.subr.bf16.mxu0 0
        %1343 = vmatpush2.bf16.xpose.msra.mxu0 0
        %1344 = vmatprep.subr.bf16.mxu0 0
        %1345 = vmatpush2.bf16.xpose.msra.mxu0 0
        %1346 = vmatprep.subr.bf16.mxu0 0
        %1347 = vmatpush2.bf16.xpose.msra.mxu0 0
        %1348 = vmatprep.subr.bf16.mxu0 0
        %1349 = vmatpush2.bf16.xpose.msra.mxu0 0
        %1350 = vmatprep.subr.bf16.mxu0 0
        %1351 = vmatpush2.bf16.xpose.msra.mxu0 0
        %1352 = vmatprep.subr.bf16.mxu0 0
        %1353 = vmatpush2.bf16.xpose.msra.mxu0 0
        %1354 = vmatprep.subr.bf16.mxu0 0
        %1355 = vmatpush2.bf16.xpose.msra.mxu0 0
        %1356 = vmatprep.subr.bf16.mxu0 0
        %1357 = vmatpush2.bf16.xpose.msra.mxu0 0
        %1358 = vmatprep.mubr.bf16.mxu0 0
        %1359 = vmatmul.mubr.bf16.gmra.mxu0 %v1312
        %v1360 = vpop.f32.mrf.mxu0
        %v1361 = vadd.f32 0.0, %v1360
        %v1362 = vpop.f32.mrf.mxu0
        %v1363 = vpop.f32.mrf.mxu0
        %v1364 = vadd.f32 0.0, %v1363
        %v1365 = vpop.f32.mrf.mxu0
        %1366 = vdwg.mxu0
        %vm1367 = vcmask 523264
        %v1368 = vsel %vm1367, %v1133, -inf
        %1369 = vmax.xlane.f32.xlu0 %v1368
        %v1370 = vpop.xlane.xlu0 %1369
        %v1371 = vsel %vm1367, %v1136, -inf
        %1372 = vmax.xlane.f32.xlu0 %v1371
        %v1373 = vpop.xlane.xlu0 %1372
        %v1374 = vsel %vm1367, %v1209, -inf
        %1375 = vmax.xlane.f32.xlu0 %v1374
        %v1376 = vpop.xlane.xlu0 %1375
        %v1377 = vsel %vm1367, %v1212, -inf
        %1378 = vmax.xlane.f32.xlu0 %v1377
        %v1379 = vpop.xlane.xlu0 %1378
        %v1380 = vsel %vm1367, %v1285, -inf
        %1381 = vmax.xlane.f32.xlu0 %v1380
        %v1382 = vpop.xlane.xlu0 %1381
        %v1383 = vsel %vm1367, %v1288, -inf
        %1384 = vmax.xlane.f32.xlu0 %v1383
        %v1385 = vpop.xlane.xlu0 %1384
        %v1386 = vsel %vm1367, %v1361, -inf
        %1387 = vmax.xlane.f32.xlu0 %v1386
        %v1388 = vpop.xlane.xlu0 %1387
        %v1389 = vsel %vm1367, %v1364, -inf
        %1390 = vmax.xlane.f32.xlu0 %v1389
        %v1391 = vpop.xlane.xlu0 %1390
        %v1392 = vsub.f32 %v1133, %v1370
        %v1393 = vsub.f32 %v1136, %v1373
        %v1394 = vsub.f32 %v1209, %v1376
        %v1395 = vsub.f32 %v1212, %v1379
        %v1396 = vsub.f32 %v1285, %v1382
        %v1397 = vsub.f32 %v1288, %v1385
        %v1398 = vsub.f32 %v1361, %v1388
        %v1399 = vsub.f32 %v1364, %v1391
        %v1400 = vmul.f32 %v1392, 1.442695
        %v1401 = vpow.pop %v1400
        %v1402 = vmul.f32 %v1393, 1.442695
        %v1403 = vpow.pop %v1402
        %v1404 = vmul.f32 %v1394, 1.442695
        %v1405 = vpow.pop %v1404
        %v1406 = vmul.f32 %v1395, 1.442695
        %v1407 = vpow.pop %v1406
        %v1408 = vmul.f32 %v1396, 1.442695
        %v1409 = vpow.pop %v1408
        %v1410 = vmul.f32 %v1397, 1.442695
        %v1411 = vpow.pop %v1410
        %v1412 = vmul.f32 %v1398, 1.442695
        %v1413 = vpow.pop %v1412
        %v1414 = vmul.f32 %v1399, 1.442695
        %v1415 = vpow.pop %v1414
        %v1416 = vsel %vm1367, %v1401, 0.0
        %1417 = vadd.xlane.f32.xlu0 %v1416
        %v1418 = vpop.xlane.xlu0 %1417
        %v1419 = vsel %vm1367, %v1403, 0.0
        %1420 = vadd.xlane.f32.xlu0 %v1419
        %v1421 = vpop.xlane.xlu0 %1420
        %v1422 = vsel %vm1367, %v1405, 0.0
        %1423 = vadd.xlane.f32.xlu0 %v1422
        %v1424 = vpop.xlane.xlu0 %1423
        %v1425 = vsel %vm1367, %v1407, 0.0
        %1426 = vadd.xlane.f32.xlu0 %v1425
        %v1427 = vpop.xlane.xlu0 %1426
        %v1428 = vsel %vm1367, %v1409, 0.0
        %1429 = vadd.xlane.f32.xlu0 %v1428
        %v1430 = vpop.xlane.xlu0 %1429
        %v1431 = vsel %vm1367, %v1411, 0.0
        %1432 = vadd.xlane.f32.xlu0 %v1431
        %v1433 = vpop.xlane.xlu0 %1432
        %v1434 = vsel %vm1367, %v1413, 0.0
        %1435 = vadd.xlane.f32.xlu0 %v1434
        %v1436 = vpop.xlane.xlu0 %1435
        %v1437 = vsel %vm1367, %v1415, 0.0
        %1438 = vadd.xlane.f32.xlu0 %v1437
        %v1439 = vpop.xlane.xlu0 %1438
        %v1440 = vrcp.pop %v1418
        %v1441 = vrcp.pop %v1421
        %v1442 = vrcp.pop %v1424
        %v1443 = vrcp.pop %v1427
        %v1444 = vrcp.pop %v1430
        %v1445 = vrcp.pop %v1433
        %v1446 = vrcp.pop %v1436
        %v1447 = vrcp.pop %v1439
        %v1448 = vmul.f32 %v1401, %v1440
        %v1449 = vmul.f32 %v1403, %v1441
        %v1450 = vmul.f32 %v1405, %v1442
        %v1451 = vmul.f32 %v1407, %v1443
        %v1452 = vmul.f32 %v1409, %v1444
        %v1453 = vmul.f32 %v1411, %v1445
        %v1454 = vmul.f32 %v1413, %v1446
        %v1455 = vmul.f32 %v1415, %v1447
        %v1456 = vpack.c.bf16 %v1449, %v1448
        %v1457 = vpack.c.bf16 %v1451, %v1450
        %v1458 = vpack.c.bf16 %v1453, %v1452
        %v1459 = vpack.c.bf16 %v1455, %v1454
        %v1460 = vld [vmem:[#allocation3] sm:$0xf]
        %v1461 = vld [vmem:[#allocation3 + $0x4] sm:$0xf]
        %v1462 = vld [vmem:[#allocation3 + $0x8] sm:$0xf]
        %v1463 = vld [vmem:[#allocation3 + $0xc] sm:$0xf]
        %v1464 = vld [vmem:[#allocation3 + $0x10] sm:$0xf]
        %v1465 = vld [vmem:[#allocation3 + $0x14] sm:$0xf]
        %v1466 = vld [vmem:[#allocation3 + $0x18] sm:$0xf]
        %v1467 = vld [vmem:[#allocation3 + $0x1c] sm:$0xf]
        %v1468 = vld [vmem:[#allocation3 + $0x20] sm:$0xf]
        %v1469 = vld [vmem:[#allocation3 + $0x24] sm:$0xf]
        %v1470 = vld [vmem:[#allocation3 + $0x28] sm:$0xf]
        %v1471 = vld [vmem:[#allocation3 + $0x2c] sm:$0xf]
        %v1472 = vld [vmem:[#allocation3 + $0x30] sm:$0xf]
        %v1473 = vld [vmem:[#allocation3 + $0x34] sm:$0xf]
        %v1474 = vld [vmem:[#allocation3 + $0x38] sm:$0xf]
        %v1475 = vld [vmem:[#allocation3 + $0x3c] sm:$0xf]
        %v1476 = vld [vmem:[#allocation3 + $0x40] sm:$0xf]
        %v1477 = vld [vmem:[#allocation3 + $0x44] sm:$0xf]
        %v1478 = vld [vmem:[#allocation3 + $0x48] sm:$0xf]
        %v1479 = vld [vmem:[#allocation3 + $0x4c] sm:$0xf]
        %v1480 = vld [vmem:[#allocation3 + $0x50] sm:$0xf]
        %v1481 = vld [vmem:[#allocation3 + $0x54] sm:$0xf]
        %v1482 = vld [vmem:[#allocation3 + $0x58] sm:$0xf]
        %v1483 = vld [vmem:[#allocation3 + $0x5c] sm:$0xf]
        %v1484 = vld [vmem:[#allocation3 + $0x60] sm:$0xf]
        %v1485 = vld [vmem:[#allocation3 + $0x64] sm:$0xf]
        %v1486 = vld [vmem:[#allocation3 + $0x68] sm:$0xf]
        %v1487 = vld [vmem:[#allocation3 + $0x6c] sm:$0xf]
        %v1488 = vld [vmem:[#allocation3 + $0x70] sm:$0xf]
        %v1489 = vld [vmem:[#allocation3 + $0x74] sm:$0xf]
        %v1490 = vld [vmem:[#allocation3 + $0x78] sm:$0xf]
        %v1491 = vld [vmem:[#allocation3 + $0x7c] sm:$0xf]
        %v1500 = vunpack.c.l.b16 %v1460
        %v1501 = vunpack.c.l.b16 %v1461
        %v1502 = vunpack.c.l.b16 %v1462
        %v1503 = vunpack.c.l.b16 %v1463
        %v1504 = vunpack.c.l.b16 %v1464
        %v1505 = vunpack.c.l.b16 %v1465
        %v1506 = vunpack.c.l.b16 %v1466
        %v1507 = vunpack.c.l.b16 %v1467
        %v1508 = vpack.c.b16 %v1501, %v1500
        %v1509 = vpack.c.b16 %v1503, %v1502
        %v1510 = vpack.c.b16 %v1505, %v1504
        %v1511 = vpack.c.b16 %v1507, %v1506
        %v1517 = vsel %vm1367, %v1456, 0
        %1519 = vmatprep.subr.bf16.mxu0 0
        %1520 = vmatpush1.bf16.msra.mxu0 0
        %1521 = vmatprep.subr.bf16.mxu0 0
        %1522 = vmatpush1.bf16.msra.mxu0 0
        %1523 = vmatprep.subr.bf16.mxu0 0
        %1524 = vmatpush1.bf16.msra.mxu0 0
        %1525 = vmatprep.subr.bf16.mxu0 0
        %1526 = vmatpush1.bf16.msra.mxu0 0
        %1527 = vmatprep.subr.bf16.mxu0 0
        %1528 = vmatpush1.bf16.msra.mxu0 %v1511
        %1529 = vmatprep.subr.bf16.mxu0 0
        %1530 = vmatpush1.bf16.msra.mxu0 %v1510
        %1531 = vmatprep.subr.bf16.mxu0 0
        %1532 = vmatpush1.bf16.msra.mxu0 %v1509
        %1533 = vmatprep.subr.bf16.mxu0 0
        %1534 = vmatpush1.bf16.msra.mxu0 %v1508
        %1535 = vmatprep.subr.bf16.mxu0 0
        %1536 = vmatpush2.bf16.msra.mxu0 0
        %1537 = vmatprep.subr.bf16.mxu0 0
        %1538 = vmatpush2.bf16.msra.mxu0 0
        %1539 = vmatprep.subr.bf16.mxu0 0
        %1540 = vmatpush2.bf16.msra.mxu0 0
        %1541 = vmatprep.subr.bf16.mxu0 0
        %1542 = vmatpush2.bf16.msra.mxu0 0
        %1543 = vmatprep.subr.bf16.mxu0 0
        %1544 = vmatpush2.bf16.msra.mxu0 0
        %1545 = vmatprep.subr.bf16.mxu0 0
        %1546 = vmatpush2.bf16.msra.mxu0 0
        %1547 = vmatprep.subr.bf16.mxu0 0
        %1548 = vmatpush2.bf16.msra.mxu0 0
        %1549 = vmatprep.subr.bf16.mxu0 0
        %1550 = vmatpush2.bf16.msra.mxu0 0
        %1551 = vmatprep.mubr.bf16.mxu0 0
        %1552 = vmatmul.mubr.bf16.gmra.mxu0 %v1517
        %v1553 = vpop.f32.mrf.mxu0
        %v1554 = vadd.f32 0.0, %v1553
        %v1555 = vpop.f32.mrf.mxu0
        %v1556 = vpop.f32.mrf.mxu0
        %v1557 = vadd.f32 0.0, %v1556
        %v1558 = vpop.f32.mrf.mxu0
        %1559 = vdwg.mxu0
        %v1568 = vunpack.c.l.b16 %v1468
        %v1569 = vunpack.c.l.b16 %v1469
        %v1570 = vunpack.c.l.b16 %v1470
        %v1571 = vunpack.c.l.b16 %v1471
        %v1572 = vunpack.c.l.b16 %v1472
        %v1573 = vunpack.c.l.b16 %v1473
        %v1574 = vunpack.c.l.b16 %v1474
        %v1575 = vunpack.c.l.b16 %v1475
        %v1576 = vpack.c.b16 %v1569, %v1568
        %v1577 = vpack.c.b16 %v1571, %v1570
        %v1578 = vpack.c.b16 %v1573, %v1572
        %v1579 = vpack.c.b16 %v1575, %v1574
        %v1585 = vsel %vm1367, %v1457, 0
        %1587 = vmatprep.subr.bf16.mxu0 0
        %1588 = vmatpush1.bf16.msra.mxu0 0
        %1589 = vmatprep.subr.bf16.mxu0 0
        %1590 = vmatpush1.bf16.msra.mxu0 0
        %1591 = vmatprep.subr.bf16.mxu0 0
        %1592 = vmatpush1.bf16.msra.mxu0 0
        %1593 = vmatprep.subr.bf16.mxu0 0
        %1594 = vmatpush1.bf16.msra.mxu0 0
        %1595 = vmatprep.subr.bf16.mxu0 0
        %1596 = vmatpush1.bf16.msra.mxu0 %v1579
        %1597 = vmatprep.subr.bf16.mxu0 0
        %1598 = vmatpush1.bf16.msra.mxu0 %v1578
        %1599 = vmatprep.subr.bf16.mxu0 0
        %1600 = vmatpush1.bf16.msra.mxu0 %v1577
        %1601 = vmatprep.subr.bf16.mxu0 0
        %1602 = vmatpush1.bf16.msra.mxu0 %v1576
        %1603 = vmatprep.subr.bf16.mxu0 0
        %1604 = vmatpush2.bf16.msra.mxu0 0
        %1605 = vmatprep.subr.bf16.mxu0 0
        %1606 = vmatpush2.bf16.msra.mxu0 0
        %1607 = vmatprep.subr.bf16.mxu0 0
        %1608 = vmatpush2.bf16.msra.mxu0 0
        %1609 = vmatprep.subr.bf16.mxu0 0
        %1610 = vmatpush2.bf16.msra.mxu0 0
        %1611 = vmatprep.subr.bf16.mxu0 0
        %1612 = vmatpush2.bf16.msra.mxu0 0
        %1613 = vmatprep.subr.bf16.mxu0 0
        %1614 = vmatpush2.bf16.msra.mxu0 0
        %1615 = vmatprep.subr.bf16.mxu0 0
        %1616 = vmatpush2.bf16.msra.mxu0 0
        %1617 = vmatprep.subr.bf16.mxu0 0
        %1618 = vmatpush2.bf16.msra.mxu0 0
        %1619 = vmatprep.mubr.bf16.mxu0 0
        %1620 = vmatmul.mubr.bf16.gmra.mxu0 %v1585
        %v1621 = vpop.f32.mrf.mxu0
        %v1622 = vadd.f32 0.0, %v1621
        %v1623 = vpop.f32.mrf.mxu0
        %v1624 = vpop.f32.mrf.mxu0
        %v1625 = vadd.f32 0.0, %v1624
        %v1626 = vpop.f32.mrf.mxu0
        %1627 = vdwg.mxu0
        %v1636 = vunpack.c.l.b16 %v1476
        %v1637 = vunpack.c.l.b16 %v1477
        %v1638 = vunpack.c.l.b16 %v1478
        %v1639 = vunpack.c.l.b16 %v1479
        %v1640 = vunpack.c.l.b16 %v1480
        %v1641 = vunpack.c.l.b16 %v1481
        %v1642 = vunpack.c.l.b16 %v1482
        %v1643 = vunpack.c.l.b16 %v1483
        %v1644 = vpack.c.b16 %v1637, %v1636
        %v1645 = vpack.c.b16 %v1639, %v1638
        %v1646 = vpack.c.b16 %v1641, %v1640
        %v1647 = vpack.c.b16 %v1643, %v1642
        %v1653 = vsel %vm1367, %v1458, 0
        %1655 = vmatprep.subr.bf16.mxu0 0
        %1656 = vmatpush1.bf16.msra.mxu0 0
        %1657 = vmatprep.subr.bf16.mxu0 0
        %1658 = vmatpush1.bf16.msra.mxu0 0
        %1659 = vmatprep.subr.bf16.mxu0 0
        %1660 = vmatpush1.bf16.msra.mxu0 0
        %1661 = vmatprep.subr.bf16.mxu0 0
        %1662 = vmatpush1.bf16.msra.mxu0 0
        %1663 = vmatprep.subr.bf16.mxu0 0
        %1664 = vmatpush1.bf16.msra.mxu0 %v1647
        %1665 = vmatprep.subr.bf16.mxu0 0
        %1666 = vmatpush1.bf16.msra.mxu0 %v1646
        %1667 = vmatprep.subr.bf16.mxu0 0
        %1668 = vmatpush1.bf16.msra.mxu0 %v1645
        %1669 = vmatprep.subr.bf16.mxu0 0
        %1670 = vmatpush1.bf16.msra.mxu0 %v1644
        %1671 = vmatprep.subr.bf16.mxu0 0
        %1672 = vmatpush2.bf16.msra.mxu0 0
        %1673 = vmatprep.subr.bf16.mxu0 0
        %1674 = vmatpush2.bf16.msra.mxu0 0
        %1675 = vmatprep.subr.bf16.mxu0 0
        %1676 = vmatpush2.bf16.msra.mxu0 0
        %1677 = vmatprep.subr.bf16.mxu0 0
        %1678 = vmatpush2.bf16.msra.mxu0 0
        %1679 = vmatprep.subr.bf16.mxu0 0
        %1680 = vmatpush2.bf16.msra.mxu0 0
        %1681 = vmatprep.subr.bf16.mxu0 0
        %1682 = vmatpush2.bf16.msra.mxu0 0
        %1683 = vmatprep.subr.bf16.mxu0 0
        %1684 = vmatpush2.bf16.msra.mxu0 0
        %1685 = vmatprep.subr.bf16.mxu0 0
        %1686 = vmatpush2.bf16.msra.mxu0 0
        %1687 = vmatprep.mubr.bf16.mxu0 0
        %1688 = vmatmul.mubr.bf16.gmra.mxu0 %v1653
        %v1689 = vpop.f32.mrf.mxu0
        %v1690 = vadd.f32 0.0, %v1689
        %v1691 = vpop.f32.mrf.mxu0
        %v1692 = vpop.f32.mrf.mxu0
        %v1693 = vadd.f32 0.0, %v1692
        %v1694 = vpop.f32.mrf.mxu0
        %1695 = vdwg.mxu0
        %v1704 = vunpack.c.l.b16 %v1484
        %v1705 = vunpack.c.l.b16 %v1485
        %v1706 = vunpack.c.l.b16 %v1486
        %v1707 = vunpack.c.l.b16 %v1487
        %v1708 = vunpack.c.l.b16 %v1488
        %v1709 = vunpack.c.l.b16 %v1489
        %v1710 = vunpack.c.l.b16 %v1490
        %v1711 = vunpack.c.l.b16 %v1491
        %v1712 = vpack.c.b16 %v1705, %v1704
        %v1713 = vpack.c.b16 %v1707, %v1706
        %v1714 = vpack.c.b16 %v1709, %v1708
        %v1715 = vpack.c.b16 %v1711, %v1710
        %v1721 = vsel %vm1367, %v1459, 0
        %1723 = vmatprep.subr.bf16.mxu0 0
        %1724 = vmatpush1.bf16.msra.mxu0 0
        %1725 = vmatprep.subr.bf16.mxu0 0
        %1726 = vmatpush1.bf16.msra.mxu0 0
        %1727 = vmatprep.subr.bf16.mxu0 0
        %1728 = vmatpush1.bf16.msra.mxu0 0
        %1729 = vmatprep.subr.bf16.mxu0 0
        %1730 = vmatpush1.bf16.msra.mxu0 0
        %1731 = vmatprep.subr.bf16.mxu0 0
        %1732 = vmatpush1.bf16.msra.mxu0 %v1715
        %1733 = vmatprep.subr.bf16.mxu0 0
        %1734 = vmatpush1.bf16.msra.mxu0 %v1714
        %1735 = vmatprep.subr.bf16.mxu0 0
        %1736 = vmatpush1.bf16.msra.mxu0 %v1713
        %1737 = vmatprep.subr.bf16.mxu0 0
        %1738 = vmatpush1.bf16.msra.mxu0 %v1712
        %1739 = vmatprep.subr.bf16.mxu0 0
        %1740 = vmatpush2.bf16.msra.mxu0 0
        %1741 = vmatprep.subr.bf16.mxu0 0
        %1742 = vmatpush2.bf16.msra.mxu0 0
        %1743 = vmatprep.subr.bf16.mxu0 0
        %1744 = vmatpush2.bf16.msra.mxu0 0
        %1745 = vmatprep.subr.bf16.mxu0 0
        %1746 = vmatpush2.bf16.msra.mxu0 0
        %1747 = vmatprep.subr.bf16.mxu0 0
        %1748 = vmatpush2.bf16.msra.mxu0 0
        %1749 = vmatprep.subr.bf16.mxu0 0
        %1750 = vmatpush2.bf16.msra.mxu0 0
        %1751 = vmatprep.subr.bf16.mxu0 0
        %1752 = vmatpush2.bf16.msra.mxu0 0
        %1753 = vmatprep.subr.bf16.mxu0 0
        %1754 = vmatpush2.bf16.msra.mxu0 0
        %1755 = vmatprep.mubr.bf16.mxu0 0
        %1756 = vmatmul.mubr.bf16.gmra.mxu0 %v1721
        %v1757 = vpop.f32.mrf.mxu0
        %v1758 = vadd.f32 0.0, %v1757
        %v1759 = vpop.f32.mrf.mxu0
        %v1760 = vpop.f32.mrf.mxu0
        %v1761 = vadd.f32 0.0, %v1760
        %v1762 = vpop.f32.mrf.mxu0
        %1763 = vdwg.mxu0
        %1766 = vrot.lane.b32.xlu0 %v1622, 32
        %v1767 = vpop.permute.xlu0 %1766
        %1768 = vrot.lane.b32.xlu0 %v1625, 32
        %v1769 = vpop.permute.xlu0 %1768
        %1774 = vrot.lane.b32.xlu0 %v1690, 64
        %v1775 = vpop.permute.xlu0 %1774
        %1776 = vrot.lane.b32.xlu0 %v1693, 64
        %v1777 = vpop.permute.xlu0 %1776
        %1782 = vrot.lane.b32.xlu0 %v1758, 96
        %v1783 = vpop.permute.xlu0 %1782
        %1784 = vrot.lane.b32.xlu0 %v1761, 96
        %v1785 = vpop.permute.xlu0 %1784
        %v1788 = vsel %vm1082, %v1554, %v1767
        %v1789 = vsel %vm1082, %v1557, %v1769
        %v1790 = vsel %vm1367, %v1788, %v1775
        %v1791 = vsel %vm1367, %v1789, %v1777
        %vm1792 = vcmask 785408
        %v1793 = vsel %vm1792, %v1790, %v1783
        %v1794 = vsel %vm1792, %v1791, %v1785
        %v1795 = vpack.c.bf16 %v1794, %v1793
        %v1796 = vld [vmem:[#allocation9] sm:$0xf]
        %v1797 = vld [vmem:[#allocation9 + $0x4] sm:$0xf]
        %v1798 = vld [vmem:[#allocation9 + $0x8] sm:$0xf]
        %v1799 = vld [vmem:[#allocation9 + $0xc] sm:$0xf]
        %v1800 = vld [vmem:[#allocation9 + $0x10] sm:$0xf]
        %v1801 = vld [vmem:[#allocation9 + $0x14] sm:$0xf]
        %v1802 = vld [vmem:[#allocation9 + $0x18] sm:$0xf]
        %v1803 = vld [vmem:[#allocation9 + $0x1c] sm:$0xf]
        %v1804 = vld [vmem:[#allocation9 + $0x20] sm:$0xf]
        %v1805 = vld [vmem:[#allocation9 + $0x24] sm:$0xf]
        %v1806 = vld [vmem:[#allocation9 + $0x28] sm:$0xf]
        %v1807 = vld [vmem:[#allocation9 + $0x2c] sm:$0xf]
        %v1808 = vld [vmem:[#allocation9 + $0x30] sm:$0xf]
        %v1809 = vld [vmem:[#allocation9 + $0x34] sm:$0xf]
        %v1810 = vld [vmem:[#allocation9 + $0x38] sm:$0xf]
        %v1811 = vld [vmem:[#allocation9 + $0x3c] sm:$0xf]
        %v1812 = vld [vmem:[%s7] sm:$0x1]
        %v1813 = vlaneseq
        %v1814 = vshrl.u32 %v1813, 7
        %v1815 = vsub.s32 0, %v1814
        %v1816 = vrot.slane %v1812, %v1815
        %v1833 = vunpack.c.l.b16 %v1796
        %v1834 = vunpack.c.l.b16 %v1797
        %v1835 = vunpack.c.l.b16 %v1798
        %v1836 = vunpack.c.l.b16 %v1799
        %v1837 = vunpack.c.l.b16 %v1800
        %v1838 = vunpack.c.l.b16 %v1801
        %v1839 = vunpack.c.l.b16 %v1802
        %v1840 = vunpack.c.l.b16 %v1803
        %v1841 = vunpack.c.l.b16 %v1804
        %v1842 = vunpack.c.l.b16 %v1805
        %v1843 = vunpack.c.l.b16 %v1806
        %v1844 = vunpack.c.l.b16 %v1807
        %v1845 = vunpack.c.l.b16 %v1808
        %v1846 = vunpack.c.l.b16 %v1809
        %v1847 = vunpack.c.l.b16 %v1810
        %v1848 = vunpack.c.l.b16 %v1811
        %v1849 = vpack.c.b16 %v1834, %v1833
        %v1850 = vpack.c.b16 %v1836, %v1835
        %v1851 = vpack.c.b16 %v1838, %v1837
        %v1852 = vpack.c.b16 %v1840, %v1839
        %v1853 = vpack.c.b16 %v1842, %v1841
        %v1854 = vpack.c.b16 %v1844, %v1843
        %v1855 = vpack.c.b16 %v1846, %v1845
        %v1856 = vpack.c.b16 %v1848, %v1847
        %1865 = vmatprep.subr.bf16.mxu0 0
        %1866 = vmatpush1.bf16.msra.mxu0 %v1856
        %1867 = vmatprep.subr.bf16.mxu0 0
        %1868 = vmatpush1.bf16.msra.mxu0 %v1855
        %1869 = vmatprep.subr.bf16.mxu0 0
        %1870 = vmatpush1.bf16.msra.mxu0 %v1854
        %1871 = vmatprep.subr.bf16.mxu0 0
        %1872 = vmatpush1.bf16.msra.mxu0 %v1853
        %1873 = vmatprep.subr.bf16.mxu0 0
        %1874 = vmatpush1.bf16.msra.mxu0 %v1852
        %1875 = vmatprep.subr.bf16.mxu0 0
        %1876 = vmatpush1.bf16.msra.mxu0 %v1851
        %1877 = vmatprep.subr.bf16.mxu0 0
        %1878 = vmatpush1.bf16.msra.mxu0 %v1850
        %1879 = vmatprep.subr.bf16.mxu0 0
        %1880 = vmatpush1.bf16.msra.mxu0 %v1849
        %1881 = vmatprep.subr.bf16.mxu0 0
        %1882 = vmatpush2.bf16.msra.mxu0 0
        %1883 = vmatprep.subr.bf16.mxu0 0
        %1884 = vmatpush2.bf16.msra.mxu0 0
        %1885 = vmatprep.subr.bf16.mxu0 0
        %1886 = vmatpush2.bf16.msra.mxu0 0
        %1887 = vmatprep.subr.bf16.mxu0 0
        %1888 = vmatpush2.bf16.msra.mxu0 0
        %1889 = vmatprep.subr.bf16.mxu0 0
        %1890 = vmatpush2.bf16.msra.mxu0 0
        %1891 = vmatprep.subr.bf16.mxu0 0
        %1892 = vmatpush2.bf16.msra.mxu0 0
        %1893 = vmatprep.subr.bf16.mxu0 0
        %1894 = vmatpush2.bf16.msra.mxu0 0
        %1895 = vmatprep.subr.bf16.mxu0 0
        %1896 = vmatpush2.bf16.msra.mxu0 0
        %1897 = vmatprep.mubr.bf16.mxu0 0
        %1898 = vmatmul.mubr.bf16.gmra.mxu0 %v1795
        %v1899 = vpop.f32.mrf.mxu0
        %v1900 = vadd.f32 %v1816, %v1899
        %v1901 = vpop.f32.mrf.mxu0
        %v1902 = vpop.f32.mrf.mxu0
        %v1903 = vadd.f32 %v1816, %v1902
        %v1904 = vpop.f32.mrf.mxu0
        %1905 = vdwg.mxu0
        %v1906 = vadd.f32 %v889, %v1900
        %v1907 = vadd.f32 %v890, %v1903
        %v1908 = vld [vmem:[%s7 + $0x1] sm:$0x1]
        %v1909 = vld [vmem:[%s7 + $0x2] sm:$0x1]
        %1910 = vadd.xlane.f32.xlu0 %v1906
        %v1911 = vpop.xlane.xlu0 %1910
        %1912 = vadd.xlane.f32.xlu0 %v1907
        %v1913 = vpop.xlane.xlu0 %1912
        %v1914 = vrcp.pop 128.0
        %v1915 = vmul.f32 %v1911, %v1914
        %v1916 = vmul.f32 %v1913, %v1914
        %v1917 = vsub.f32 %v1906, %v1915
        %v1918 = vsub.f32 %v1907, %v1916
        %v1919 = vmul.f32 %v1917, %v1917
        %v1920 = vmul.f32 %v1918, %v1918
        %1921 = vadd.xlane.f32.xlu0 %v1919
        %v1922 = vpop.xlane.xlu0 %1921
        %1923 = vadd.xlane.f32.xlu0 %v1920
        %v1924 = vpop.xlane.xlu0 %1923
        %v1925 = vmul.f32 %v1922, %v1914
        %v1926 = vmul.f32 %v1924, %v1914
        %v1927 = vadd.f32 %v1925, 1e-05
        %v1928 = vadd.f32 %v1926, 1e-05
        %v1929 = vrsqrt.pop %v1927
        %v1930 = vrsqrt.pop %v1928
        %v1931 = vmul.f32 %v1917, %v1929
        %v1932 = vmul.f32 %v1918, %v1930
        %v1933 = vlaneseq
        %v1934 = vshrl.u32 %v1933, 7
        %v1935 = vsub.s32 0, %v1934
        %v1936 = vrot.slane %v1908, %v1935
        %v1937 = vmul.f32 %v1931, %v1936
        %v1938 = vmul.f32 %v1932, %v1936
        %v1939 = vlaneseq
        %v1940 = vshrl.u32 %v1939, 7
        %v1941 = vsub.s32 0, %v1940
        %v1942 = vrot.slane %v1909, %v1941
        %v1943 = vadd.f32 %v1937, %v1942
        %v1944 = vadd.f32 %v1938, %v1942
        %v1945 = vpack.c.bf16 %v1944, %v1943
        %v1946 = vld [vmem:[#allocation10] sm:$0xff]
        %v1947 = vld [vmem:[#allocation10 + $0x8] sm:$0xff]
        %v1948 = vld [vmem:[#allocation10 + $0x10] sm:$0xff]
        %v1949 = vld [vmem:[#allocation10 + $0x18] sm:$0xff]
        %v1950 = vld [vmem:[#allocation10 + $0x20] sm:$0xff]
        %v1951 = vld [vmem:[#allocation10 + $0x28] sm:$0xff]
        %v1952 = vld [vmem:[#allocation10 + $0x30] sm:$0xff]
        %v1953 = vld [vmem:[#allocation10 + $0x38] sm:$0xff]
        %v1954 = vld [vmem:[#allocation10 + $0x40] sm:$0xff]
        %v1955 = vld [vmem:[#allocation10 + $0x48] sm:$0xff]
        %v1956 = vld [vmem:[#allocation10 + $0x50] sm:$0xff]
        %v1957 = vld [vmem:[#allocation10 + $0x58] sm:$0xff]
        %v1958 = vld [vmem:[#allocation10 + $0x60] sm:$0xff]
        %v1959 = vld [vmem:[#allocation10 + $0x68] sm:$0xff]
        %v1960 = vld [vmem:[#allocation10 + $0x70] sm:$0xff]
        %v1961 = vld [vmem:[#allocation10 + $0x78] sm:$0xff]
        %v1962 = vld [vmem:[#allocation12] sm:$0x3]
        %v1964 = vlaneseq
        %v1965 = vshrl.u32 %v1964, 7
        %v1966 = vsub.s32 0, %v1965
        %v1967 = vrot.slane %v1962, %v1966
        %v1968 = vlaneseq
        %v1969 = vshrl.u32 %v1968, 7
        %v1970 = vsub.s32 1, %v1969
        %v1971 = vrot.slane %v1962, %v1970
        %v1990 = vunpack.c.l.b16 %v1946
        %v1991 = vunpack.c.h.b16 %v1946
        %v1992 = vunpack.c.l.b16 %v1947
        %v1993 = vunpack.c.h.b16 %v1947
        %v1994 = vunpack.c.l.b16 %v1948
        %v1995 = vunpack.c.h.b16 %v1948
        %v1996 = vunpack.c.l.b16 %v1949
        %v1997 = vunpack.c.h.b16 %v1949
        %v1998 = vunpack.c.l.b16 %v1950
        %v1999 = vunpack.c.h.b16 %v1950
        %v2000 = vunpack.c.l.b16 %v1951
        %v2001 = vunpack.c.h.b16 %v1951
        %v2002 = vunpack.c.l.b16 %v1952
        %v2003 = vunpack.c.h.b16 %v1952
        %v2004 = vunpack.c.l.b16 %v1953
        %v2005 = vunpack.c.h.b16 %v1953
        %v2006 = vunpack.c.l.b16 %v1954
        %v2007 = vunpack.c.h.b16 %v1954
        %v2008 = vunpack.c.l.b16 %v1955
        %v2009 = vunpack.c.h.b16 %v1955
        %v2010 = vunpack.c.l.b16 %v1956
        %v2011 = vunpack.c.h.b16 %v1956
        %v2012 = vunpack.c.l.b16 %v1957
        %v2013 = vunpack.c.h.b16 %v1957
        %v2014 = vunpack.c.l.b16 %v1958
        %v2015 = vunpack.c.h.b16 %v1958
        %v2016 = vunpack.c.l.b16 %v1959
        %v2017 = vunpack.c.h.b16 %v1959
        %v2018 = vunpack.c.l.b16 %v1960
        %v2019 = vunpack.c.h.b16 %v1960
        %v2020 = vunpack.c.l.b16 %v1961
        %v2021 = vunpack.c.h.b16 %v1961
        %v2022 = vpack.c.b16 %v1992, %v1990
        %v2023 = vpack.c.b16 %v1993, %v1991
        %v2024 = vpack.c.b16 %v1996, %v1994
        %v2025 = vpack.c.b16 %v1997, %v1995
        %v2026 = vpack.c.b16 %v2000, %v1998
        %v2027 = vpack.c.b16 %v2001, %v1999
        %v2028 = vpack.c.b16 %v2004, %v2002
        %v2029 = vpack.c.b16 %v2005, %v2003
        %v2030 = vpack.c.b16 %v2008, %v2006
        %v2031 = vpack.c.b16 %v2009, %v2007
        %v2032 = vpack.c.b16 %v2012, %v2010
        %v2033 = vpack.c.b16 %v2013, %v2011
        %v2034 = vpack.c.b16 %v2016, %v2014
        %v2035 = vpack.c.b16 %v2017, %v2015
        %v2036 = vpack.c.b16 %v2020, %v2018
        %v2037 = vpack.c.b16 %v2021, %v2019
        %2054 = vmatprep.subr.bf16.mxu0 %v2037
        %2055 = vmatpush1.bf16.msra.mxu0 %v2036
        %2056 = vmatprep.subr.bf16.mxu0 %v2035
        %2057 = vmatpush1.bf16.msra.mxu0 %v2034
        %2058 = vmatprep.subr.bf16.mxu0 %v2033
        %2059 = vmatpush1.bf16.msra.mxu0 %v2032
        %2060 = vmatprep.subr.bf16.mxu0 %v2031
        %2061 = vmatpush1.bf16.msra.mxu0 %v2030
        %2062 = vmatprep.subr.bf16.mxu0 %v2029
        %2063 = vmatpush1.bf16.msra.mxu0 %v2028
        %2064 = vmatprep.subr.bf16.mxu0 %v2027
        %2065 = vmatpush1.bf16.msra.mxu0 %v2026
        %2066 = vmatprep.subr.bf16.mxu0 %v2025
        %2067 = vmatpush1.bf16.msra.mxu0 %v2024
        %2068 = vmatprep.subr.bf16.mxu0 %v2023
        %2069 = vmatpush1.bf16.msra.mxu0 %v2022
        %2070 = vmatprep.subr.bf16.mxu0 0
        %2071 = vmatpush2.bf16.msra.mxu0 0
        %2072 = vmatprep.subr.bf16.mxu0 0
        %2073 = vmatpush2.bf16.msra.mxu0 0
        %2074 = vmatprep.subr.bf16.mxu0 0
        %2075 = vmatpush2.bf16.msra.mxu0 0
        %2076 = vmatprep.subr.bf16.mxu0 0
        %2077 = vmatpush2.bf16.msra.mxu0 0
        %2078 = vmatprep.subr.bf16.mxu0 0
        %2079 = vmatpush2.bf16.msra.mxu0 0
        %2080 = vmatprep.subr.bf16.mxu0 0
        %2081 = vmatpush2.bf16.msra.mxu0 0
        %2082 = vmatprep.subr.bf16.mxu0 0
        %2083 = vmatpush2.bf16.msra.mxu0 0
        %2084 = vmatprep.subr.bf16.mxu0 0
        %2085 = vmatpush2.bf16.msra.mxu0 0
        %2086 = vmatprep.mubr.bf16.mxu0 0
        %2087 = vmatmul.mubr.bf16.gmra.mxu0 %v1945
        %v2088 = vpop.f32.mrf.mxu0
        %v2089 = vadd.f32 %v1967, %v2088
        %v2090 = vpop.f32.mrf.mxu0
        %v2091 = vadd.f32 %v1971, %v2090
        %v2092 = vpop.f32.mrf.mxu0
        %v2093 = vadd.f32 %v1967, %v2092
        %v2094 = vpop.f32.mrf.mxu0
        %v2095 = vadd.f32 %v1971, %v2094
        %2096 = vdwg.mxu0
        %v2097 = vmax.f32 %v2089, 0.0
        %v2098 = vmax.f32 %v2091, 0.0
        %v2099 = vmax.f32 %v2093, 0.0
        %v2100 = vmax.f32 %v2095, 0.0
        %v2101 = vpack.c.bf16 %v2099, %v2097
        %v2102 = vpack.c.bf16 %v2100, %v2098
        %v2103 = vld [vmem:[#allocation13] sm:$0xf]
        %v2104 = vld [vmem:[#allocation13 + $0x4] sm:$0xf]
        %v2105 = vld [vmem:[#allocation13 + $0x8] sm:$0xf]
        %v2106 = vld [vmem:[#allocation13 + $0xc] sm:$0xf]
        %v2107 = vld [vmem:[#allocation13 + $0x10] sm:$0xf]
        %v2108 = vld [vmem:[#allocation13 + $0x14] sm:$0xf]
        %v2109 = vld [vmem:[#allocation13 + $0x18] sm:$0xf]
        %v2110 = vld [vmem:[#allocation13 + $0x1c] sm:$0xf]
        %v2111 = vld [vmem:[#allocation13 + $0x20] sm:$0xf]
        %v2112 = vld [vmem:[#allocation13 + $0x24] sm:$0xf]
        %v2113 = vld [vmem:[#allocation13 + $0x28] sm:$0xf]
        %v2114 = vld [vmem:[#allocation13 + $0x2c] sm:$0xf]
        %v2115 = vld [vmem:[#allocation13 + $0x30] sm:$0xf]
        %v2116 = vld [vmem:[#allocation13 + $0x34] sm:$0xf]
        %v2117 = vld [vmem:[#allocation13 + $0x38] sm:$0xf]
        %v2118 = vld [vmem:[#allocation13 + $0x3c] sm:$0xf]
        %v2119 = vld [vmem:[#allocation13 + $0x40] sm:$0xf]
        %v2120 = vld [vmem:[#allocation13 + $0x44] sm:$0xf]
        %v2121 = vld [vmem:[#allocation13 + $0x48] sm:$0xf]
        %v2122 = vld [vmem:[#allocation13 + $0x4c] sm:$0xf]
        %v2123 = vld [vmem:[#allocation13 + $0x50] sm:$0xf]
        %v2124 = vld [vmem:[#allocation13 + $0x54] sm:$0xf]
        %v2125 = vld [vmem:[#allocation13 + $0x58] sm:$0xf]
        %v2126 = vld [vmem:[#allocation13 + $0x5c] sm:$0xf]
        %v2127 = vld [vmem:[#allocation13 + $0x60] sm:$0xf]
        %v2128 = vld [vmem:[#allocation13 + $0x64] sm:$0xf]
        %v2129 = vld [vmem:[#allocation13 + $0x68] sm:$0xf]
        %v2130 = vld [vmem:[#allocation13 + $0x6c] sm:$0xf]
        %v2131 = vld [vmem:[#allocation13 + $0x70] sm:$0xf]
        %v2132 = vld [vmem:[#allocation13 + $0x74] sm:$0xf]
        %v2133 = vld [vmem:[#allocation13 + $0x78] sm:$0xf]
        %v2134 = vld [vmem:[#allocation13 + $0x7c] sm:$0xf]
        %v2135 = vld [vmem:[%s7 + $0x3] sm:$0x1]
        %v2136 = vlaneseq
        %v2137 = vshrl.u32 %v2136, 7
        %v2138 = vsub.s32 0, %v2137
        %v2139 = vrot.slane %v2135, %v2138
        %v2172 = vunpack.c.l.b16 %v2103
        %v2173 = vunpack.c.l.b16 %v2104
        %v2174 = vunpack.c.l.b16 %v2105
        %v2175 = vunpack.c.l.b16 %v2106
        %v2176 = vunpack.c.l.b16 %v2107
        %v2177 = vunpack.c.l.b16 %v2108
        %v2178 = vunpack.c.l.b16 %v2109
        %v2179 = vunpack.c.l.b16 %v2110
        %v2180 = vunpack.c.l.b16 %v2111
        %v2181 = vunpack.c.l.b16 %v2112
        %v2182 = vunpack.c.l.b16 %v2113
        %v2183 = vunpack.c.l.b16 %v2114
        %v2184 = vunpack.c.l.b16 %v2115
        %v2185 = vunpack.c.l.b16 %v2116
        %v2186 = vunpack.c.l.b16 %v2117
        %v2187 = vunpack.c.l.b16 %v2118
        %v2188 = vunpack.c.l.b16 %v2119
        %v2189 = vunpack.c.l.b16 %v2120
        %v2190 = vunpack.c.l.b16 %v2121
        %v2191 = vunpack.c.l.b16 %v2122
        %v2192 = vunpack.c.l.b16 %v2123
        %v2193 = vunpack.c.l.b16 %v2124
        %v2194 = vunpack.c.l.b16 %v2125
        %v2195 = vunpack.c.l.b16 %v2126
        %v2196 = vunpack.c.l.b16 %v2127
        %v2197 = vunpack.c.l.b16 %v2128
        %v2198 = vunpack.c.l.b16 %v2129
        %v2199 = vunpack.c.l.b16 %v2130
        %v2200 = vunpack.c.l.b16 %v2131
        %v2201 = vunpack.c.l.b16 %v2132
        %v2202 = vunpack.c.l.b16 %v2133
        %v2203 = vunpack.c.l.b16 %v2134
        %v2204 = vpack.c.b16 %v2173, %v2172
        %v2205 = vpack.c.b16 %v2175, %v2174
        %v2206 = vpack.c.b16 %v2177, %v2176
        %v2207 = vpack.c.b16 %v2179, %v2178
        %v2208 = vpack.c.b16 %v2181, %v2180
        %v2209 = vpack.c.b16 %v2183, %v2182
        %v2210 = vpack.c.b16 %v2185, %v2184
        %v2211 = vpack.c.b16 %v2187, %v2186
        %v2212 = vpack.c.b16 %v2189, %v2188
        %v2213 = vpack.c.b16 %v2191, %v2190
        %v2214 = vpack.c.b16 %v2193, %v2192
        %v2215 = vpack.c.b16 %v2195, %v2194
        %v2216 = vpack.c.b16 %v2197, %v2196
        %v2217 = vpack.c.b16 %v2199, %v2198
        %v2218 = vpack.c.b16 %v2201, %v2200
        %v2219 = vpack.c.b16 %v2203, %v2202
        %2236 = vmatprep.subr.bf16.mxu0 0
        %2237 = vmatpush1.bf16.msra.mxu0 %v2211
        %2238 = vmatprep.subr.bf16.mxu0 0
        %2239 = vmatpush1.bf16.msra.mxu0 %v2210
        %2240 = vmatprep.subr.bf16.mxu0 0
        %2241 = vmatpush1.bf16.msra.mxu0 %v2209
        %2242 = vmatprep.subr.bf16.mxu0 0
        %2243 = vmatpush1.bf16.msra.mxu0 %v2208
        %2244 = vmatprep.subr.bf16.mxu0 0
        %2245 = vmatpush1.bf16.msra.mxu0 %v2207
        %2246 = vmatprep.subr.bf16.mxu0 0
        %2247 = vmatpush1.bf16.msra.mxu0 %v2206
        %2248 = vmatprep.subr.bf16.mxu0 0
        %2249 = vmatpush1.bf16.msra.mxu0 %v2205
        %2250 = vmatprep.subr.bf16.mxu0 0
        %2251 = vmatpush1.bf16.msra.mxu0 %v2204
        %2252 = vmatprep.subr.bf16.mxu0 0
        %2253 = vmatpush2.bf16.msra.mxu0 %v2219
        %2254 = vmatprep.subr.bf16.mxu0 0
        %2255 = vmatpush2.bf16.msra.mxu0 %v2218
        %2256 = vmatprep.subr.bf16.mxu0 0
        %2257 = vmatpush2.bf16.msra.mxu0 %v2217
        %2258 = vmatprep.subr.bf16.mxu0 0
        %2259 = vmatpush2.bf16.msra.mxu0 %v2216
        %2260 = vmatprep.subr.bf16.mxu0 0
        %2261 = vmatpush2.bf16.msra.mxu0 %v2215
        %2262 = vmatprep.subr.bf16.mxu0 0
        %2263 = vmatpush2.bf16.msra.mxu0 %v2214
        %2264 = vmatprep.subr.bf16.mxu0 0
        %2265 = vmatpush2.bf16.msra.mxu0 %v2213
        %2266 = vmatprep.subr.bf16.mxu0 0
        %2267 = vmatpush2.bf16.msra.mxu0 %v2212
        %2268 = vmatprep.mubr.bf16.mxu0 %v2102
        %2269 = vmatmul.mubr.bf16.gmra.mxu0 %v2101
        %v2270 = vpop.f32.mrf.mxu0
        %v2271 = vadd.f32 %v2139, %v2270
        %v2272 = vpop.f32.mrf.mxu0
        %v2273 = vpop.f32.mrf.mxu0
        %v2274 = vadd.f32 %v2139, %v2273
        %v2275 = vpop.f32.mrf.mxu0
        %2276 = vdwg.mxu0
        %v2277 = vadd.f32 %v1943, %v2271
        %v2278 = vadd.f32 %v1944, %v2274
        %v2279 = vld [vmem:[%s7 + $0x4] sm:$0x1]
        %v2280 = vld [vmem:[%s7 + $0x5] sm:$0x1]
        %2281 = vadd.xlane.f32.xlu0 %v2277
        %v2282 = vpop.xlane.xlu0 %2281
        %2283 = vadd.xlane.f32.xlu0 %v2278
        %v2284 = vpop.xlane.xlu0 %2283
        %v2285 = vmul.f32 %v2282, %v1914
        %v2286 = vmul.f32 %v2284, %v1914
        %v2287 = vsub.f32 %v2277, %v2285
        %v2288 = vsub.f32 %v2278, %v2286
        %v2289 = vmul.f32 %v2287, %v2287
        %v2290 = vmul.f32 %v2288, %v2288
        %2291 = vadd.xlane.f32.xlu0 %v2289
        %v2292 = vpop.xlane.xlu0 %2291
        %2293 = vadd.xlane.f32.xlu0 %v2290
        %v2294 = vpop.xlane.xlu0 %2293
        %v2295 = vmul.f32 %v2292, %v1914
        %v2296 = vmul.f32 %v2294, %v1914
        %v2297 = vadd.f32 %v2295, 1e-05
        %v2298 = vadd.f32 %v2296, 1e-05
        %v2299 = vrsqrt.pop %v2297
        %v2300 = vrsqrt.pop %v2298
        %v2301 = vmul.f32 %v2287, %v2299
        %v2302 = vmul.f32 %v2288, %v2300
        %v2303 = vlaneseq
        %v2304 = vshrl.u32 %v2303, 7
        %v2305 = vsub.s32 0, %v2304
        %v2306 = vrot.slane %v2279, %v2305
        %v2307 = vmul.f32 %v2301, %v2306
        %v2308 = vmul.f32 %v2302, %v2306
        %v2309 = vlaneseq
        %v2310 = vshrl.u32 %v2309, 7
        %v2311 = vsub.s32 0, %v2310
        %v2312 = vrot.slane %v2280, %v2311
        %v2313 = vadd.f32 %v2307, %v2312
        %v2314 = vadd.f32 %v2308, %v2312
        %2315 = vst [vmem:[%s408] sm:$0xff] %v2313
        %2316 = vst [vmem:[%s408 + $0x8] sm:$0xff] %v2314
        %s2317 = sand.u32 %s223, 1
        %s2318 = scalar_lea.sflag [#allocation6], %s2317
        %s2319 = sand.u32 %s223, 1
        %s2320 = smul.addr %s2319, 16
        %s2321 = scalar_lea.vmem [#allocation15], %s2320
        // Predicated region
        $region81: #{tpu_custom_call.1} parent=51 // pred_check
          %p2322 = pneg %p233
        $region82: #{tpu_custom_call.1} parent=51 // pred_check_branch
          %2324 = sbr.rel (%p2322) target = $region84
        $region83: #{tpu_custom_call.1} parent=51 // pred_region
          %s2325 = smul.u32 2, %s33
          %s2327 = ssub.s32 256, 256
          %2328 = vsyncadd %s2318, %s2327
          %s2329 = smul.addr %s32, 8
          %s2330 = sadd.s32 %s2325, %s2329
          %s2331 = smul.addr %s2330, 128
          %s2332 = scalar_lea.hbm %s8, %s2331
          %s2333 = sshll.u32 %s2321, 4
          %s2334 = int_to_ptr.vmem [resolvable:$true] %s2333
          %2339 = dma.vmem_to_hbm [thread:$0]  %s2334, 256, %s2332, %s2318, 128, 128, 8
        $region84: #{tpu_custom_call.1} parent=51 // pred_fallthru
          _
      $region52: #{tpu_custom_call.1} parent=5 // pred_fallthru
        _
      %p2340 = scmp.le.s32.totalorder 2, %s23
      // Predicated region
      $region85: #{tpu_custom_call.1} parent=5 // pred_check
        %p2341 = pneg %p2340
      $region86: #{tpu_custom_call.1} parent=5 // pred_check_branch
        %2343 = sbr.rel (%p2341) target = $region88
      $region87: #{tpu_custom_call.1} parent=5 // pred_region
        %s2344 = ssub.s32 %s23, 2
        // Predicated region
        $region89: #{tpu_custom_call.1} parent=87 // pred_check
          %p2345 = pneg %p239
        $region90: #{tpu_custom_call.1} parent=87 // pred_check_branch
          %2347 = sbr.rel (%p2345) target = $region92
        $region91: #{tpu_custom_call.1} parent=87 // pred_region
          %s2348 = sand.u32 %s224, 1
          %s2349 = scalar_lea.sflag [#allocation6], %s2348
          %s2350 = sand.u32 %s224, 1
          %s2351 = smul.addr %s2350, 16
          %s2352 = scalar_lea.vmem [#allocation15], %s2351
          %2353 = dma.done %s2349, 256
        $region92: #{tpu_custom_call.1} parent=87 // pred_fallthru
          _
      $region88: #{tpu_custom_call.1} parent=5 // pred_fallthru
        _
    $region6: #{tpu_custom_call.1} parent=1 // loop_footer
      %s27 = sadd.s32 1, %s23
    $region7: #{tpu_custom_call.1} parent=1 // loop_footer_branch
      %22 = sbr.rel target = $region3
    $region8: #{tpu_custom_call.1} parent=1 // loop_exit
      _
    %2354 = vsyncpa [#allocation5], 1
    %s2355 = scalar_lea.sflag [#allocation5], 1
    %2356 = vsyncpa %s2355, 1
    %2357 = vsyncpa [#allocation8], 1
    %2358 = vsyncpa [#allocation11], 1
    %2359 = vsyncpa [#allocation14], 1
    %2360 = vsyncpa [#allocation6], 1
    %s2361 = scalar_lea.sflag [#allocation6], 1
    %2362 = vsyncpa %s2361, 1

// kernel: tpu_custom_call.1
$region0: #{tpu_custom_call.1}
  #allocation0 [shape = 'u32[]', space=smem, size = 0x4, offset = 0x4, fixed_abs, tag = 'smem constant byte address 0x4 - core index']
  #allocation1 [shape = 'u32[144,128]{1,0:T(1,128)}', space=vmem, size = 0x12000, scoped, tag = 'internal scratch']
  #allocation2 [shape = 'bf16[4,64,32]{2,1,0:T(8,128)(2,1)}', space=vmem, size = 0x10000, scoped, tag = 'scratch operand']
  #allocation3 [shape = 'bf16[4,64,32]{2,1,0:T(8,128)(2,1)}', space=vmem, size = 0x10000, scoped, tag = 'scratch operand']
  %s0 = inlined_call_operand.hbm [shape: f32[2,64,128], index: 0, kind: input, shape index: {}]
  %s1 = inlined_call_operand.hbm [shape: bf16[128,384], index: 1, kind: input, shape index: {}]
  %s2 = inlined_call_operand.vmem [shape: f32[1,384], index: 2, kind: input, shape index: {}]
  %s3 = inlined_call_operand.hbm [shape: bf16[128,128], index: 3, kind: input, shape index: {}]
  %s4 = inlined_call_operand.hbm [shape: bf16[128,256], index: 4, kind: input, shape index: {}]
  %s5 = inlined_call_operand.hbm [shape: f32[1,256], index: 5, kind: input, shape index: {}]
  %s6 = inlined_call_operand.hbm [shape: bf16[256,128], index: 6, kind: input, shape index: {}]
  %s7 = inlined_call_operand.vmem [shape: f32[8,128], index: 7, kind: input, shape index: {}]
  %s8 = inlined_call_operand.hbm [shape: f32[2,64,128], index: 8, kind: output, shape index: {}]
  %s9 = sld [smem:[#allocation0]]
  $region93: #{tpu_custom_call.1} parent=0
    _
  %s11 = ssub.s32 1, %s9
  %s12 = scalar_select 0, %s11, %s9
  $region1: #{tpu_custom_call.1} parent=0
    #allocation4 [shape = 'u8[65536]{0}', space=vmem, size = 0x10000, scoped, tag = 'input window, operand 0']
    #allocation5 [shape = 's32[2]{0}', space=sflag, size = 0x8, scoped, tag = 'scoped memory for tpu_custom_call.1']
    #allocation6 [shape = 's32[2]{0}', space=sflag, size = 0x8, scoped, tag = 'scoped memory for tpu_custom_call.1']
    #allocation7 [shape = 'u8[98304]{0}', space=vmem, size = 0x18000, scoped, tag = 'input window, operand 1, single buffered']
    #allocation8 [shape = 's32[1]{0}', space=sflag, size = 0x4, scoped, tag = 'scoped memory for tpu_custom_call.1']
    #allocation9 [shape = 'u8[32768]{0}', space=vmem, size = 0x8000, scoped, tag = 'input window, operand 3, single buffered']
    #allocation10 [shape = 'u8[65536]{0}', space=vmem, size = 0x10000, scoped, tag = 'input window, operand 4, single buffered']
    #allocation11 [shape = 's32[1]{0}', space=sflag, size = 0x4, scoped, tag = 'scoped memory for tpu_custom_call.1']
    #allocation12 [shape = 'u8[1024]{0}', space=vmem, size = 0x400, scoped, tag = 'input window, operand 5, single buffered']
    #allocation13 [shape = 'u8[65536]{0}', space=vmem, size = 0x10000, scoped, tag = 'input window, operand 6, single buffered']
    #allocation14 [shape = 's32[1]{0}', space=sflag, size = 0x4, scoped, tag = 'scoped memory for tpu_custom_call.1']
    #allocation15 [shape = 'u8[16384]{0}', space=vmem, size = 0x4000, scoped, tag = 'output window, operand 0']
    %13 = vsyncpa [#allocation5], 0
    %s14 = scalar_lea.sflag [#allocation5], 1
    %15 = vsyncpa %s14, 0
    %16 = vsyncpa [#allocation8], 0
    %17 = vsyncpa [#allocation11], 0
    %18 = vsyncpa [#allocation14], 0
    %19 = vsyncpa [#allocation6], 0
    %s20 = scalar_lea.sflag [#allocation6], 1
    %21 = vsyncpa %s20, 0
    loop: start=0, step=1, limit=10
    $region2: #{tpu_custom_call.1} parent=1 // loop_pre_header
      _
    $region3: #{tpu_custom_call.1} parent=1 // loop_header
      %s23 = sphi 0, %s27
      %p24 = scmp.ge.s32.totalorder %s23, 10
      %s30 = sphi 0, %s42
      %s31 = sphi 0, %s38
      %s32 = sphi 0, %s30
      %s33 = sphi 0, %s31
      %s34 = sphi 0, %s32
      %s35 = sphi 0, %s33
      %s45 = sphi 0, %s47
      %s48 = sphi 0, %s45
      %s49 = sphi 0, %s48
      %s65 = sphi 0, %s49
      %s69 = sphi 0, %s69
      %s71 = sphi 0, %s69
      %s72 = sphi 0, %s71
      %s86 = sphi 0, %s72
      %s90 = sphi 0, %s90
      %s92 = sphi 0, %s90
      %s93 = sphi 0, %s92
      %s107 = sphi 0, %s93
      %s111 = sphi 0, %s111
      %s113 = sphi 0, %s111
      %s114 = sphi 0, %s113
      %s128 = sphi 0, %s114
      %s132 = sphi 0, %s132
      %s134 = sphi 0, %s132
      %s135 = sphi 0, %s134
      %s149 = sphi 0, %s135
      %s153 = sphi 0, %s153
      %s155 = sphi 0, %s153
      %s156 = sphi 0, %s155
      %s170 = sphi 0, %s156
      %s174 = sphi 0, %s174
      %s176 = sphi 0, %s174
      %s177 = sphi 0, %s176
      %s191 = sphi 0, %s177
      %s195 = sphi 0, %s195
      %s197 = sphi 0, %s195
      %s198 = sphi 0, %s197
      %s212 = sphi 0, %s198
      %s220 = sphi 0, %s222
      %s223 = sphi 0, %s220
      %s224 = sphi 0, %s223
      %s240 = sphi 0, %s224
    $region4: #{tpu_custom_call.1} parent=1 // loop_header_branch
      %26 = sbr.rel (%p24) target = $region8
    $region5: #{tpu_custom_call.1} parent=1 // loop_body
      %s28 = ssub.s32 %s23, 1
      %s29 = ssub.s32 %s23, 2
      %s36 = sadd.s32 1, %s31
      %p37 = scmp.ge.s32.totalorder %s36, 4
      %s38 = scalar_select %p37, 0, %s36
      %s39 = sadd.s32 1, %s30
      %s40 = scalar_select %p37, %s39, %s30
      %p41 = scmp.ge.s32.totalorder %s40, 2
      %s42 = scalar_select %p41, 0, %s40
      %s43 = ssub.s32 %s30, %s42
      %p44 = scmp.eq.s32.totalorder %s43, 0
      %s46 = sadd.s32 %s45, 1
      %s47 = scalar_select %p44, %s45, %s46
      %p50 = pneg %p44
      %p51 = scmp.eq.s32.totalorder %s23, 7
      %p52 = por %p50, %p51
      %p53 = scmp.ne.s32.totalorder %s45, %s48
      %p54 = scmp.eq.s32.totalorder %s23, 0
      %p55 = por %p53, %p54
      %p56 = scmp.ne.s32.totalorder %s45, %s48
      %p57 = scmp.eq.s32.totalorder %s28, 7
      %p58 = por %p56, %p57
      %p59 = scmp.ne.s32.totalorder %s48, %s49
      %p60 = scmp.eq.s32.totalorder %s28, 0
      %p61 = por %p59, %p60
      %p62 = scmp.ne.s32.totalorder %s48, %s49
      %p63 = scmp.eq.s32.totalorder %s29, 7
      %p64 = por %p62, %p63
      %p66 = scmp.ne.s32.totalorder %s49, %s65
      %p67 = scmp.eq.s32.totalorder %s29, 0
      %p68 = por %p66, %p67
      %s70 = sadd.s32 %s69, 1
      %p73 = scmp.eq.s32.totalorder %s23, 7
      %p74 = scmp.ne.s32.totalorder %s69, %s71
      %p75 = scmp.eq.s32.totalorder %s23, 0
      %p76 = por %p74, %p75
      %p77 = scmp.ne.s32.totalorder %s69, %s71
      %p78 = scmp.eq.s32.totalorder %s28, 7
      %p79 = por %p77, %p78
      %p80 = scmp.ne.s32.totalorder %s71, %s72
      %p81 = scmp.eq.s32.totalorder %s28, 0
      %p82 = por %p80, %p81
      %p83 = scmp.ne.s32.totalorder %s71, %s72
      %p84 = scmp.eq.s32.totalorder %s29, 7
      %p85 = por %p83, %p84
      %p87 = scmp.ne.s32.totalorder %s72, %s86
      %p88 = scmp.eq.s32.totalorder %s29, 0
      %p89 = por %p87, %p88
      %s91 = sadd.s32 %s90, 1
      %p94 = scmp.eq.s32.totalorder %s23, 7
      %p95 = scmp.ne.s32.totalorder %s90, %s92
      %p96 = scmp.eq.s32.totalorder %s23, 0
      %p97 = por %p95, %p96
      %p98 = scmp.ne.s32.totalorder %s90, %s92
      %p99 = scmp.eq.s32.totalorder %s28, 7
      %p100 = por %p98, %p99
      %p101 = scmp.ne.s32.totalorder %s92, %s93
      %p102 = scmp.eq.s32.totalorder %s28, 0
      %p103 = por %p101, %p102
      %p104 = scmp.ne.s32.totalorder %s92, %s93
      %p105 = scmp.eq.s32.totalorder %s29, 7
      %p106 = por %p104, %p105
      %p108 = scmp.ne.s32.totalorder %s93, %s107
      %p109 = scmp.eq.s32.totalorder %s29, 0
      %p110 = por %p108, %p109
      %s112 = sadd.s32 %s111, 1
      %p115 = scmp.eq.s32.totalorder %s23, 7
      %p116 = scmp.ne.s32.totalorder %s111, %s113
      %p117 = scmp.eq.s32.totalorder %s23, 0
      %p118 = por %p116, %p117
      %p119 = scmp.ne.s32.totalorder %s111, %s113
      %p120 = scmp.eq.s32.totalorder %s28, 7
      %p121 = por %p119, %p120
      %p122 = scmp.ne.s32.totalorder %s113, %s114
      %p123 = scmp.eq.s32.totalorder %s28, 0
      %p124 = por %p122, %p123
      %p125 = scmp.ne.s32.totalorder %s113, %s114
      %p126 = scmp.eq.s32.totalorder %s29, 7
      %p127 = por %p125, %p126
      %p129 = scmp.ne.s32.totalorder %s114, %s128
      %p130 = scmp.eq.s32.totalorder %s29, 0
      %p131 = por %p129, %p130
      %s133 = sadd.s32 %s132, 1
      %p136 = scmp.eq.s32.totalorder %s23, 7
      %p137 = scmp.ne.s32.totalorder %s132, %s134
      %p138 = scmp.eq.s32.totalorder %s23, 0
      %p139 = por %p137, %p138
      %p140 = scmp.ne.s32.totalorder %s132, %s134
      %p141 = scmp.eq.s32.totalorder %s28, 7
      %p142 = por %p140, %p141
      %p143 = scmp.ne.s32.totalorder %s134, %s135
      %p144 = scmp.eq.s32.totalorder %s28, 0
      %p145 = por %p143, %p144
      %p146 = scmp.ne.s32.totalorder %s134, %s135
      %p147 = scmp.eq.s32.totalorder %s29, 7
      %p148 = por %p146, %p147
      %p150 = scmp.ne.s32.totalorder %s135, %s149
      %p151 = scmp.eq.s32.totalorder %s29, 0
      %p152 = por %p150, %p151
      %s154 = sadd.s32 %s153, 1
      %p157 = scmp.eq.s32.totalorder %s23, 7
      %p158 = scmp.ne.s32.totalorder %s153, %s155
      %p159 = scmp.eq.s32.totalorder %s23, 0
      %p160 = por %p158, %p159
      %p161 = scmp.ne.s32.totalorder %s153, %s155
      %p162 = scmp.eq.s32.totalorder %s28, 7
      %p163 = por %p161, %p162
      %p164 = scmp.ne.s32.totalorder %s155, %s156
      %p165 = scmp.eq.s32.totalorder %s28, 0
      %p166 = por %p164, %p165
      %p167 = scmp.ne.s32.totalorder %s155, %s156
      %p168 = scmp.eq.s32.totalorder %s29, 7
      %p169 = por %p167, %p168
      %p171 = scmp.ne.s32.totalorder %s156, %s170
      %p172 = scmp.eq.s32.totalorder %s29, 0
      %p173 = por %p171, %p172
      %s175 = sadd.s32 %s174, 1
      %p178 = scmp.eq.s32.totalorder %s23, 7
      %p179 = scmp.ne.s32.totalorder %s174, %s176
      %p180 = scmp.eq.s32.totalorder %s23, 0
      %p181 = por %p179, %p180
      %p182 = scmp.ne.s32.totalorder %s174, %s176
      %p183 = scmp.eq.s32.totalorder %s28, 7
      %p184 = por %p182, %p183
      %p185 = scmp.ne.s32.totalorder %s176, %s177
      %p186 = scmp.eq.s32.totalorder %s28, 0
      %p187 = por %p185, %p186
      %p188 = scmp.ne.s32.totalorder %s176, %s177
      %p189 = scmp.eq.s32.totalorder %s29, 7
      %p190 = por %p188, %p189
      %p192 = scmp.ne.s32.totalorder %s177, %s191
      %p193 = scmp.eq.s32.totalorder %s29, 0
      %p194 = por %p192, %p193
      %s196 = sadd.s32 %s195, 1
      %p199 = scmp.eq.s32.totalorder %s23, 7
      %p200 = scmp.ne.s32.totalorder %s195, %s197
      %p201 = scmp.eq.s32.totalorder %s23, 0
      %p202 = por %p200, %p201
      %p203 = scmp.ne.s32.totalorder %s195, %s197
      %p204 = scmp.eq.s32.totalorder %s28, 7
      %p205 = por %p203, %p204
      %p206 = scmp.ne.s32.totalorder %s197, %s198
      %p207 = scmp.eq.s32.totalorder %s28, 0
      %p208 = por %p206, %p207
      %p209 = scmp.ne.s32.totalorder %s197, %s198
      %p210 = scmp.eq.s32.totalorder %s29, 7
      %p211 = por %p209, %p210
      %p213 = scmp.ne.s32.totalorder %s198, %s212
      %p214 = scmp.eq.s32.totalorder %s29, 0
      %p215 = por %p213, %p214
      %s216 = ssub.s32 %s30, %s42
      %s217 = ssub.s32 %s31, %s38
      %s218 = sor.u32 %s216, %s217
      %p219 = scmp.eq.s32.totalorder %s218, 0
      %s221 = sadd.s32 %s220, 1
      %s222 = scalar_select %p219, %s220, %s221
      %p225 = pneg %p219
      %p226 = scmp.eq.s32.totalorder %s23, 7
      %p227 = por %p225, %p226
      %p228 = scmp.ne.s32.totalorder %s220, %s223
      %p229 = scmp.eq.s32.totalorder %s23, 0
      %p230 = por %p228, %p229
      %p231 = scmp.ne.s32.totalorder %s220, %s223
      %p232 = scmp.eq.s32.totalorder %s28, 7
      %p233 = por %p231, %p232
      %p234 = scmp.ne.s32.totalorder %s223, %s224
      %p235 = scmp.eq.s32.totalorder %s28, 0
      %p236 = por %p234, %p235
      %p237 = scmp.ne.s32.totalorder %s223, %s224
      %p238 = scmp.eq.s32.totalorder %s29, 7
      %p239 = por %p237, %p238
      %p241 = scmp.ne.s32.totalorder %s224, %s240
      %p242 = scmp.eq.s32.totalorder %s29, 0
      %p243 = por %p241, %p242
      %p244 = scmp.le.s32.totalorder 1, %s23
      %p245 = scmp.lt.s32.totalorder %s23, 9
      %p246 = pnand %p244, %p245
      %p247 = pneg %p246
      // Predicated region
      $region9: #{tpu_custom_call.1} parent=5 // pred_check
        _
      $region10: #{tpu_custom_call.1} parent=5 // pred_check_branch
        %249 = sbr.rel (%p246) target = $region12
      $region11: #{tpu_custom_call.1} parent=5 // pred_region
        %s250 = ssub.s32 %s23, 1
        // Predicated region
        $region13: #{tpu_custom_call.1} parent=11 // pred_check
          %p251 = pneg %p82
        $region14: #{tpu_custom_call.1} parent=11 // pred_check_branch
          %253 = sbr.rel (%p251) target = $region16
        $region15: #{tpu_custom_call.1} parent=11 // pred_region
          %s255 = ssub.s32 3072, 3072
          %256 = vsyncadd [#allocation8], %s255
          %s257 = sshll.u32 [#allocation7], 4
          %s258 = int_to_ptr.vmem [resolvable:$true] %s257
          %263 = dma.hbm_to_vmem [thread:$0]  %s1, 3072, %s258, [#allocation8], 192, 192, 12
        $region16: #{tpu_custom_call.1} parent=11 // pred_fallthru
          _
        // Predicated region
        $region17: #{tpu_custom_call.1} parent=11 // pred_check
          %p264 = pneg %p103
        $region18: #{tpu_custom_call.1} parent=11 // pred_check_branch
          %266 = sbr.rel (%p264) target = $region20
        $region19: #{tpu_custom_call.1} parent=11 // pred_region
          _
        $region20: #{tpu_custom_call.1} parent=11 // pred_fallthru
          _
        // Predicated region
        $region21: #{tpu_custom_call.1} parent=11 // pred_check
          %p267 = pneg %p124
        $region22: #{tpu_custom_call.1} parent=11 // pred_check_branch
          %269 = sbr.rel (%p267) target = $region24
        $region23: #{tpu_custom_call.1} parent=11 // pred_region
          %s271 = ssub.s32 1024, 1024
          %272 = vsyncadd [#allocation8], %s271
          %s273 = sshll.u32 [#allocation9], 4
          %s274 = int_to_ptr.vmem [resolvable:$true] %s273
          %279 = dma.hbm_to_vmem [thread:$0]  %s3, 1024, %s274, [#allocation8], 64, 64, 4
        $region24: #{tpu_custom_call.1} parent=11 // pred_fallthru
          _
        // Predicated region
        $region25: #{tpu_custom_call.1} parent=11 // pred_check
          %p280 = pneg %p145
        $region26: #{tpu_custom_call.1} parent=11 // pred_check_branch
          %282 = sbr.rel (%p280) target = $region28
        $region27: #{tpu_custom_call.1} parent=11 // pred_region
          %s284 = ssub.s32 2048, 2048
          %285 = vsyncadd [#allocation11], %s284
          %s286 = sshll.u32 [#allocation10], 4
          %s287 = int_to_ptr.vmem [resolvable:$true] %s286
          %292 = dma.hbm_to_vmem [thread:$0]  %s4, 2048, %s287, [#allocation11], 128, 128, 8
        $region28: #{tpu_custom_call.1} parent=11 // pred_fallthru
          _
        // Predicated region
        $region29: #{tpu_custom_call.1} parent=11 // pred_check
          %p293 = pneg %p166
        $region30: #{tpu_custom_call.1} parent=11 // pred_check_branch
          %295 = sbr.rel (%p293) target = $region32
        $region31: #{tpu_custom_call.1} parent=11 // pred_region
          %s297 = ssub.s32 32, 32
          %298 = vsyncadd [#allocation11], %s297
          %s300 = sshll.u32 [#allocation12], 4
          %s301 = int_to_ptr.vmem [resolvable:$true] %s300
          %303 = dma.hbm_to_vmem [thread:$0]  %s5, 32, %s301, [#allocation11]
        $region32: #{tpu_custom_call.1} parent=11 // pred_fallthru
          _
        // Predicated region
        $region33: #{tpu_custom_call.1} parent=11 // pred_check
          %p304 = pneg %p187
        $region34: #{tpu_custom_call.1} parent=11 // pred_check_branch
          %306 = sbr.rel (%p304) target = $region36
        $region35: #{tpu_custom_call.1} parent=11 // pred_region
          %s308 = ssub.s32 2048, 2048
          %309 = vsyncadd [#allocation14], %s308
          %s310 = sshll.u32 [#allocation13], 4
          %s311 = int_to_ptr.vmem [resolvable:$true] %s310
          %316 = dma.hbm_to_vmem [thread:$0]  %s6, 2048, %s311, [#allocation14], 64, 64, 4
        $region36: #{tpu_custom_call.1} parent=11 // pred_fallthru
          _
        // Predicated region
        $region37: #{tpu_custom_call.1} parent=11 // pred_check
          %p317 = pneg %p208
        $region38: #{tpu_custom_call.1} parent=11 // pred_check_branch
          %319 = sbr.rel (%p317) target = $region40
        $region39: #{tpu_custom_call.1} parent=11 // pred_region
          _
        $region40: #{tpu_custom_call.1} parent=11 // pred_fallthru
          _
      $region12: #{tpu_custom_call.1} parent=5 // pred_fallthru
        _
      %p320 = scmp.lt.s32.totalorder %s23, 8
      // Predicated region
      $region41: #{tpu_custom_call.1} parent=5 // pred_check
        %p321 = pneg %p320
      $region42: #{tpu_custom_call.1} parent=5 // pred_check_branch
        %323 = sbr.rel (%p321) target = $region44
      $region43: #{tpu_custom_call.1} parent=5 // pred_region
        // Predicated region
        $region45: #{tpu_custom_call.1} parent=43 // pred_check
          %p324 = pneg %p55
        $region46: #{tpu_custom_call.1} parent=43 // pred_check_branch
          %326 = sbr.rel (%p324) target = $region48
        $region47: #{tpu_custom_call.1} parent=43 // pred_region
          %s327 = sand.u32 %s45, 1
          %s328 = scalar_lea.sflag [#allocation5], %s327
          %s329 = sand.u32 %s45, 1
          %s330 = smul.addr %s329, 64
          %s331 = scalar_lea.vmem [#allocation4], %s330
          %s333 = ssub.s32 1024, 1024
          %334 = vsyncadd %s328, %s333
          %s335 = smul.addr %s30, 8
          %s336 = smul.addr %s335, 128
          %s337 = scalar_lea.hbm %s0, %s336
          %s338 = sshll.u32 %s331, 4
          %s339 = int_to_ptr.vmem [resolvable:$true] %s338
          %344 = dma.hbm_to_vmem [thread:$0]  %s337, 1024, %s339, %s328, 128, 128, 8
        $region48: #{tpu_custom_call.1} parent=43 // pred_fallthru
          _
      $region44: #{tpu_custom_call.1} parent=5 // pred_fallthru
        _
      %p345 = scmp.le.s32.totalorder 1, %s23
      %p346 = scmp.lt.s32.totalorder %s23, 9
      %p347 = pnand %p345, %p346
      %p348 = pneg %p347
      // Predicated region
      $region49: #{tpu_custom_call.1} parent=5 // pred_check
        _
      $region50: #{tpu_custom_call.1} parent=5 // pred_check_branch
        %350 = sbr.rel (%p347) target = $region52
      $region51: #{tpu_custom_call.1} parent=5 // pred_region
        %s351 = ssub.s32 %s23, 1
        %s352 = sand.u32 %s48, 1
        %s353 = scalar_lea.sflag [#allocation5], %s352
        %s354 = sand.u32 %s48, 1
        %s355 = smul.addr %s354, 64
        %s356 = scalar_lea.vmem [#allocation4], %s355
        // Predicated region
        $region53: #{tpu_custom_call.1} parent=51 // pred_check
          %p357 = pneg %p61
        $region54: #{tpu_custom_call.1} parent=51 // pred_check_branch
          %359 = sbr.rel (%p357) target = $region56
        $region55: #{tpu_custom_call.1} parent=51 // pred_region
          %360 = dma.done %s353, 1024
        $region56: #{tpu_custom_call.1} parent=51 // pred_fallthru
          _
        // Predicated region
        $region57: #{tpu_custom_call.1} parent=51 // pred_check
          %p361 = pneg %p82
        $region58: #{tpu_custom_call.1} parent=51 // pred_check_branch
          %363 = sbr.rel (%p361) target = $region60
        $region59: #{tpu_custom_call.1} parent=51 // pred_region
          %364 = dma.done [#allocation8], 3072
        $region60: #{tpu_custom_call.1} parent=51 // pred_fallthru
          _
        // Predicated region
        $region61: #{tpu_custom_call.1} parent=51 // pred_check
          %p365 = pneg %p124
        $region62: #{tpu_custom_call.1} parent=51 // pred_check_branch
          %367 = sbr.rel (%p365) target = $region64
        $region63: #{tpu_custom_call.1} parent=51 // pred_region
          %368 = dma.done [#allocation8], 1024
        $region64: #{tpu_custom_call.1} parent=51 // pred_fallthru
          _
        // Predicated region
        $region65: #{tpu_custom_call.1} parent=51 // pred_check
          %p369 = pneg %p145
        $region66: #{tpu_custom_call.1} parent=51 // pred_check_branch
          %371 = sbr.rel (%p369) target = $region68
        $region67: #{tpu_custom_call.1} parent=51 // pred_region
          %372 = dma.done [#allocation11], 2048
        $region68: #{tpu_custom_call.1} parent=51 // pred_fallthru
          _
        // Predicated region
        $region69: #{tpu_custom_call.1} parent=51 // pred_check
          %p373 = pneg %p166
        $region70: #{tpu_custom_call.1} parent=51 // pred_check_branch
          %375 = sbr.rel (%p373) target = $region72
        $region71: #{tpu_custom_call.1} parent=51 // pred_region
          %376 = dma.done [#allocation11], 32
        $region72: #{tpu_custom_call.1} parent=51 // pred_fallthru
          _
        // Predicated region
        $region73: #{tpu_custom_call.1} parent=51 // pred_check
          %p377 = pneg %p187
        $region74: #{tpu_custom_call.1} parent=51 // pred_check_branch
          %379 = sbr.rel (%p377) target = $region76
        $region75: #{tpu_custom_call.1} parent=51 // pred_region
          %380 = dma.done [#allocation14], 2048
        $region76: #{tpu_custom_call.1} parent=51 // pred_fallthru
          _
        %s381 = sand.u32 %s48, 1
        %s382 = scalar_lea.sflag [#allocation5], %s381
        %s383 = sand.u32 %s48, 1
        %s384 = smul.addr %s383, 64
        %s385 = scalar_lea.vmem [#allocation4], %s384
        %p386 = pneg %p61
        %p387 = pneg %p58
        %p388 = pneg %p82
        %p389 = pneg %p79
        %p390 = pneg %p103
        %p391 = pneg %p100
        %p392 = pneg %p124
        %p393 = pneg %p121
        %p394 = pneg %p145
        %p395 = pneg %p142
        %p396 = pneg %p166
        %p397 = pneg %p163
        %p398 = pneg %p187
        %p399 = pneg %p184
        %p400 = pneg %p208
        %p401 = pneg %p205
        %p402 = pneg %p236
        %p403 = pneg %p233
        %s404 = sand.u32 %s223, 1
        %s405 = scalar_lea.sflag [#allocation6], %s404
        %s406 = sand.u32 %s223, 1
        %s407 = smul.addr %s406, 16
        %s408 = scalar_lea.vmem [#allocation15], %s407
        %s409 = smul.u32 2, %s33
        %p411 = scmp.eq.s32.totalorder %s33, 0
        // Predicated region
        $region77: #{tpu_custom_call.1} parent=51 // pred_check
          %p412 = pneg %p411
        $region78: #{tpu_custom_call.1} parent=51 // pred_check_branch
          %414 = sbr.rel (%p412) target = $region80
        $region79: #{tpu_custom_call.1} parent=51 // pred_region
          %v415 = vld [vmem:[%s356] sm:$0xff]
          %v416 = vld [vmem:[%s356 + $0x8] sm:$0xff]
          %v417 = vld [vmem:[%s356 + $0x10] sm:$0xff]
          %v418 = vld [vmem:[%s356 + $0x18] sm:$0xff]
          %v419 = vld [vmem:[%s356 + $0x20] sm:$0xff]
          %v420 = vld [vmem:[%s356 + $0x28] sm:$0xff]
          %v421 = vld [vmem:[%s356 + $0x30] sm:$0xff]
          %v422 = vld [vmem:[%s356 + $0x38] sm:$0xff]
          %v423 = vpack.c.bf16 %v416, %v415
          %v424 = vpack.c.bf16 %v418, %v417
          %v425 = vpack.c.bf16 %v420, %v419
          %v426 = vpack.c.bf16 %v422, %v421
          %v427 = vld [vmem:[#allocation7 + $0x4] sm:$0xff]
          %v428 = vld [vmem:[#allocation7 + $0x10] sm:$0xff]
          %v429 = vld [vmem:[#allocation7 + $0x1c] sm:$0xff]
          %v430 = vld [vmem:[#allocation7 + $0x28] sm:$0xff]
          %v431 = vld [vmem:[#allocation7 + $0x34] sm:$0xff]
          %v432 = vld [vmem:[#allocation7 + $0x40] sm:$0xff]
          %v433 = vld [vmem:[#allocation7 + $0x4c] sm:$0xff]
          %v434 = vld [vmem:[#allocation7 + $0x58] sm:$0xff]
          %v435 = vld [vmem:[#allocation7 + $0x64] sm:$0xff]
          %v436 = vld [vmem:[#allocation7 + $0x70] sm:$0xff]
          %v437 = vld [vmem:[#allocation7 + $0x7c] sm:$0xff]
          %v438 = vld [vmem:[#allocation7 + $0x88] sm:$0xff]
          %v439 = vld [vmem:[#allocation7 + $0x94] sm:$0xff]
          %v440 = vld [vmem:[#allocation7 + $0xa0] sm:$0xff]
          %v441 = vld [vmem:[#allocation7 + $0xac] sm:$0xff]
          %v442 = vld [vmem:[#allocation7 + $0xb8] sm:$0xff]
          %v443 = vld [vmem:[%s2 + $0x1] sm:$0x3]
          %v445 = vlaneseq
          %v446 = vshrl.u32 %v445, 7
          %v447 = vsub.s32 0, %v446
          %v448 = vrot.slane %v443, %v447
          %v449 = vlaneseq
          %v450 = vshrl.u32 %v449, 7
          %v451 = vsub.s32 1, %v450
          %v452 = vrot.slane %v443, %v451
          %v471 = vunpack.c.l.b16 %v427
          %v472 = vunpack.c.h.b16 %v427
          %v473 = vunpack.c.l.b16 %v428
          %v474 = vunpack.c.h.b16 %v428
          %v475 = vunpack.c.l.b16 %v429
          %v476 = vunpack.c.h.b16 %v429
          %v477 = vunpack.c.l.b16 %v430
          %v478 = vunpack.c.h.b16 %v430
          %v479 = vunpack.c.l.b16 %v431
          %v480 = vunpack.c.h.b16 %v431
          %v481 = vunpack.c.l.b16 %v432
          %v482 = vunpack.c.h.b16 %v432
          %v483 = vunpack.c.l.b16 %v433
          %v484 = vunpack.c.h.b16 %v433
          %v485 = vunpack.c.l.b16 %v434
          %v486 = vunpack.c.h.b16 %v434
          %v487 = vunpack.c.l.b16 %v435
          %v488 = vunpack.c.h.b16 %v435
          %v489 = vunpack.c.l.b16 %v436
          %v490 = vunpack.c.h.b16 %v436
          %v491 = vunpack.c.l.b16 %v437
          %v492 = vunpack.c.h.b16 %v437
          %v493 = vunpack.c.l.b16 %v438
          %v494 = vunpack.c.h.b16 %v438
          %v495 = vunpack.c.l.b16 %v439
          %v496 = vunpack.c.h.b16 %v439
          %v497 = vunpack.c.l.b16 %v440
          %v498 = vunpack.c.h.b16 %v440
          %v499 = vunpack.c.l.b16 %v441
          %v500 = vunpack.c.h.b16 %v441
          %v501 = vunpack.c.l.b16 %v442
          %v502 = vunpack.c.h.b16 %v442
          %v503 = vpack.c.b16 %v473, %v471
          %v504 = vpack.c.b16 %v474, %v472
          %v505 = vpack.c.b16 %v477, %v475
          %v506 = vpack.c.b16 %v478, %v476
          %v507 = vpack.c.b16 %v481, %v479
          %v508 = vpack.c.b16 %v482, %v480
          %v509 = vpack.c.b16 %v485, %v483
          %v510 = vpack.c.b16 %v486, %v484
          %v511 = vpack.c.b16 %v489, %v487
          %v512 = vpack.c.b16 %v490, %v488
          %v513 = vpack.c.b16 %v493, %v491
          %v514 = vpack.c.b16 %v494, %v492
          %v515 = vpack.c.b16 %v497, %v495
          %v516 = vpack.c.b16 %v498, %v496
          %v517 = vpack.c.b16 %v501, %v499
          %v518 = vpack.c.b16 %v502, %v500
          %535 = vmatprep.subr.bf16.mxu0 %v518
          %536 = vmatpush1.bf16.msra.mxu0 %v517
          %537 = vmatprep.subr.bf16.mxu0 %v516
          %538 = vmatpush1.bf16.msra.mxu0 %v515
          %539 = vmatprep.subr.bf16.mxu0 %v514
          %540 = vmatpush1.bf16.msra.mxu0 %v513
          %541 = vmatprep.subr.bf16.mxu0 %v512
          %542 = vmatpush1.bf16.msra.mxu0 %v511
          %543 = vmatprep.subr.bf16.mxu0 %v510
          %544 = vmatpush1.bf16.msra.mxu0 %v509
          %545 = vmatprep.subr.bf16.mxu0 %v508
          %546 = vmatpush1.bf16.msra.mxu0 %v507
          %547 = vmatprep.subr.bf16.mxu0 %v506
          %548 = vmatpush1.bf16.msra.mxu0 %v505
          %549 = vmatprep.subr.bf16.mxu0 %v504
          %550 = vmatpush1.bf16.msra.mxu0 %v503
          %551 = vmatprep.subr.bf16.mxu0 0
          %552 = vmatpush2.bf16.msra.mxu0 0
          %553 = vmatprep.subr.bf16.mxu0 0
          %554 = vmatpush2.bf16.msra.mxu0 0
          %555 = vmatprep.subr.bf16.mxu0 0
          %556 = vmatpush2.bf16.msra.mxu0 0
          %557 = vmatprep.subr.bf16.mxu0 0
          %558 = vmatpush2.bf16.msra.mxu0 0
          %559 = vmatprep.subr.bf16.mxu0 0
          %560 = vmatpush2.bf16.msra.mxu0 0
          %561 = vmatprep.subr.bf16.mxu0 0
          %562 = vmatpush2.bf16.msra.mxu0 0
          %563 = vmatprep.subr.bf16.mxu0 0
          %564 = vmatpush2.bf16.msra.mxu0 0
          %565 = vmatprep.subr.bf16.mxu0 0
          %566 = vmatpush2.bf16.msra.mxu0 0
          %567 = vmatprep.mubr.bf16.mxu0 0
          %568 = vmatmul.mubr.bf16.gmra.mxu0 %v423
          %v569 = vpop.f32.mrf.mxu0
          %v570 = vadd.f32 %v448, %v569
          %v571 = vpop.f32.mrf.mxu0
          %v572 = vadd.f32 %v452, %v571
          %v573 = vpop.f32.mrf.mxu0
          %v574 = vadd.f32 %v448, %v573
          %v575 = vpop.f32.mrf.mxu0
          %v576 = vadd.f32 %v452, %v575
          %577 = vmatprep.mubr.bf16.mxu0 0
          %578 = vmatmul.mubr.bf16.gmra.mxu0 %v424
          %v579 = vpop.f32.mrf.mxu0
          %v580 = vadd.f32 %v448, %v579
          %v581 = vpop.f32.mrf.mxu0
          %v582 = vadd.f32 %v452, %v581
          %v583 = vpop.f32.mrf.mxu0
          %v584 = vadd.f32 %v448, %v583
          %v585 = vpop.f32.mrf.mxu0
          %v586 = vadd.f32 %v452, %v585
          %587 = vmatprep.mubr.bf16.mxu0 0
          %588 = vmatmul.mubr.bf16.gmra.mxu0 %v425
          %v589 = vpop.f32.mrf.mxu0
          %v590 = vadd.f32 %v448, %v589
          %v591 = vpop.f32.mrf.mxu0
          %v592 = vadd.f32 %v452, %v591
          %v593 = vpop.f32.mrf.mxu0
          %v594 = vadd.f32 %v448, %v593
          %v595 = vpop.f32.mrf.mxu0
          %v596 = vadd.f32 %v452, %v595
          %597 = vmatprep.mubr.bf16.mxu0 0
          %598 = vmatmul.mubr.bf16.gmra.mxu0 %v426
          %v599 = vpop.f32.mrf.mxu0
          %v600 = vadd.f32 %v448, %v599
          %v601 = vpop.f32.mrf.mxu0
          %v602 = vadd.f32 %v452, %v601
          %v603 = vpop.f32.mrf.mxu0
          %v604 = vadd.f32 %v448, %v603
          %v605 = vpop.f32.mrf.mxu0
          %v606 = vadd.f32 %v452, %v605
          %607 = vdwg.mxu0
          %v608 = vpack.c.bf16 %v574, %v570
          %v609 = vpack.c.bf16 %v584, %v580
          %v610 = vpack.c.bf16 %v594, %v590
          %v611 = vpack.c.bf16 %v604, %v600
          %v616 = vunpack.c.l.b16 %v608
          %v617 = vunpack.c.h.b16 %v608
          %v618 = vunpack.c.l.b16 %v609
          %v619 = vunpack.c.h.b16 %v609
          %v620 = vunpack.c.l.b16 %v610
          %v621 = vunpack.c.h.b16 %v610
          %v622 = vunpack.c.l.b16 %v611
          %v623 = vunpack.c.h.b16 %v611
          %v624 = vpack.c.b16 %v616, %v616
          %v625 = vpack.c.b16 %v617, %v617
          %v626 = vpack.c.b16 %v618, %v618
          %v627 = vpack.c.b16 %v619, %v619
          %v628 = vpack.c.b16 %v620, %v620
          %v629 = vpack.c.b16 %v621, %v621
          %v630 = vpack.c.b16 %v622, %v622
          %v631 = vpack.c.b16 %v623, %v623
          %vm640 = vcmask 257024
          %641 = vst.msk [vmem:[#allocation2] sm:$0xf] %vm640, %v624
          %642 = vst.msk [vmem:[#allocation2 + $0x4] sm:$0xf] %vm640, %v625
          %643 = vst.msk [vmem:[#allocation2 + $0x8] sm:$0xf] %vm640, %v626
          %644 = vst.msk [vmem:[#allocation2 + $0xc] sm:$0xf] %vm640, %v627
          %645 = vst.msk [vmem:[#allocation2 + $0x10] sm:$0xf] %vm640, %v628
          %646 = vst.msk [vmem:[#allocation2 + $0x14] sm:$0xf] %vm640, %v629
          %647 = vst.msk [vmem:[#allocation2 + $0x18] sm:$0xf] %vm640, %v630
          %648 = vst.msk [vmem:[#allocation2 + $0x1c] sm:$0xf] %vm640, %v631
          %v649 = vpack.c.bf16 %v576, %v572
          %v650 = vpack.c.bf16 %v586, %v582
          %v651 = vpack.c.bf16 %v596, %v592
          %v652 = vpack.c.bf16 %v606, %v602
          %v657 = vunpack.c.l.b16 %v649
          %v658 = vunpack.c.h.b16 %v649
          %v659 = vunpack.c.l.b16 %v650
          %v660 = vunpack.c.h.b16 %v650
          %v661 = vunpack.c.l.b16 %v651
          %v662 = vunpack.c.h.b16 %v651
          %v663 = vunpack.c.l.b16 %v652
          %v664 = vunpack.c.h.b16 %v652
          %v665 = vpack.c.b16 %v657, %v657
          %v666 = vpack.c.b16 %v658, %v658
          %v667 = vpack.c.b16 %v659, %v659
          %v668 = vpack.c.b16 %v660, %v660
          %v669 = vpack.c.b16 %v661, %v661
          %v670 = vpack.c.b16 %v662, %v662
          %v671 = vpack.c.b16 %v663, %v663
          %v672 = vpack.c.b16 %v664, %v664
          %681 = vst.msk [vmem:[#allocation3] sm:$0xf] %vm640, %v665
          %682 = vst.msk [vmem:[#allocation3 + $0x4] sm:$0xf] %vm640, %v666
          %683 = vst.msk [vmem:[#allocation3 + $0x8] sm:$0xf] %vm640, %v667
          %684 = vst.msk [vmem:[#allocation3 + $0xc] sm:$0xf] %vm640, %v668
          %685 = vst.msk [vmem:[#allocation3 + $0x10] sm:$0xf] %vm640, %v669
          %686 = vst.msk [vmem:[#allocation3 + $0x14] sm:$0xf] %vm640, %v670
          %687 = vst.msk [vmem:[#allocation3 + $0x18] sm:$0xf] %vm640, %v671
          %688 = vst.msk [vmem:[#allocation3 + $0x1c] sm:$0xf] %vm640, %v672
          %689 = vrot.lane.b32.xlu0 %v624, 96
          %v690 = vpop.permute.xlu0 %689
          %691 = vrot.lane.b32.xlu0 %v625, 96
          %v692 = vpop.permute.xlu0 %691
          %693 = vrot.lane.b32.xlu0 %v626, 96
          %v694 = vpop.permute.xlu0 %693
          %695 = vrot.lane.b32.xlu0 %v627, 96
          %v696 = vpop.permute.xlu0 %695
          %697 = vrot.lane.b32.xlu0 %v628, 96
          %v698 = vpop.permute.xlu0 %697
          %699 = vrot.lane.b32.xlu0 %v629, 96
          %v700 = vpop.permute.xlu0 %699
          %701 = vrot.lane.b32.xlu0 %v630, 96
          %v702 = vpop.permute.xlu0 %701
          %703 = vrot.lane.b32.xlu0 %v631, 96
          %v704 = vpop.permute.xlu0 %703
          %s713 = scalar_lea.vmem [#allocation2], 32
          %714 = vst.msk [vmem:[%s713] sm:$0xf] %vm640, %v690
          %715 = vst.msk [vmem:[%s713 + $0x4] sm:$0xf] %vm640, %v692
          %716 = vst.msk [vmem:[%s713 + $0x8] sm:$0xf] %vm640, %v694
          %717 = vst.msk [vmem:[%s713 + $0xc] sm:$0xf] %vm640, %v696
          %718 = vst.msk [vmem:[%s713 + $0x10] sm:$0xf] %vm640, %v698
          %719 = vst.msk [vmem:[%s713 + $0x14] sm:$0xf] %vm640, %v700
          %720 = vst.msk [vmem:[%s713 + $0x18] sm:$0xf] %vm640, %v702
          %721 = vst.msk [vmem:[%s713 + $0x1c] sm:$0xf] %vm640, %v704
          %722 = vrot.lane.b32.xlu0 %v665, 96
          %v723 = vpop.permute.xlu0 %722
          %724 = vrot.lane.b32.xlu0 %v666, 96
          %v725 = vpop.permute.xlu0 %724
          %726 = vrot.lane.b32.xlu0 %v667, 96
          %v727 = vpop.permute.xlu0 %726
          %728 = vrot.lane.b32.xlu0 %v668, 96
          %v729 = vpop.permute.xlu0 %728
          %730 = vrot.lane.b32.xlu0 %v669, 96
          %v731 = vpop.permute.xlu0 %730
          %732 = vrot.lane.b32.xlu0 %v670, 96
          %v733 = vpop.permute.xlu0 %732
          %734 = vrot.lane.b32.xlu0 %v671, 96
          %v735 = vpop.permute.xlu0 %734
          %736 = vrot.lane.b32.xlu0 %v672, 96
          %v737 = vpop.permute.xlu0 %736
          %s746 = scalar_lea.vmem [#allocation3], 32
          %747 = vst.msk [vmem:[%s746] sm:$0xf] %vm640, %v723
          %748 = vst.msk [vmem:[%s746 + $0x4] sm:$0xf] %vm640, %v725
          %749 = vst.msk [vmem:[%s746 + $0x8] sm:$0xf] %vm640, %v727
          %750 = vst.msk [vmem:[%s746 + $0xc] sm:$0xf] %vm640, %v729
          %751 = vst.msk [vmem:[%s746 + $0x10] sm:$0xf] %vm640, %v731
          %752 = vst.msk [vmem:[%s746 + $0x14] sm:$0xf] %vm640, %v733
          %753 = vst.msk [vmem:[%s746 + $0x18] sm:$0xf] %vm640, %v735
          %754 = vst.msk [vmem:[%s746 + $0x1c] sm:$0xf] %vm640, %v737
          %755 = vrot.lane.b32.xlu0 %v624, 64
          %v756 = vpop.permute.xlu0 %755
          %757 = vrot.lane.b32.xlu0 %v625, 64
          %v758 = vpop.permute.xlu0 %757
          %759 = vrot.lane.b32.xlu0 %v626, 64
          %v760 = vpop.permute.xlu0 %759
          %761 = vrot.lane.b32.xlu0 %v627, 64
          %v762 = vpop.permute.xlu0 %761
          %763 = vrot.lane.b32.xlu0 %v628, 64
          %v764 = vpop.permute.xlu0 %763
          %765 = vrot.lane.b32.xlu0 %v629, 64
          %v766 = vpop.permute.xlu0 %765
          %767 = vrot.lane.b32.xlu0 %v630, 64
          %v768 = vpop.permute.xlu0 %767
          %769 = vrot.lane.b32.xlu0 %v631, 64
          %v770 = vpop.permute.xlu0 %769
          %s779 = scalar_lea.vmem [#allocation2], 64
          %780 = vst.msk [vmem:[%s779] sm:$0xf] %vm640, %v756
          %781 = vst.msk [vmem:[%s779 + $0x4] sm:$0xf] %vm640, %v758
          %782 = vst.msk [vmem:[%s779 + $0x8] sm:$0xf] %vm640, %v760
          %783 = vst.msk [vmem:[%s779 + $0xc] sm:$0xf] %vm640, %v762
          %784 = vst.msk [vmem:[%s779 + $0x10] sm:$0xf] %vm640, %v764
          %785 = vst.msk [vmem:[%s779 + $0x14] sm:$0xf] %vm640, %v766
          %786 = vst.msk [vmem:[%s779 + $0x18] sm:$0xf] %vm640, %v768
          %787 = vst.msk [vmem:[%s779 + $0x1c] sm:$0xf] %vm640, %v770
          %788 = vrot.lane.b32.xlu0 %v665, 64
          %v789 = vpop.permute.xlu0 %788
          %790 = vrot.lane.b32.xlu0 %v666, 64
          %v791 = vpop.permute.xlu0 %790
          %792 = vrot.lane.b32.xlu0 %v667, 64
          %v793 = vpop.permute.xlu0 %792
          %794 = vrot.lane.b32.xlu0 %v668, 64
          %v795 = vpop.permute.xlu0 %794
          %796 = vrot.lane.b32.xlu0 %v669, 64
          %v797 = vpop.permute.xlu0 %796
          %798 = vrot.lane.b32.xlu0 %v670, 64
          %v799 = vpop.permute.xlu0 %798
          %800 = vrot.lane.b32.xlu0 %v671, 64
          %v801 = vpop.permute.xlu0 %800
          %802 = vrot.lane.b32.xlu0 %v672, 64
          %v803 = vpop.permute.xlu0 %802
          %s812 = scalar_lea.vmem [#allocation3], 64
          %813 = vst.msk [vmem:[%s812] sm:$0xf] %vm640, %v789
          %814 = vst.msk [vmem:[%s812 + $0x4] sm:$0xf] %vm640, %v791
          %815 = vst.msk [vmem:[%s812 + $0x8] sm:$0xf] %vm640, %v793
          %816 = vst.msk [vmem:[%s812 + $0xc] sm:$0xf] %vm640, %v795
          %817 = vst.msk [vmem:[%s812 + $0x10] sm:$0xf] %vm640, %v797
          %818 = vst.msk [vmem:[%s812 + $0x14] sm:$0xf] %vm640, %v799
          %819 = vst.msk [vmem:[%s812 + $0x18] sm:$0xf] %vm640, %v801
          %820 = vst.msk [vmem:[%s812 + $0x1c] sm:$0xf] %vm640, %v803
          %821 = vrot.lane.b32.xlu0 %v624, 32
          %v822 = vpop.permute.xlu0 %821
          %823 = vrot.lane.b32.xlu0 %v625, 32
          %v824 = vpop.permute.xlu0 %823
          %825 = vrot.lane.b32.xlu0 %v626, 32
          %v826 = vpop.permute.xlu0 %825
          %827 = vrot.lane.b32.xlu0 %v627, 32
          %v828 = vpop.permute.xlu0 %827
          %829 = vrot.lane.b32.xlu0 %v628, 32
          %v830 = vpop.permute.xlu0 %829
          %831 = vrot.lane.b32.xlu0 %v629, 32
          %v832 = vpop.permute.xlu0 %831
          %833 = vrot.lane.b32.xlu0 %v630, 32
          %v834 = vpop.permute.xlu0 %833
          %835 = vrot.lane.b32.xlu0 %v631, 32
          %v836 = vpop.permute.xlu0 %835
          %s845 = scalar_lea.vmem [#allocation2], 96
          %846 = vst.msk [vmem:[%s845] sm:$0xf] %vm640, %v822
          %847 = vst.msk [vmem:[%s845 + $0x4] sm:$0xf] %vm640, %v824
          %848 = vst.msk [vmem:[%s845 + $0x8] sm:$0xf] %vm640, %v826
          %849 = vst.msk [vmem:[%s845 + $0xc] sm:$0xf] %vm640, %v828
          %850 = vst.msk [vmem:[%s845 + $0x10] sm:$0xf] %vm640, %v830
          %851 = vst.msk [vmem:[%s845 + $0x14] sm:$0xf] %vm640, %v832
          %852 = vst.msk [vmem:[%s845 + $0x18] sm:$0xf] %vm640, %v834
          %853 = vst.msk [vmem:[%s845 + $0x1c] sm:$0xf] %vm640, %v836
          %854 = vrot.lane.b32.xlu0 %v665, 32
          %v855 = vpop.permute.xlu0 %854
          %856 = vrot.lane.b32.xlu0 %v666, 32
          %v857 = vpop.permute.xlu0 %856
          %858 = vrot.lane.b32.xlu0 %v667, 32
          %v859 = vpop.permute.xlu0 %858
          %860 = vrot.lane.b32.xlu0 %v668, 32
          %v861 = vpop.permute.xlu0 %860
          %862 = vrot.lane.b32.xlu0 %v669, 32
          %v863 = vpop.permute.xlu0 %862
          %864 = vrot.lane.b32.xlu0 %v670, 32
          %v865 = vpop.permute.xlu0 %864
          %866 = vrot.lane.b32.xlu0 %v671, 32
          %v867 = vpop.permute.xlu0 %866
          %868 = vrot.lane.b32.xlu0 %v672, 32
          %v869 = vpop.permute.xlu0 %868
          %s878 = scalar_lea.vmem [#allocation3], 96
          %879 = vst.msk [vmem:[%s878] sm:$0xf] %vm640, %v855
          %880 = vst.msk [vmem:[%s878 + $0x4] sm:$0xf] %vm640, %v857
          %881 = vst.msk [vmem:[%s878 + $0x8] sm:$0xf] %vm640, %v859
          %882 = vst.msk [vmem:[%s878 + $0xc] sm:$0xf] %vm640, %v861
          %883 = vst.msk [vmem:[%s878 + $0x10] sm:$0xf] %vm640, %v863
          %884 = vst.msk [vmem:[%s878 + $0x14] sm:$0xf] %vm640, %v865
          %885 = vst.msk [vmem:[%s878 + $0x18] sm:$0xf] %vm640, %v867
          %886 = vst.msk [vmem:[%s878 + $0x1c] sm:$0xf] %vm640, %v869
        $region80: #{tpu_custom_call.1} parent=51 // pred_fallthru
          _
        %s887 = smul.u32 %s33, 16
        %s888 = scalar_lea.vmem %s356, %s887 [#allocation4]
        %v889 = vld [vmem:[%s888] sm:$0xff]
        %v890 = vld [vmem:[%s888 + $0x8] sm:$0xff]
        %v891 = vpack.c.bf16 %v890, %v889
        %v892 = vld [vmem:[#allocation7] sm:$0xf]
        %v893 = vld [vmem:[#allocation7 + $0xc] sm:$0xf]
        %v894 = vld [vmem:[#allocation7 + $0x18] sm:$0xf]
        %v895 = vld [vmem:[#allocation7 + $0x24] sm:$0xf]
        %v896 = vld [vmem:[#allocation7 + $0x30] sm:$0xf]
        %v897 = vld [vmem:[#allocation7 + $0x3c] sm:$0xf]
        %v898 = vld [vmem:[#allocation7 + $0x48] sm:$0xf]
        %v899 = vld [vmem:[#allocation7 + $0x54] sm:$0xf]
        %v900 = vld [vmem:[#allocation7 + $0x60] sm:$0xf]
        %v901 = vld [vmem:[#allocation7 + $0x6c] sm:$0xf]
        %v902 = vld [vmem:[#allocation7 + $0x78] sm:$0xf]
        %v903 = vld [vmem:[#allocation7 + $0x84] sm:$0xf]
        %v904 = vld [vmem:[#allocation7 + $0x90] sm:$0xf]
        %v905 = vld [vmem:[#allocation7 + $0x9c] sm:$0xf]
        %v906 = vld [vmem:[#allocation7 + $0xa8] sm:$0xf]
        %v907 = vld [vmem:[#allocation7 + $0xb4] sm:$0xf]
        %v908 = vld [vmem:[%s2] sm:$0x1]
        %v910 = vlaneseq
        %v911 = vshrl.u32 %v910, 7
        %v912 = vsub.s32 0, %v911
        %v913 = vrot.slane %v908, %v912
        %v931 = vunpack.c.l.b16 %v892
        %v932 = vunpack.c.l.b16 %v893
        %v933 = vunpack.c.l.b16 %v894
        %v934 = vunpack.c.l.b16 %v895
        %v935 = vunpack.c.l.b16 %v896
        %v936 = vunpack.c.l.b16 %v897
        %v937 = vunpack.c.l.b16 %v898
        %v938 = vunpack.c.l.b16 %v899
        %v939 = vunpack.c.l.b16 %v900
        %v940 = vunpack.c.l.b16 %v901
        %v941 = vunpack.c.l.b16 %v902
        %v942 = vunpack.c.l.b16 %v903
        %v943 = vunpack.c.l.b16 %v904
        %v944 = vunpack.c.l.b16 %v905
        %v945 = vunpack.c.l.b16 %v906
        %v946 = vunpack.c.l.b16 %v907
        %v947 = vpack.c.b16 %v932, %v931
        %v948 = vpack.c.b16 %v934, %v933
        %v949 = vpack.c.b16 %v936, %v935
        %v950 = vpack.c.b16 %v938, %v937
        %v951 = vpack.c.b16 %v940, %v939
        %v952 = vpack.c.b16 %v942, %v941
        %v953 = vpack.c.b16 %v944, %v943
        %v954 = vpack.c.b16 %v946, %v945
        %963 = vmatprep.subr.bf16.mxu0 0
        %964 = vmatpush1.bf16.msra.mxu0 %v954
        %965 = vmatprep.subr.bf16.mxu0 0
        %966 = vmatpush1.bf16.msra.mxu0 %v953
        %967 = vmatprep.subr.bf16.mxu0 0
        %968 = vmatpush1.bf16.msra.mxu0 %v952
        %969 = vmatprep.subr.bf16.mxu0 0
        %970 = vmatpush1.bf16.msra.mxu0 %v951
        %971 = vmatprep.subr.bf16.mxu0 0
        %972 = vmatpush1.bf16.msra.mxu0 %v950
        %973 = vmatprep.subr.bf16.mxu0 0
        %974 = vmatpush1.bf16.msra.mxu0 %v949
        %975 = vmatprep.subr.bf16.mxu0 0
        %976 = vmatpush1.bf16.msra.mxu0 %v948
        %977 = vmatprep.subr.bf16.mxu0 0
        %978 = vmatpush1.bf16.msra.mxu0 %v947
        %979 = vmatprep.subr.bf16.mxu0 0
        %980 = vmatpush2.bf16.msra.mxu0 0
        %981 = vmatprep.subr.bf16.mxu0 0
        %982 = vmatpush2.bf16.msra.mxu0 0
        %983 = vmatprep.subr.bf16.mxu0 0
        %984 = vmatpush2.bf16.msra.mxu0 0
        %985 = vmatprep.subr.bf16.mxu0 0
        %986 = vmatpush2.bf16.msra.mxu0 0
        %987 = vmatprep.subr.bf16.mxu0 0
        %988 = vmatpush2.bf16.msra.mxu0 0
        %989 = vmatprep.subr.bf16.mxu0 0
        %990 = vmatpush2.bf16.msra.mxu0 0
        %991 = vmatprep.subr.bf16.mxu0 0
        %992 = vmatpush2.bf16.msra.mxu0 0
        %993 = vmatprep.subr.bf16.mxu0 0
        %994 = vmatpush2.bf16.msra.mxu0 0
        %995 = vmatprep.mubr.bf16.mxu0 0
        %996 = vmatmul.mubr.bf16.gmra.mxu0 %v891
        %v997 = vpop.f32.mrf.mxu0
        %v998 = vadd.f32 %v913, %v997
        %v999 = vpop.f32.mrf.mxu0
        %v1000 = vpop.f32.mrf.mxu0
        %v1001 = vadd.f32 %v913, %v1000
        %v1002 = vpop.f32.mrf.mxu0
        %1003 = vdwg.mxu0
        %v1004 = vmul.f32 %v998, 0.17677669
        %v1005 = vmul.f32 %v1001, 0.17677669
        %1008 = vrot.lane.b32.xlu0 %v1004, 96
        %v1009 = vpop.permute.xlu0 %1008
        %1010 = vrot.lane.b32.xlu0 %v1005, 96
        %v1011 = vpop.permute.xlu0 %1010
        %1014 = vrot.lane.b32.xlu0 %v1004, 64
        %v1015 = vpop.permute.xlu0 %1014
        %1016 = vrot.lane.b32.xlu0 %v1005, 64
        %v1017 = vpop.permute.xlu0 %1016
        %1020 = vrot.lane.b32.xlu0 %v1004, 32
        %v1021 = vpop.permute.xlu0 %1020
        %1022 = vrot.lane.b32.xlu0 %v1005, 32
        %v1023 = vpop.permute.xlu0 %1022
        %v1026 = vpack.c.bf16 %v1005, %v1004
        %v1027 = vpack.c.bf16 %v1011, %v1009
        %v1028 = vpack.c.bf16 %v1017, %v1015
        %v1029 = vpack.c.bf16 %v1023, %v1021
        %v1030 = vld [vmem:[#allocation2] sm:$0xf]
        %v1031 = vld [vmem:[#allocation2 + $0x4] sm:$0xf]
        %v1032 = vld [vmem:[#allocation2 + $0x8] sm:$0xf]
        %v1033 = vld [vmem:[#allocation2 + $0xc] sm:$0xf]
        %v1034 = vld [vmem:[#allocation2 + $0x10] sm:$0xf]
        %v1035 = vld [vmem:[#allocation2 + $0x14] sm:$0xf]
        %v1036 = vld [vmem:[#allocation2 + $0x18] sm:$0xf]
        %v1037 = vld [vmem:[#allocation2 + $0x1c] sm:$0xf]
        %v1038 = vld [vmem:[#allocation2 + $0x20] sm:$0xf]
        %v1039 = vld [vmem:[#allocation2 + $0x24] sm:$0xf]
        %v1040 = vld [vmem:[#allocation2 + $0x28] sm:$0xf]
        %v1041 = vld [vmem:[#allocation2 + $0x2c] sm:$0xf]
        %v1042 = vld [vmem:[#allocation2 + $0x30] sm:$0xf]
        %v1043 = vld [vmem:[#allocation2 + $0x34] sm:$0xf]
        %v1044 = vld [vmem:[#allocation2 + $0x38] sm:$0xf]
        %v1045 = vld [vmem:[#allocation2 + $0x3c] sm:$0xf]
        %v1046 = vld [vmem:[#allocation2 + $0x40] sm:$0xf]
        %v1047 = vld [vmem:[#allocation2 + $0x44] sm:$0xf]
        %v1048 = vld [vmem:[#allocation2 + $0x48] sm:$0xf]
        %v1049 = vld [vmem:[#allocation2 + $0x4c] sm:$0xf]
        %v1050 = vld [vmem:[#allocation2 + $0x50] sm:$0xf]
        %v1051 = vld [vmem:[#allocation2 + $0x54] sm:$0xf]
        %v1052 = vld [vmem:[#allocation2 + $0x58] sm:$0xf]
        %v1053 = vld [vmem:[#allocation2 + $0x5c] sm:$0xf]
        %v1054 = vld [vmem:[#allocation2 + $0x60] sm:$0xf]
        %v1055 = vld [vmem:[#allocation2 + $0x64] sm:$0xf]
        %v1056 = vld [vmem:[#allocation2 + $0x68] sm:$0xf]
        %v1057 = vld [vmem:[#allocation2 + $0x6c] sm:$0xf]
        %v1058 = vld [vmem:[#allocation2 + $0x70] sm:$0xf]
        %v1059 = vld [vmem:[#allocation2 + $0x74] sm:$0xf]
        %v1060 = vld [vmem:[#allocation2 + $0x78] sm:$0xf]
        %v1061 = vld [vmem:[#allocation2 + $0x7c] sm:$0xf]
        %v1070 = vunpack.c.l.b16 %v1030
        %v1071 = vunpack.c.l.b16 %v1031
        %v1072 = vunpack.c.l.b16 %v1032
        %v1073 = vunpack.c.l.b16 %v1033
        %v1074 = vunpack.c.l.b16 %v1034
        %v1075 = vunpack.c.l.b16 %v1035
        %v1076 = vunpack.c.l.b16 %v1036
        %v1077 = vunpack.c.l.b16 %v1037
        %v1078 = vpack.c.b16 %v1071, %v1070
        %v1079 = vpack.c.b16 %v1073, %v1072
        %v1080 = vpack.c.b16 %v1075, %v1074
        %v1081 = vpack.c.b16 %v1077, %v1076
        %vm1082 = vcmask 261120
        %v1084 = vsel %vm1082, %v1026, 0
        %v1087 = vsel %vm1082, %v1078, 0
        %v1090 = vsel %vm1082, %v1079, 0
        %v1093 = vsel %vm1082, %v1080, 0
        %v1096 = vsel %vm1082, %v1081, 0
        %1098 = vmatprep.subr.bf16.mxu0 0
        %1099 = vmatpush1.bf16.xpose.msra.mxu0 0
        %1100 = vmatprep.subr.bf16.mxu0 0
        %1101 = vmatpush1.bf16.xpose.msra.mxu0 0
        %1102 = vmatprep.subr.bf16.mxu0 0
        %1103 = vmatpush1.bf16.xpose.msra.mxu0 0
        %1104 = vmatprep.subr.bf16.mxu0 0
        %1105 = vmatpush1.bf16.xpose.msra.mxu0 0
        %1106 = vmatprep.subr.bf16.mxu0 0
        %1107 = vmatpush1.bf16.xpose.msra.mxu0 %v1096
        %1108 = vmatprep.subr.bf16.mxu0 0
        %1109 = vmatpush1.bf16.xpose.msra.mxu0 %v1093
        %1110 = vmatprep.subr.bf16.mxu0 0
        %1111 = vmatpush1.bf16.xpose.msra.mxu0 %v1090
        %1112 = vmatprep.subr.bf16.mxu0 0
        %1113 = vmatpush1.bf16.xpose.msra.mxu0 %v1087
        %1114 = vmatprep.subr.bf16.mxu0 0
        %1115 = vmatpush2.bf16.xpose.msra.mxu0 0
        %1116 = vmatprep.subr.bf16.mxu0 0
        %1117 = vmatpush2.bf16.xpose.msra.mxu0 0
        %1118 = vmatprep.subr.bf16.mxu0 0
        %1119 = vmatpush2.bf16.xpose.msra.mxu0 0
        %1120 = vmatprep.subr.bf16.mxu0 0
        %1121 = vmatpush2.bf16.xpose.msra.mxu0 0
        %1122 = vmatprep.subr.bf16.mxu0 0
        %1123 = vmatpush2.bf16.xpose.msra.mxu0 0
        %1124 = vmatprep.subr.bf16.mxu0 0
        %1125 = vmatpush2.bf16.xpose.msra.mxu0 0
        %1126 = vmatprep.subr.bf16.mxu0 0
        %1127 = vmatpush2.bf16.xpose.msra.mxu0 0
        %1128 = vmatprep.subr.bf16.mxu0 0
        %1129 = vmatpush2.bf16.xpose.msra.mxu0 0
        %1130 = vmatprep.mubr.bf16.mxu0 0
        %1131 = vmatmul.mubr.bf16.gmra.mxu0 %v1084
        %v1132 = vpop.f32.mrf.mxu0
        %v1133 = vadd.f32 0.0, %v1132
        %v1134 = vpop.f32.mrf.mxu0
        %v1135 = vpop.f32.mrf.mxu0
        %v1136 = vadd.f32 0.0, %v1135
        %v1137 = vpop.f32.mrf.mxu0
        %1138 = vdwg.mxu0
        %v1147 = vunpack.c.l.b16 %v1038
        %v1148 = vunpack.c.l.b16 %v1039
        %v1149 = vunpack.c.l.b16 %v1040
        %v1150 = vunpack.c.l.b16 %v1041
        %v1151 = vunpack.c.l.b16 %v1042
        %v1152 = vunpack.c.l.b16 %v1043
        %v1153 = vunpack.c.l.b16 %v1044
        %v1154 = vunpack.c.l.b16 %v1045
        %v1155 = vpack.c.b16 %v1148, %v1147
        %v1156 = vpack.c.b16 %v1150, %v1149
        %v1157 = vpack.c.b16 %v1152, %v1151
        %v1158 = vpack.c.b16 %v1154, %v1153
        %v1160 = vsel %vm1082, %v1027, 0
        %v1163 = vsel %vm1082, %v1155, 0
        %v1166 = vsel %vm1082, %v1156, 0
        %v1169 = vsel %vm1082, %v1157, 0
        %v1172 = vsel %vm1082, %v1158, 0
        %1174 = vmatprep.subr.bf16.mxu0 0
        %1175 = vmatpush1.bf16.xpose.msra.mxu0 0
        %1176 = vmatprep.subr.bf16.mxu0 0
        %1177 = vmatpush1.bf16.xpose.msra.mxu0 0
        %1178 = vmatprep.subr.bf16.mxu0 0
        %1179 = vmatpush1.bf16.xpose.msra.mxu0 0
        %1180 = vmatprep.subr.bf16.mxu0 0
        %1181 = vmatpush1.bf16.xpose.msra.mxu0 0
        %1182 = vmatprep.subr.bf16.mxu0 0
        %1183 = vmatpush1.bf16.xpose.msra.mxu0 %v1172
        %1184 = vmatprep.subr.bf16.mxu0 0
        %1185 = vmatpush1.bf16.xpose.msra.mxu0 %v1169
        %1186 = vmatprep.subr.bf16.mxu0 0
        %1187 = vmatpush1.bf16.xpose.msra.mxu0 %v1166
        %1188 = vmatprep.subr.bf16.mxu0 0
        %1189 = vmatpush1.bf16.xpose.msra.mxu0 %v1163
        %1190 = vmatprep.subr.bf16.mxu0 0
        %1191 = vmatpush2.bf16.xpose.msra.mxu0 0
        %1192 = vmatprep.subr.bf16.mxu0 0
        %1193 = vmatpush2.bf16.xpose.msra.mxu0 0
        %1194 = vmatprep.subr.bf16.mxu0 0
        %1195 = vmatpush2.bf16.xpose.msra.mxu0 0
        %1196 = vmatprep.subr.bf16.mxu0 0
        %1197 = vmatpush2.bf16.xpose.msra.mxu0 0
        %1198 = vmatprep.subr.bf16.mxu0 0
        %1199 = vmatpush2.bf16.xpose.msra.mxu0 0
        %1200 = vmatprep.subr.bf16.mxu0 0
        %1201 = vmatpush2.bf16.xpose.msra.mxu0 0
        %1202 = vmatprep.subr.bf16.mxu0 0
        %1203 = vmatpush2.bf16.xpose.msra.mxu0 0
        %1204 = vmatprep.subr.bf16.mxu0 0
        %1205 = vmatpush2.bf16.xpose.msra.mxu0 0
        %1206 = vmatprep.mubr.bf16.mxu0 0
        %1207 = vmatmul.mubr.bf16.gmra.mxu0 %v1160
        %v1208 = vpop.f32.mrf.mxu0
        %v1209 = vadd.f32 0.0, %v1208
        %v1210 = vpop.f32.mrf.mxu0
        %v1211 = vpop.f32.mrf.mxu0
        %v1212 = vadd.f32 0.0, %v1211
        %v1213 = vpop.f32.mrf.mxu0
        %1214 = vdwg.mxu0
        %v1223 = vunpack.c.l.b16 %v1046
        %v1224 = vunpack.c.l.b16 %v1047
        %v1225 = vunpack.c.l.b16 %v1048
        %v1226 = vunpack.c.l.b16 %v1049
        %v1227 = vunpack.c.l.b16 %v1050
        %v1228 = vunpack.c.l.b16 %v1051
        %v1229 = vunpack.c.l.b16 %v1052
        %v1230 = vunpack.c.l.b16 %v1053
        %v1231 = vpack.c.b16 %v1224, %v1223
        %v1232 = vpack.c.b16 %v1226, %v1225
        %v1233 = vpack.c.b16 %v1228, %v1227
        %v1234 = vpack.c.b16 %v1230, %v1229
        %v1236 = vsel %vm1082, %v1028, 0
        %v1239 = vsel %vm1082, %v1231, 0
        %v1242 = vsel %vm1082, %v1232, 0
        %v1245 = vsel %vm1082, %v1233, 0
        %v1248 = vsel %vm1082, %v1234, 0
        %1250 = vmatprep.subr.bf16.mxu0 0
        %1251 = vmatpush1.bf16.xpose.msra.mxu0 0
        %1252 = vmatprep.subr.bf16.mxu0 0
        %1253 = vmatpush1.bf16.xpose.msra.mxu0 0
        %1254 = vmatprep.subr.bf16.mxu0 0
        %1255 = vmatpush1.bf16.xpose.msra.mxu0 0
        %1256 = vmatprep.subr.bf16.mxu0 0
        %1257 = vmatpush1.bf16.xpose.msra.mxu0 0
        %1258 = vmatprep.subr.bf16.mxu0 0
        %1259 = vmatpush1.bf16.xpose.msra.mxu0 %v1248
        %1260 = vmatprep.subr.bf16.mxu0 0
        %1261 = vmatpush1.bf16.xpose.msra.mxu0 %v1245
        %1262 = vmatprep.subr.bf16.mxu0 0
        %1263 = vmatpush1.bf16.xpose.msra.mxu0 %v1242
        %1264 = vmatprep.subr.bf16.mxu0 0
        %1265 = vmatpush1.bf16.xpose.msra.mxu0 %v1239
        %1266 = vmatprep.subr.bf16.mxu0 0
        %1267 = vmatpush2.bf16.xpose.msra.mxu0 0
        %1268 = vmatprep.subr.bf16.mxu0 0
        %1269 = vmatpush2.bf16.xpose.msra.mxu0 0
        %1270 = vmatprep.subr.bf16.mxu0 0
        %1271 = vmatpush2.bf16.xpose.msra.mxu0 0
        %1272 = vmatprep.subr.bf16.mxu0 0
        %1273 = vmatpush2.bf16.xpose.msra.mxu0 0
        %1274 = vmatprep.subr.bf16.mxu0 0
        %1275 = vmatpush2.bf16.xpose.msra.mxu0 0
        %1276 = vmatprep.subr.bf16.mxu0 0
        %1277 = vmatpush2.bf16.xpose.msra.mxu0 0
        %1278 = vmatprep.subr.bf16.mxu0 0
        %1279 = vmatpush2.bf16.xpose.msra.mxu0 0
        %1280 = vmatprep.subr.bf16.mxu0 0
        %1281 = vmatpush2.bf16.xpose.msra.mxu0 0
        %1282 = vmatprep.mubr.bf16.mxu0 0
        %1283 = vmatmul.mubr.bf16.gmra.mxu0 %v1236
        %v1284 = vpop.f32.mrf.mxu0
        %v1285 = vadd.f32 0.0, %v1284
        %v1286 = vpop.f32.mrf.mxu0
        %v1287 = vpop.f32.mrf.mxu0
        %v1288 = vadd.f32 0.0, %v1287
        %v1289 = vpop.f32.mrf.mxu0
        %1290 = vdwg.mxu0
        %v1299 = vunpack.c.l.b16 %v1054
        %v1300 = vunpack.c.l.b16 %v1055
        %v1301 = vunpack.c.l.b16 %v1056
        %v1302 = vunpack.c.l.b16 %v1057
        %v1303 = vunpack.c.l.b16 %v1058
        %v1304 = vunpack.c.l.b16 %v1059
        %v1305 = vunpack.c.l.b16 %v1060
        %v1306 = vunpack.c.l.b16 %v1061
        %v1307 = vpack.c.b16 %v1300, %v1299
        %v1308 = vpack.c.b16 %v1302, %v1301
        %v1309 = vpack.c.b16 %v1304, %v1303
        %v1310 = vpack.c.b16 %v1306, %v1305
        %v1312 = vsel %vm1082, %v1029, 0
        %v1315 = vsel %vm1082, %v1307, 0
        %v1318 = vsel %vm1082, %v1308, 0
        %v1321 = vsel %vm1082, %v1309, 0
        %v1324 = vsel %vm1082, %v1310, 0
        %1326 = vmatprep.subr.bf16.mxu0 0
        %1327 = vmatpush1.bf16.xpose.msra.mxu0 0
        %1328 = vmatprep.subr.bf16.mxu0 0
        %1329 = vmatpush1.bf16.xpose.msra.mxu0 0
        %1330 = vmatprep.subr.bf16.mxu0 0
        %1331 = vmatpush1.bf16.xpose.msra.mxu0 0
        %1332 = vmatprep.subr.bf16.mxu0 0
        %1333 = vmatpush1.bf16.xpose.msra.mxu0 0
        %1334 = vmatprep.subr.bf16.mxu0 0
        %1335 = vmatpush1.bf16.xpose.msra.mxu0 %v1324
        %1336 = vmatprep.subr.bf16.mxu0 0
        %1337 = vmatpush1.bf16.xpose.msra.mxu0 %v1321
        %1338 = vmatprep.subr.bf16.mxu0 0
        %1339 = vmatpush1.bf16.xpose.msra.mxu0 %v1318
        %1340 = vmatprep.subr.bf16.mxu0 0
        %1341 = vmatpush1.bf16.xpose.msra.mxu0 %v1315
        %1342 = vmatprep.subr.bf16.mxu0 0
        %1343 = vmatpush2.bf16.xpose.msra.mxu0 0
        %1344 = vmatprep.subr.bf16.mxu0 0
        %1345 = vmatpush2.bf16.xpose.msra.mxu0 0
        %1346 = vmatprep.subr.bf16.mxu0 0
        %1347 = vmatpush2.bf16.xpose.msra.mxu0 0
        %1348 = vmatprep.subr.bf16.mxu0 0
        %1349 = vmatpush2.bf16.xpose.msra.mxu0 0
        %1350 = vmatprep.subr.bf16.mxu0 0
        %1351 = vmatpush2.bf16.xpose.msra.mxu0 0
        %1352 = vmatprep.subr.bf16.mxu0 0
        %1353 = vmatpush2.bf16.xpose.msra.mxu0 0
        %1354 = vmatprep.subr.bf16.mxu0 0
        %1355 = vmatpush2.bf16.xpose.msra.mxu0 0
        %1356 = vmatprep.subr.bf16.mxu0 0
        %1357 = vmatpush2.bf16.xpose.msra.mxu0 0
        %1358 = vmatprep.mubr.bf16.mxu0 0
        %1359 = vmatmul.mubr.bf16.gmra.mxu0 %v1312
        %v1360 = vpop.f32.mrf.mxu0
        %v1361 = vadd.f32 0.0, %v1360
        %v1362 = vpop.f32.mrf.mxu0
        %v1363 = vpop.f32.mrf.mxu0
        %v1364 = vadd.f32 0.0, %v1363
        %v1365 = vpop.f32.mrf.mxu0
        %1366 = vdwg.mxu0
        %vm1367 = vcmask 523264
        %v1368 = vsel %vm1367, %v1133, -inf
        %1369 = vmax.xlane.f32.xlu0 %v1368
        %v1370 = vpop.xlane.xlu0 %1369
        %v1371 = vsel %vm1367, %v1136, -inf
        %1372 = vmax.xlane.f32.xlu0 %v1371
        %v1373 = vpop.xlane.xlu0 %1372
        %v1374 = vsel %vm1367, %v1209, -inf
        %1375 = vmax.xlane.f32.xlu0 %v1374
        %v1376 = vpop.xlane.xlu0 %1375
        %v1377 = vsel %vm1367, %v1212, -inf
        %1378 = vmax.xlane.f32.xlu0 %v1377
        %v1379 = vpop.xlane.xlu0 %1378
        %v1380 = vsel %vm1367, %v1285, -inf
        %1381 = vmax.xlane.f32.xlu0 %v1380
        %v1382 = vpop.xlane.xlu0 %1381
        %v1383 = vsel %vm1367, %v1288, -inf
        %1384 = vmax.xlane.f32.xlu0 %v1383
        %v1385 = vpop.xlane.xlu0 %1384
        %v1386 = vsel %vm1367, %v1361, -inf
        %1387 = vmax.xlane.f32.xlu0 %v1386
        %v1388 = vpop.xlane.xlu0 %1387
        %v1389 = vsel %vm1367, %v1364, -inf
        %1390 = vmax.xlane.f32.xlu0 %v1389
        %v1391 = vpop.xlane.xlu0 %1390
        %v1392 = vsub.f32 %v1133, %v1370
        %v1393 = vsub.f32 %v1136, %v1373
        %v1394 = vsub.f32 %v1209, %v1376
        %v1395 = vsub.f32 %v1212, %v1379
        %v1396 = vsub.f32 %v1285, %v1382
        %v1397 = vsub.f32 %v1288, %v1385
        %v1398 = vsub.f32 %v1361, %v1388
        %v1399 = vsub.f32 %v1364, %v1391
        %v1400 = vmul.f32 %v1392, 1.442695
        %v1401 = vpow.pop %v1400
        %v1402 = vmul.f32 %v1393, 1.442695
        %v1403 = vpow.pop %v1402
        %v1404 = vmul.f32 %v1394, 1.442695
        %v1405 = vpow.pop %v1404
        %v1406 = vmul.f32 %v1395, 1.442695
        %v1407 = vpow.pop %v1406
        %v1408 = vmul.f32 %v1396, 1.442695
        %v1409 = vpow.pop %v1408
        %v1410 = vmul.f32 %v1397, 1.442695
        %v1411 = vpow.pop %v1410
        %v1412 = vmul.f32 %v1398, 1.442695
        %v1413 = vpow.pop %v1412
        %v1414 = vmul.f32 %v1399, 1.442695
        %v1415 = vpow.pop %v1414
        %v1416 = vsel %vm1367, %v1401, 0.0
        %1417 = vadd.xlane.f32.xlu0 %v1416
        %v1418 = vpop.xlane.xlu0 %1417
        %v1419 = vsel %vm1367, %v1403, 0.0
        %1420 = vadd.xlane.f32.xlu0 %v1419
        %v1421 = vpop.xlane.xlu0 %1420
        %v1422 = vsel %vm1367, %v1405, 0.0
        %1423 = vadd.xlane.f32.xlu0 %v1422
        %v1424 = vpop.xlane.xlu0 %1423
        %v1425 = vsel %vm1367, %v1407, 0.0
        %1426 = vadd.xlane.f32.xlu0 %v1425
        %v1427 = vpop.xlane.xlu0 %1426
        %v1428 = vsel %vm1367, %v1409, 0.0
        %1429 = vadd.xlane.f32.xlu0 %v1428
        %v1430 = vpop.xlane.xlu0 %1429
        %v1431 = vsel %vm1367, %v1411, 0.0
        %1432 = vadd.xlane.f32.xlu0 %v1431
        %v1433 = vpop.xlane.xlu0 %1432
        %v1434 = vsel %vm1367, %v1413, 0.0
        %1435 = vadd.xlane.f32.xlu0 %v1434
        %v1436 = vpop.xlane.xlu0 %1435
        %v1437 = vsel %vm1367, %v1415, 0.0
        %1438 = vadd.xlane.f32.xlu0 %v1437
        %v1439 = vpop.xlane.xlu0 %1438
        %v1440 = vrcp.pop %v1418
        %v1441 = vrcp.pop %v1421
        %v1442 = vrcp.pop %v1424
        %v1443 = vrcp.pop %v1427
        %v1444 = vrcp.pop %v1430
        %v1445 = vrcp.pop %v1433
        %v1446 = vrcp.pop %v1436
        %v1447 = vrcp.pop %v1439
        %v1448 = vmul.f32 %v1401, %v1440
        %v1449 = vmul.f32 %v1403, %v1441
        %v1450 = vmul.f32 %v1405, %v1442
        %v1451 = vmul.f32 %v1407, %v1443
        %v1452 = vmul.f32 %v1409, %v1444
        %v1453 = vmul.f32 %v1411, %v1445
        %v1454 = vmul.f32 %v1413, %v1446
        %v1455 = vmul.f32 %v1415, %v1447
        %v1456 = vpack.c.bf16 %v1449, %v1448
        %v1457 = vpack.c.bf16 %v1451, %v1450
        %v1458 = vpack.c.bf16 %v1453, %v1452
        %v1459 = vpack.c.bf16 %v1455, %v1454
        %v1460 = vld [vmem:[#allocation3] sm:$0xf]
        %v1461 = vld [vmem:[#allocation3 + $0x4] sm:$0xf]
        %v1462 = vld [vmem:[#allocation3 + $0x8] sm:$0xf]
        %v1463 = vld [vmem:[#allocation3 + $0xc] sm:$0xf]
        %v1464 = vld [vmem:[#allocation3 + $0x10] sm:$0xf]
        %v1465 = vld [vmem:[#allocation3 + $0x14] sm:$0xf]
        %v1466 = vld [vmem:[#allocation3 + $0x18] sm:$0xf]
        %v1467 = vld [vmem:[#allocation3 + $0x1c] sm:$0xf]
        %v1468 = vld [vmem:[#allocation3 + $0x20] sm:$0xf]
        %v1469 = vld [vmem:[#allocation3 + $0x24] sm:$0xf]
        %v1470 = vld [vmem:[#allocation3 + $0x28] sm:$0xf]
        %v1471 = vld [vmem:[#allocation3 + $0x2c] sm:$0xf]
        %v1472 = vld [vmem:[#allocation3 + $0x30] sm:$0xf]
        %v1473 = vld [vmem:[#allocation3 + $0x34] sm:$0xf]
        %v1474 = vld [vmem:[#allocation3 + $0x38] sm:$0xf]
        %v1475 = vld [vmem:[#allocation3 + $0x3c] sm:$0xf]
        %v1476 = vld [vmem:[#allocation3 + $0x40] sm:$0xf]
        %v1477 = vld [vmem:[#allocation3 + $0x44] sm:$0xf]
        %v1478 = vld [vmem:[#allocation3 + $0x48] sm:$0xf]
        %v1479 = vld [vmem:[#allocation3 + $0x4c] sm:$0xf]
        %v1480 = vld [vmem:[#allocation3 + $0x50] sm:$0xf]
        %v1481 = vld [vmem:[#allocation3 + $0x54] sm:$0xf]
        %v1482 = vld [vmem:[#allocation3 + $0x58] sm:$0xf]
        %v1483 = vld [vmem:[#allocation3 + $0x5c] sm:$0xf]
        %v1484 = vld [vmem:[#allocation3 + $0x60] sm:$0xf]
        %v1485 = vld [vmem:[#allocation3 + $0x64] sm:$0xf]
        %v1486 = vld [vmem:[#allocation3 + $0x68] sm:$0xf]
        %v1487 = vld [vmem:[#allocation3 + $0x6c] sm:$0xf]
        %v1488 = vld [vmem:[#allocation3 + $0x70] sm:$0xf]
        %v1489 = vld [vmem:[#allocation3 + $0x74] sm:$0xf]
        %v1490 = vld [vmem:[#allocation3 + $0x78] sm:$0xf]
        %v1491 = vld [vmem:[#allocation3 + $0x7c] sm:$0xf]
        %v1500 = vunpack.c.l.b16 %v1460
        %v1501 = vunpack.c.l.b16 %v1461
        %v1502 = vunpack.c.l.b16 %v1462
        %v1503 = vunpack.c.l.b16 %v1463
        %v1504 = vunpack.c.l.b16 %v1464
        %v1505 = vunpack.c.l.b16 %v1465
        %v1506 = vunpack.c.l.b16 %v1466
        %v1507 = vunpack.c.l.b16 %v1467
        %v1508 = vpack.c.b16 %v1501, %v1500
        %v1509 = vpack.c.b16 %v1503, %v1502
        %v1510 = vpack.c.b16 %v1505, %v1504
        %v1511 = vpack.c.b16 %v1507, %v1506
        %v1517 = vsel %vm1367, %v1456, 0
        %1519 = vmatprep.subr.bf16.mxu0 0
        %1520 = vmatpush1.bf16.msra.mxu0 0
        %1521 = vmatprep.subr.bf16.mxu0 0
        %1522 = vmatpush1.bf16.msra.mxu0 0
        %1523 = vmatprep.subr.bf16.mxu0 0
        %1524 = vmatpush1.bf16.msra.mxu0 0
        %1525 = vmatprep.subr.bf16.mxu0 0
        %1526 = vmatpush1.bf16.msra.mxu0 0
        %1527 = vmatprep.subr.bf16.mxu0 0
        %1528 = vmatpush1.bf16.msra.mxu0 %v1511
        %1529 = vmatprep.subr.bf16.mxu0 0
        %1530 = vmatpush1.bf16.msra.mxu0 %v1510
        %1531 = vmatprep.subr.bf16.mxu0 0
        %1532 = vmatpush1.bf16.msra.mxu0 %v1509
        %1533 = vmatprep.subr.bf16.mxu0 0
        %1534 = vmatpush1.bf16.msra.mxu0 %v1508
        %1535 = vmatprep.subr.bf16.mxu0 0
        %1536 = vmatpush2.bf16.msra.mxu0 0
        %1537 = vmatprep.subr.bf16.mxu0 0
        %1538 = vmatpush2.bf16.msra.mxu0 0
        %1539 = vmatprep.subr.bf16.mxu0 0
        %1540 = vmatpush2.bf16.msra.mxu0 0
        %1541 = vmatprep.subr.bf16.mxu0 0
        %1542 = vmatpush2.bf16.msra.mxu0 0
        %1543 = vmatprep.subr.bf16.mxu0 0
        %1544 = vmatpush2.bf16.msra.mxu0 0
        %1545 = vmatprep.subr.bf16.mxu0 0
        %1546 = vmatpush2.bf16.msra.mxu0 0
        %1547 = vmatprep.subr.bf16.mxu0 0
        %1548 = vmatpush2.bf16.msra.mxu0 0
        %1549 = vmatprep.subr.bf16.mxu0 0
        %1550 = vmatpush2.bf16.msra.mxu0 0
        %1551 = vmatprep.mubr.bf16.mxu0 0
        %1552 = vmatmul.mubr.bf16.gmra.mxu0 %v1517
        %v1553 = vpop.f32.mrf.mxu0
        %v1554 = vadd.f32 0.0, %v1553
        %v1555 = vpop.f32.mrf.mxu0
        %v1556 = vpop.f32.mrf.mxu0
        %v1557 = vadd.f32 0.0, %v1556
        %v1558 = vpop.f32.mrf.mxu0
        %1559 = vdwg.mxu0
        %v1568 = vunpack.c.l.b16 %v1468
        %v1569 = vunpack.c.l.b16 %v1469
        %v1570 = vunpack.c.l.b16 %v1470
        %v1571 = vunpack.c.l.b16 %v1471
        %v1572 = vunpack.c.l.b16 %v1472
        %v1573 = vunpack.c.l.b16 %v1473
        %v1574 = vunpack.c.l.b16 %v1474
        %v1575 = vunpack.c.l.b16 %v1475
        %v1576 = vpack.c.b16 %v1569, %v1568
        %v1577 = vpack.c.b16 %v1571, %v1570
        %v1578 = vpack.c.b16 %v1573, %v1572
        %v1579 = vpack.c.b16 %v1575, %v1574
        %v1585 = vsel %vm1367, %v1457, 0
        %1587 = vmatprep.subr.bf16.mxu0 0
        %1588 = vmatpush1.bf16.msra.mxu0 0
        %1589 = vmatprep.subr.bf16.mxu0 0
        %1590 = vmatpush1.bf16.msra.mxu0 0
        %1591 = vmatprep.subr.bf16.mxu0 0
        %1592 = vmatpush1.bf16.msra.mxu0 0
        %1593 = vmatprep.subr.bf16.mxu0 0
        %1594 = vmatpush1.bf16.msra.mxu0 0
        %1595 = vmatprep.subr.bf16.mxu0 0
        %1596 = vmatpush1.bf16.msra.mxu0 %v1579
        %1597 = vmatprep.subr.bf16.mxu0 0
        %1598 = vmatpush1.bf16.msra.mxu0 %v1578
        %1599 = vmatprep.subr.bf16.mxu0 0
        %1600 = vmatpush1.bf16.msra.mxu0 %v1577
        %1601 = vmatprep.subr.bf16.mxu0 0
        %1602 = vmatpush1.bf16.msra.mxu0 %v1576
        %1603 = vmatprep.subr.bf16.mxu0 0
        %1604 = vmatpush2.bf16.msra.mxu0 0
        %1605 = vmatprep.subr.bf16.mxu0 0
        %1606 = vmatpush2.bf16.msra.mxu0 0
        %1607 = vmatprep.subr.bf16.mxu0 0
        %1608 = vmatpush2.bf16.msra.mxu0 0
        %1609 = vmatprep.subr.bf16.mxu0 0
        %1610 = vmatpush2.bf16.msra.mxu0 0
        %1611 = vmatprep.subr.bf16.mxu0 0
        %1612 = vmatpush2.bf16.msra.mxu0 0
        %1613 = vmatprep.subr.bf16.mxu0 0
        %1614 = vmatpush2.bf16.msra.mxu0 0
        %1615 = vmatprep.subr.bf16.mxu0 0
        %1616 = vmatpush2.bf16.msra.mxu0 0
        %1617 = vmatprep.subr.bf16.mxu0 0
        %1618 = vmatpush2.bf16.msra.mxu0 0
        %1619 = vmatprep.mubr.bf16.mxu0 0
        %1620 = vmatmul.mubr.bf16.gmra.mxu0 %v1585
        %v1621 = vpop.f32.mrf.mxu0
        %v1622 = vadd.f32 0.0, %v1621
        %v1623 = vpop.f32.mrf.mxu0
        %v1624 = vpop.f32.mrf.mxu0
        %v1625 = vadd.f32 0.0, %v1624
        %v1626 = vpop.f32.mrf.mxu0
        %1627 = vdwg.mxu0
        %v1636 = vunpack.c.l.b16 %v1476
        %v1637 = vunpack.c.l.b16 %v1477
        %v1638 = vunpack.c.l.b16 %v1478
        %v1639 = vunpack.c.l.b16 %v1479
        %v1640 = vunpack.c.l.b16 %v1480
        %v1641 = vunpack.c.l.b16 %v1481
        %v1642 = vunpack.c.l.b16 %v1482
        %v1643 = vunpack.c.l.b16 %v1483
        %v1644 = vpack.c.b16 %v1637, %v1636
        %v1645 = vpack.c.b16 %v1639, %v1638
        %v1646 = vpack.c.b16 %v1641, %v1640
        %v1647 = vpack.c.b16 %v1643, %v1642
        %v1653 = vsel %vm1367, %v1458, 0
        %1655 = vmatprep.subr.bf16.mxu0 0
        %1656 = vmatpush1.bf16.msra.mxu0 0
        %1657 = vmatprep.subr.bf16.mxu0 0
        %1658 = vmatpush1.bf16.msra.mxu0 0
        %1659 = vmatprep.subr.bf16.mxu0 0
        %1660 = vmatpush1.bf16.msra.mxu0 0
        %1661 = vmatprep.subr.bf16.mxu0 0
        %1662 = vmatpush1.bf16.msra.mxu0 0
        %1663 = vmatprep.subr.bf16.mxu0 0
        %1664 = vmatpush1.bf16.msra.mxu0 %v1647
        %1665 = vmatprep.subr.bf16.mxu0 0
        %1666 = vmatpush1.bf16.msra.mxu0 %v1646
        %1667 = vmatprep.subr.bf16.mxu0 0
        %1668 = vmatpush1.bf16.msra.mxu0 %v1645
        %1669 = vmatprep.subr.bf16.mxu0 0
        %1670 = vmatpush1.bf16.msra.mxu0 %v1644
        %1671 = vmatprep.subr.bf16.mxu0 0
        %1672 = vmatpush2.bf16.msra.mxu0 0
        %1673 = vmatprep.subr.bf16.mxu0 0
        %1674 = vmatpush2.bf16.msra.mxu0 0
        %1675 = vmatprep.subr.bf16.mxu0 0
        %1676 = vmatpush2.bf16.msra.mxu0 0
        %1677 = vmatprep.subr.bf16.mxu0 0
        %1678 = vmatpush2.bf16.msra.mxu0 0
        %1679 = vmatprep.subr.bf16.mxu0 0
        %1680 = vmatpush2.bf16.msra.mxu0 0
        %1681 = vmatprep.subr.bf16.mxu0 0
        %1682 = vmatpush2.bf16.msra.mxu0 0
        %1683 = vmatprep.subr.bf16.mxu0 0
        %1684 = vmatpush2.bf16.msra.mxu0 0
        %1685 = vmatprep.subr.bf16.mxu0 0
        %1686 = vmatpush2.bf16.msra.mxu0 0
        %1687 = vmatprep.mubr.bf16.mxu0 0
        %1688 = vmatmul.mubr.bf16.gmra.mxu0 %v1653
        %v1689 = vpop.f32.mrf.mxu0
        %v1690 = vadd.f32 0.0, %v1689
        %v1691 = vpop.f32.mrf.mxu0
        %v1692 = vpop.f32.mrf.mxu0
        %v1693 = vadd.f32 0.0, %v1692
        %v1694 = vpop.f32.mrf.mxu0
        %1695 = vdwg.mxu0
        %v1704 = vunpack.c.l.b16 %v1484
        %v1705 = vunpack.c.l.b16 %v1485
        %v1706 = vunpack.c.l.b16 %v1486
        %v1707 = vunpack.c.l.b16 %v1487
        %v1708 = vunpack.c.l.b16 %v1488
        %v1709 = vunpack.c.l.b16 %v1489
        %v1710 = vunpack.c.l.b16 %v1490
        %v1711 = vunpack.c.l.b16 %v1491
        %v1712 = vpack.c.b16 %v1705, %v1704
        %v1713 = vpack.c.b16 %v1707, %v1706
        %v1714 = vpack.c.b16 %v1709, %v1708
        %v1715 = vpack.c.b16 %v1711, %v1710
        %v1721 = vsel %vm1367, %v1459, 0
        %1723 = vmatprep.subr.bf16.mxu0 0
        %1724 = vmatpush1.bf16.msra.mxu0 0
        %1725 = vmatprep.subr.bf16.mxu0 0
        %1726 = vmatpush1.bf16.msra.mxu0 0
        %1727 = vmatprep.subr.bf16.mxu0 0
        %1728 = vmatpush1.bf16.msra.mxu0 0
        %1729 = vmatprep.subr.bf16.mxu0 0
        %1730 = vmatpush1.bf16.msra.mxu0 0
        %1731 = vmatprep.subr.bf16.mxu0 0
        %1732 = vmatpush1.bf16.msra.mxu0 %v1715
        %1733 = vmatprep.subr.bf16.mxu0 0
        %1734 = vmatpush1.bf16.msra.mxu0 %v1714
        %1735 = vmatprep.subr.bf16.mxu0 0
        %1736 = vmatpush1.bf16.msra.mxu0 %v1713
        %1737 = vmatprep.subr.bf16.mxu0 0
        %1738 = vmatpush1.bf16.msra.mxu0 %v1712
        %1739 = vmatprep.subr.bf16.mxu0 0
        %1740 = vmatpush2.bf16.msra.mxu0 0
        %1741 = vmatprep.subr.bf16.mxu0 0
        %1742 = vmatpush2.bf16.msra.mxu0 0
        %1743 = vmatprep.subr.bf16.mxu0 0
        %1744 = vmatpush2.bf16.msra.mxu0 0
        %1745 = vmatprep.subr.bf16.mxu0 0
        %1746 = vmatpush2.bf16.msra.mxu0 0
        %1747 = vmatprep.subr.bf16.mxu0 0
        %1748 = vmatpush2.bf16.msra.mxu0 0
        %1749 = vmatprep.subr.bf16.mxu0 0
        %1750 = vmatpush2.bf16.msra.mxu0 0
        %1751 = vmatprep.subr.bf16.mxu0 0
        %1752 = vmatpush2.bf16.msra.mxu0 0
        %1753 = vmatprep.subr.bf16.mxu0 0
        %1754 = vmatpush2.bf16.msra.mxu0 0
        %1755 = vmatprep.mubr.bf16.mxu0 0
        %1756 = vmatmul.mubr.bf16.gmra.mxu0 %v1721
        %v1757 = vpop.f32.mrf.mxu0
        %v1758 = vadd.f32 0.0, %v1757
        %v1759 = vpop.f32.mrf.mxu0
        %v1760 = vpop.f32.mrf.mxu0
        %v1761 = vadd.f32 0.0, %v1760
        %v1762 = vpop.f32.mrf.mxu0
        %1763 = vdwg.mxu0
        %1766 = vrot.lane.b32.xlu0 %v1622, 32
        %v1767 = vpop.permute.xlu0 %1766
        %1768 = vrot.lane.b32.xlu0 %v1625, 32
        %v1769 = vpop.permute.xlu0 %1768
        %1774 = vrot.lane.b32.xlu0 %v1690, 64
        %v1775 = vpop.permute.xlu0 %1774
        %1776 = vrot.lane.b32.xlu0 %v1693, 64
        %v1777 = vpop.permute.xlu0 %1776
        %1782 = vrot.lane.b32.xlu0 %v1758, 96
        %v1783 = vpop.permute.xlu0 %1782
        %1784 = vrot.lane.b32.xlu0 %v1761, 96
        %v1785 = vpop.permute.xlu0 %1784
        %v1788 = vsel %vm1082, %v1554, %v1767
        %v1789 = vsel %vm1082, %v1557, %v1769
        %v1790 = vsel %vm1367, %v1788, %v1775
        %v1791 = vsel %vm1367, %v1789, %v1777
        %vm1792 = vcmask 785408
        %v1793 = vsel %vm1792, %v1790, %v1783
        %v1794 = vsel %vm1792, %v1791, %v1785
        %v1795 = vpack.c.bf16 %v1794, %v1793
        %v1796 = vld [vmem:[#allocation9] sm:$0xf]
        %v1797 = vld [vmem:[#allocation9 + $0x4] sm:$0xf]
        %v1798 = vld [vmem:[#allocation9 + $0x8] sm:$0xf]
        %v1799 = vld [vmem:[#allocation9 + $0xc] sm:$0xf]
        %v1800 = vld [vmem:[#allocation9 + $0x10] sm:$0xf]
        %v1801 = vld [vmem:[#allocation9 + $0x14] sm:$0xf]
        %v1802 = vld [vmem:[#allocation9 + $0x18] sm:$0xf]
        %v1803 = vld [vmem:[#allocation9 + $0x1c] sm:$0xf]
        %v1804 = vld [vmem:[#allocation9 + $0x20] sm:$0xf]
        %v1805 = vld [vmem:[#allocation9 + $0x24] sm:$0xf]
        %v1806 = vld [vmem:[#allocation9 + $0x28] sm:$0xf]
        %v1807 = vld [vmem:[#allocation9 + $0x2c] sm:$0xf]
        %v1808 = vld [vmem:[#allocation9 + $0x30] sm:$0xf]
        %v1809 = vld [vmem:[#allocation9 + $0x34] sm:$0xf]
        %v1810 = vld [vmem:[#allocation9 + $0x38] sm:$0xf]
        %v1811 = vld [vmem:[#allocation9 + $0x3c] sm:$0xf]
        %v1812 = vld [vmem:[%s7] sm:$0x1]
        %v1813 = vlaneseq
        %v1814 = vshrl.u32 %v1813, 7
        %v1815 = vsub.s32 0, %v1814
        %v1816 = vrot.slane %v1812, %v1815
        %v1833 = vunpack.c.l.b16 %v1796
        %v1834 = vunpack.c.l.b16 %v1797
        %v1835 = vunpack.c.l.b16 %v1798
        %v1836 = vunpack.c.l.b16 %v1799
        %v1837 = vunpack.c.l.b16 %v1800
        %v1838 = vunpack.c.l.b16 %v1801
        %v1839 = vunpack.c.l.b16 %v1802
        %v1840 = vunpack.c.l.b16 %v1803
        %v1841 = vunpack.c.l.b16 %v1804
        %v1842 = vunpack.c.l.b16 %v1805
        %v1843 = vunpack.c.l.b16 %v1806
        %v1844 = vunpack.c.l.b16 %v1807
        %v1845 = vunpack.c.l.b16 %v1808
        %v1846 = vunpack.c.l.b16 %v1809
        %v1847 = vunpack.c.l.b16 %v1810
        %v1848 = vunpack.c.l.b16 %v1811
        %v1849 = vpack.c.b16 %v1834, %v1833
        %v1850 = vpack.c.b16 %v1836, %v1835
        %v1851 = vpack.c.b16 %v1838, %v1837
        %v1852 = vpack.c.b16 %v1840, %v1839
        %v1853 = vpack.c.b16 %v1842, %v1841
        %v1854 = vpack.c.b16 %v1844, %v1843
        %v1855 = vpack.c.b16 %v1846, %v1845
        %v1856 = vpack.c.b16 %v1848, %v1847
        %1865 = vmatprep.subr.bf16.mxu0 0
        %1866 = vmatpush1.bf16.msra.mxu0 %v1856
        %1867 = vmatprep.subr.bf16.mxu0 0
        %1868 = vmatpush1.bf16.msra.mxu0 %v1855
        %1869 = vmatprep.subr.bf16.mxu0 0
        %1870 = vmatpush1.bf16.msra.mxu0 %v1854
        %1871 = vmatprep.subr.bf16.mxu0 0
        %1872 = vmatpush1.bf16.msra.mxu0 %v1853
        %1873 = vmatprep.subr.bf16.mxu0 0
        %1874 = vmatpush1.bf16.msra.mxu0 %v1852
        %1875 = vmatprep.subr.bf16.mxu0 0
        %1876 = vmatpush1.bf16.msra.mxu0 %v1851
        %1877 = vmatprep.subr.bf16.mxu0 0
        %1878 = vmatpush1.bf16.msra.mxu0 %v1850
        %1879 = vmatprep.subr.bf16.mxu0 0
        %1880 = vmatpush1.bf16.msra.mxu0 %v1849
        %1881 = vmatprep.subr.bf16.mxu0 0
        %1882 = vmatpush2.bf16.msra.mxu0 0
        %1883 = vmatprep.subr.bf16.mxu0 0
        %1884 = vmatpush2.bf16.msra.mxu0 0
        %1885 = vmatprep.subr.bf16.mxu0 0
        %1886 = vmatpush2.bf16.msra.mxu0 0
        %1887 = vmatprep.subr.bf16.mxu0 0
        %1888 = vmatpush2.bf16.msra.mxu0 0
        %1889 = vmatprep.subr.bf16.mxu0 0
        %1890 = vmatpush2.bf16.msra.mxu0 0
        %1891 = vmatprep.subr.bf16.mxu0 0
        %1892 = vmatpush2.bf16.msra.mxu0 0
        %1893 = vmatprep.subr.bf16.mxu0 0
        %1894 = vmatpush2.bf16.msra.mxu0 0
        %1895 = vmatprep.subr.bf16.mxu0 0
        %1896 = vmatpush2.bf16.msra.mxu0 0
        %1897 = vmatprep.mubr.bf16.mxu0 0
        %1898 = vmatmul.mubr.bf16.gmra.mxu0 %v1795
        %v1899 = vpop.f32.mrf.mxu0
        %v1900 = vadd.f32 %v1816, %v1899
        %v1901 = vpop.f32.mrf.mxu0
        %v1902 = vpop.f32.mrf.mxu0
        %v1903 = vadd.f32 %v1816, %v1902
        %v1904 = vpop.f32.mrf.mxu0
        %1905 = vdwg.mxu0
        %v1906 = vadd.f32 %v889, %v1900
        %v1907 = vadd.f32 %v890, %v1903
        %v1908 = vld [vmem:[%s7 + $0x1] sm:$0x1]
        %v1909 = vld [vmem:[%s7 + $0x2] sm:$0x1]
        %1910 = vadd.xlane.f32.xlu0 %v1906
        %v1911 = vpop.xlane.xlu0 %1910
        %1912 = vadd.xlane.f32.xlu0 %v1907
        %v1913 = vpop.xlane.xlu0 %1912
        %v1914 = vrcp.pop 128.0
        %v1915 = vmul.f32 %v1911, %v1914
        %v1916 = vmul.f32 %v1913, %v1914
        %v1917 = vsub.f32 %v1906, %v1915
        %v1918 = vsub.f32 %v1907, %v1916
        %v1919 = vmul.f32 %v1917, %v1917
        %v1920 = vmul.f32 %v1918, %v1918
        %1921 = vadd.xlane.f32.xlu0 %v1919
        %v1922 = vpop.xlane.xlu0 %1921
        %1923 = vadd.xlane.f32.xlu0 %v1920
        %v1924 = vpop.xlane.xlu0 %1923
        %v1925 = vmul.f32 %v1922, %v1914
        %v1926 = vmul.f32 %v1924, %v1914
        %v1927 = vadd.f32 %v1925, 1e-05
        %v1928 = vadd.f32 %v1926, 1e-05
        %v1929 = vrsqrt.pop %v1927
        %v1930 = vrsqrt.pop %v1928
        %v1931 = vmul.f32 %v1917, %v1929
        %v1932 = vmul.f32 %v1918, %v1930
        %v1933 = vlaneseq
        %v1934 = vshrl.u32 %v1933, 7
        %v1935 = vsub.s32 0, %v1934
        %v1936 = vrot.slane %v1908, %v1935
        %v1937 = vmul.f32 %v1931, %v1936
        %v1938 = vmul.f32 %v1932, %v1936
        %v1939 = vlaneseq
        %v1940 = vshrl.u32 %v1939, 7
        %v1941 = vsub.s32 0, %v1940
        %v1942 = vrot.slane %v1909, %v1941
        %v1943 = vadd.f32 %v1937, %v1942
        %v1944 = vadd.f32 %v1938, %v1942
        %v1945 = vpack.c.bf16 %v1944, %v1943
        %v1946 = vld [vmem:[#allocation10] sm:$0xff]
        %v1947 = vld [vmem:[#allocation10 + $0x8] sm:$0xff]
        %v1948 = vld [vmem:[#allocation10 + $0x10] sm:$0xff]
        %v1949 = vld [vmem:[#allocation10 + $0x18] sm:$0xff]
        %v1950 = vld [vmem:[#allocation10 + $0x20] sm:$0xff]
        %v1951 = vld [vmem:[#allocation10 + $0x28] sm:$0xff]
        %v1952 = vld [vmem:[#allocation10 + $0x30] sm:$0xff]
        %v1953 = vld [vmem:[#allocation10 + $0x38] sm:$0xff]
        %v1954 = vld [vmem:[#allocation10 + $0x40] sm:$0xff]
        %v1955 = vld [vmem:[#allocation10 + $0x48] sm:$0xff]
        %v1956 = vld [vmem:[#allocation10 + $0x50] sm:$0xff]
        %v1957 = vld [vmem:[#allocation10 + $0x58] sm:$0xff]
        %v1958 = vld [vmem:[#allocation10 + $0x60] sm:$0xff]
        %v1959 = vld [vmem:[#allocation10 + $0x68] sm:$0xff]
        %v1960 = vld [vmem:[#allocation10 + $0x70] sm:$0xff]
        %v1961 = vld [vmem:[#allocation10 + $0x78] sm:$0xff]
        %v1962 = vld [vmem:[#allocation12] sm:$0x3]
        %v1964 = vlaneseq
        %v1965 = vshrl.u32 %v1964, 7
        %v1966 = vsub.s32 0, %v1965
        %v1967 = vrot.slane %v1962, %v1966
        %v1968 = vlaneseq
        %v1969 = vshrl.u32 %v1968, 7
        %v1970 = vsub.s32 1, %v1969
        %v1971 = vrot.slane %v1962, %v1970
        %v1990 = vunpack.c.l.b16 %v1946
        %v1991 = vunpack.c.h.b16 %v1946
        %v1992 = vunpack.c.l.b16 %v1947
        %v1993 = vunpack.c.h.b16 %v1947
        %v1994 = vunpack.c.l.b16 %v1948
        %v1995 = vunpack.c.h.b16 %v1948
        %v1996 = vunpack.c.l.b16 %v1949
        %v1997 = vunpack.c.h.b16 %v1949
        %v1998 = vunpack.c.l.b16 %v1950
        %v1999 = vunpack.c.h.b16 %v1950
        %v2000 = vunpack.c.l.b16 %v1951
        %v2001 = vunpack.c.h.b16 %v1951
        %v2002 = vunpack.c.l.b16 %v1952
        %v2003 = vunpack.c.h.b16 %v1952
        %v2004 = vunpack.c.l.b16 %v1953
        %v2005 = vunpack.c.h.b16 %v1953
        %v2006 = vunpack.c.l.b16 %v1954
        %v2007 = vunpack.c.h.b16 %v1954
        %v2008 = vunpack.c.l.b16 %v1955
        %v2009 = vunpack.c.h.b16 %v1955
        %v2010 = vunpack.c.l.b16 %v1956
        %v2011 = vunpack.c.h.b16 %v1956
        %v2012 = vunpack.c.l.b16 %v1957
        %v2013 = vunpack.c.h.b16 %v1957
        %v2014 = vunpack.c.l.b16 %v1958
        %v2015 = vunpack.c.h.b16 %v1958
        %v2016 = vunpack.c.l.b16 %v1959
        %v2017 = vunpack.c.h.b16 %v1959
        %v2018 = vunpack.c.l.b16 %v1960
        %v2019 = vunpack.c.h.b16 %v1960
        %v2020 = vunpack.c.l.b16 %v1961
        %v2021 = vunpack.c.h.b16 %v1961
        %v2022 = vpack.c.b16 %v1992, %v1990
        %v2023 = vpack.c.b16 %v1993, %v1991
        %v2024 = vpack.c.b16 %v1996, %v1994
        %v2025 = vpack.c.b16 %v1997, %v1995
        %v2026 = vpack.c.b16 %v2000, %v1998
        %v2027 = vpack.c.b16 %v2001, %v1999
        %v2028 = vpack.c.b16 %v2004, %v2002
        %v2029 = vpack.c.b16 %v2005, %v2003
        %v2030 = vpack.c.b16 %v2008, %v2006
        %v2031 = vpack.c.b16 %v2009, %v2007
        %v2032 = vpack.c.b16 %v2012, %v2010
        %v2033 = vpack.c.b16 %v2013, %v2011
        %v2034 = vpack.c.b16 %v2016, %v2014
        %v2035 = vpack.c.b16 %v2017, %v2015
        %v2036 = vpack.c.b16 %v2020, %v2018
        %v2037 = vpack.c.b16 %v2021, %v2019
        %2054 = vmatprep.subr.bf16.mxu0 %v2037
        %2055 = vmatpush1.bf16.msra.mxu0 %v2036
        %2056 = vmatprep.subr.bf16.mxu0 %v2035
        %2057 = vmatpush1.bf16.msra.mxu0 %v2034
        %2058 = vmatprep.subr.bf16.mxu0 %v2033
        %2059 = vmatpush1.bf16.msra.mxu0 %v2032
        %2060 = vmatprep.subr.bf16.mxu0 %v2031
        %2061 = vmatpush1.bf16.msra.mxu0 %v2030
        %2062 = vmatprep.subr.bf16.mxu0 %v2029
        %2063 = vmatpush1.bf16.msra.mxu0 %v2028
        %2064 = vmatprep.subr.bf16.mxu0 %v2027
        %2065 = vmatpush1.bf16.msra.mxu0 %v2026
        %2066 = vmatprep.subr.bf16.mxu0 %v2025
        %2067 = vmatpush1.bf16.msra.mxu0 %v2024
        %2068 = vmatprep.subr.bf16.mxu0 %v2023
        %2069 = vmatpush1.bf16.msra.mxu0 %v2022
        %2070 = vmatprep.subr.bf16.mxu0 0
        %2071 = vmatpush2.bf16.msra.mxu0 0
        %2072 = vmatprep.subr.bf16.mxu0 0
        %2073 = vmatpush2.bf16.msra.mxu0 0
        %2074 = vmatprep.subr.bf16.mxu0 0
        %2075 = vmatpush2.bf16.msra.mxu0 0
        %2076 = vmatprep.subr.bf16.mxu0 0
        %2077 = vmatpush2.bf16.msra.mxu0 0
        %2078 = vmatprep.subr.bf16.mxu0 0
        %2079 = vmatpush2.bf16.msra.mxu0 0
        %2080 = vmatprep.subr.bf16.mxu0 0
        %2081 = vmatpush2.bf16.msra.mxu0 0
        %2082 = vmatprep.subr.bf16.mxu0 0
        %2083 = vmatpush2.bf16.msra.mxu0 0
        %2084 = vmatprep.subr.bf16.mxu0 0
        %2085 = vmatpush2.bf16.msra.mxu0 0
        %2086 = vmatprep.mubr.bf16.mxu0 0
        %2087 = vmatmul.mubr.bf16.gmra.mxu0 %v1945
        %v2088 = vpop.f32.mrf.mxu0
        %v2089 = vadd.f32 %v1967, %v2088
        %v2090 = vpop.f32.mrf.mxu0
        %v2091 = vadd.f32 %v1971, %v2090
        %v2092 = vpop.f32.mrf.mxu0
        %v2093 = vadd.f32 %v1967, %v2092
        %v2094 = vpop.f32.mrf.mxu0
        %v2095 = vadd.f32 %v1971, %v2094
        %2096 = vdwg.mxu0
        %v2097 = vmax.f32 %v2089, 0.0
        %v2098 = vmax.f32 %v2091, 0.0
        %v2099 = vmax.f32 %v2093, 0.0
        %v2100 = vmax.f32 %v2095, 0.0
        %v2101 = vpack.c.bf16 %v2099, %v2097
        %v2102 = vpack.c.bf16 %v2100, %v2098
        %v2103 = vld [vmem:[#allocation13] sm:$0xf]
        %v2104 = vld [vmem:[#allocation13 + $0x4] sm:$0xf]
        %v2105 = vld [vmem:[#allocation13 + $0x8] sm:$0xf]
        %v2106 = vld [vmem:[#allocation13 + $0xc] sm:$0xf]
        %v2107 = vld [vmem:[#allocation13 + $0x10] sm:$0xf]
        %v2108 = vld [vmem:[#allocation13 + $0x14] sm:$0xf]
        %v2109 = vld [vmem:[#allocation13 + $0x18] sm:$0xf]
        %v2110 = vld [vmem:[#allocation13 + $0x1c] sm:$0xf]
        %v2111 = vld [vmem:[#allocation13 + $0x20] sm:$0xf]
        %v2112 = vld [vmem:[#allocation13 + $0x24] sm:$0xf]
        %v2113 = vld [vmem:[#allocation13 + $0x28] sm:$0xf]
        %v2114 = vld [vmem:[#allocation13 + $0x2c] sm:$0xf]
        %v2115 = vld [vmem:[#allocation13 + $0x30] sm:$0xf]
        %v2116 = vld [vmem:[#allocation13 + $0x34] sm:$0xf]
        %v2117 = vld [vmem:[#allocation13 + $0x38] sm:$0xf]
        %v2118 = vld [vmem:[#allocation13 + $0x3c] sm:$0xf]
        %v2119 = vld [vmem:[#allocation13 + $0x40] sm:$0xf]
        %v2120 = vld [vmem:[#allocation13 + $0x44] sm:$0xf]
        %v2121 = vld [vmem:[#allocation13 + $0x48] sm:$0xf]
        %v2122 = vld [vmem:[#allocation13 + $0x4c] sm:$0xf]
        %v2123 = vld [vmem:[#allocation13 + $0x50] sm:$0xf]
        %v2124 = vld [vmem:[#allocation13 + $0x54] sm:$0xf]
        %v2125 = vld [vmem:[#allocation13 + $0x58] sm:$0xf]
        %v2126 = vld [vmem:[#allocation13 + $0x5c] sm:$0xf]
        %v2127 = vld [vmem:[#allocation13 + $0x60] sm:$0xf]
        %v2128 = vld [vmem:[#allocation13 + $0x64] sm:$0xf]
        %v2129 = vld [vmem:[#allocation13 + $0x68] sm:$0xf]
        %v2130 = vld [vmem:[#allocation13 + $0x6c] sm:$0xf]
        %v2131 = vld [vmem:[#allocation13 + $0x70] sm:$0xf]
        %v2132 = vld [vmem:[#allocation13 + $0x74] sm:$0xf]
        %v2133 = vld [vmem:[#allocation13 + $0x78] sm:$0xf]
        %v2134 = vld [vmem:[#allocation13 + $0x7c] sm:$0xf]
        %v2135 = vld [vmem:[%s7 + $0x3] sm:$0x1]
        %v2136 = vlaneseq
        %v2137 = vshrl.u32 %v2136, 7
        %v2138 = vsub.s32 0, %v2137
        %v2139 = vrot.slane %v2135, %v2138
        %v2172 = vunpack.c.l.b16 %v2103
        %v2173 = vunpack.c.l.b16 %v2104
        %v2174 = vunpack.c.l.b16 %v2105
        %v2175 = vunpack.c.l.b16 %v2106
        %v2176 = vunpack.c.l.b16 %v2107
        %v2177 = vunpack.c.l.b16 %v2108
        %v2178 = vunpack.c.l.b16 %v2109
        %v2179 = vunpack.c.l.b16 %v2110
        %v2180 = vunpack.c.l.b16 %v2111
        %v2181 = vunpack.c.l.b16 %v2112
        %v2182 = vunpack.c.l.b16 %v2113
        %v2183 = vunpack.c.l.b16 %v2114
        %v2184 = vunpack.c.l.b16 %v2115
        %v2185 = vunpack.c.l.b16 %v2116
        %v2186 = vunpack.c.l.b16 %v2117
        %v2187 = vunpack.c.l.b16 %v2118
        %v2188 = vunpack.c.l.b16 %v2119
        %v2189 = vunpack.c.l.b16 %v2120
        %v2190 = vunpack.c.l.b16 %v2121
        %v2191 = vunpack.c.l.b16 %v2122
        %v2192 = vunpack.c.l.b16 %v2123
        %v2193 = vunpack.c.l.b16 %v2124
        %v2194 = vunpack.c.l.b16 %v2125
        %v2195 = vunpack.c.l.b16 %v2126
        %v2196 = vunpack.c.l.b16 %v2127
        %v2197 = vunpack.c.l.b16 %v2128
        %v2198 = vunpack.c.l.b16 %v2129
        %v2199 = vunpack.c.l.b16 %v2130
        %v2200 = vunpack.c.l.b16 %v2131
        %v2201 = vunpack.c.l.b16 %v2132
        %v2202 = vunpack.c.l.b16 %v2133
        %v2203 = vunpack.c.l.b16 %v2134
        %v2204 = vpack.c.b16 %v2173, %v2172
        %v2205 = vpack.c.b16 %v2175, %v2174
        %v2206 = vpack.c.b16 %v2177, %v2176
        %v2207 = vpack.c.b16 %v2179, %v2178
        %v2208 = vpack.c.b16 %v2181, %v2180
        %v2209 = vpack.c.b16 %v2183, %v2182
        %v2210 = vpack.c.b16 %v2185, %v2184
        %v2211 = vpack.c.b16 %v2187, %v2186
        %v2212 = vpack.c.b16 %v2189, %v2188
        %v2213 = vpack.c.b16 %v2191, %v2190
        %v2214 = vpack.c.b16 %v2193, %v2192
        %v2215 = vpack.c.b16 %v2195, %v2194
        %v2216 = vpack.c.b16 %v2197, %v2196
        %v2217 = vpack.c.b16 %v2199, %v2198
        %v2218 = vpack.c.b16 %v2201, %v2200
        %v2219 = vpack.c.b16 %v2203, %v2202
        %2236 = vmatprep.subr.bf16.mxu0 0
        %2237 = vmatpush1.bf16.msra.mxu0 %v2211
        %2238 = vmatprep.subr.bf16.mxu0 0
        %2239 = vmatpush1.bf16.msra.mxu0 %v2210
        %2240 = vmatprep.subr.bf16.mxu0 0
        %2241 = vmatpush1.bf16.msra.mxu0 %v2209
        %2242 = vmatprep.subr.bf16.mxu0 0
        %2243 = vmatpush1.bf16.msra.mxu0 %v2208
        %2244 = vmatprep.subr.bf16.mxu0 0
        %2245 = vmatpush1.bf16.msra.mxu0 %v2207
        %2246 = vmatprep.subr.bf16.mxu0 0
        %2247 = vmatpush1.bf16.msra.mxu0 %v2206
        %2248 = vmatprep.subr.bf16.mxu0 0
        %2249 = vmatpush1.bf16.msra.mxu0 %v2205
        %2250 = vmatprep.subr.bf16.mxu0 0
        %2251 = vmatpush1.bf16.msra.mxu0 %v2204
        %2252 = vmatprep.subr.bf16.mxu0 0
        %2253 = vmatpush2.bf16.msra.mxu0 %v2219
        %2254 = vmatprep.subr.bf16.mxu0 0
        %2255 = vmatpush2.bf16.msra.mxu0 %v2218
        %2256 = vmatprep.subr.bf16.mxu0 0
        %2257 = vmatpush2.bf16.msra.mxu0 %v2217
        %2258 = vmatprep.subr.bf16.mxu0 0
        %2259 = vmatpush2.bf16.msra.mxu0 %v2216
        %2260 = vmatprep.subr.bf16.mxu0 0
        %2261 = vmatpush2.bf16.msra.mxu0 %v2215
        %2262 = vmatprep.subr.bf16.mxu0 0
        %2263 = vmatpush2.bf16.msra.mxu0 %v2214
        %2264 = vmatprep.subr.bf16.mxu0 0
        %2265 = vmatpush2.bf16.msra.mxu0 %v2213
        %2266 = vmatprep.subr.bf16.mxu0 0
        %2267 = vmatpush2.bf16.msra.mxu0 %v2212
        %2268 = vmatprep.mubr.bf16.mxu0 %v2102
        %2269 = vmatmul.mubr.bf16.gmra.mxu0 %v2101
        %v2270 = vpop.f32.mrf.mxu0
        %v2271 = vadd.f32 %v2139, %v2270
        %v2272 = vpop.f32.mrf.mxu0
        %v2273 = vpop.f32.mrf.mxu0
        %v2274 = vadd.f32 %v2139, %v2273
        %v2275 = vpop.f32.mrf.mxu0
        %2276 = vdwg.mxu0
        %v2277 = vadd.f32 %v1943, %v2271
        %v2278 = vadd.f32 %v1944, %v2274
        %v2279 = vld [vmem:[%s7 + $0x4] sm:$0x1]
        %v2280 = vld [vmem:[%s7 + $0x5] sm:$0x1]
        %2281 = vadd.xlane.f32.xlu0 %v2277
        %v2282 = vpop.xlane.xlu0 %2281
        %2283 = vadd.xlane.f32.xlu0 %v2278
        %v2284 = vpop.xlane.xlu0 %2283
        %v2285 = vmul.f32 %v2282, %v1914
        %v2286 = vmul.f32 %v2284, %v1914
        %v2287 = vsub.f32 %v2277, %v2285
        %v2288 = vsub.f32 %v2278, %v2286
        %v2289 = vmul.f32 %v2287, %v2287
        %v2290 = vmul.f32 %v2288, %v2288
        %2291 = vadd.xlane.f32.xlu0 %v2289
        %v2292 = vpop.xlane.xlu0 %2291
        %2293 = vadd.xlane.f32.xlu0 %v2290
        %v2294 = vpop.xlane.xlu0 %2293
        %v2295 = vmul.f32 %v2292, %v1914
        %v2296 = vmul.f32 %v2294, %v1914
        %v2297 = vadd.f32 %v2295, 1e-05
        %v2298 = vadd.f32 %v2296, 1e-05
        %v2299 = vrsqrt.pop %v2297
        %v2300 = vrsqrt.pop %v2298
        %v2301 = vmul.f32 %v2287, %v2299
        %v2302 = vmul.f32 %v2288, %v2300
        %v2303 = vlaneseq
        %v2304 = vshrl.u32 %v2303, 7
        %v2305 = vsub.s32 0, %v2304
        %v2306 = vrot.slane %v2279, %v2305
        %v2307 = vmul.f32 %v2301, %v2306
        %v2308 = vmul.f32 %v2302, %v2306
        %v2309 = vlaneseq
        %v2310 = vshrl.u32 %v2309, 7
        %v2311 = vsub.s32 0, %v2310
        %v2312 = vrot.slane %v2280, %v2311
        %v2313 = vadd.f32 %v2307, %v2312
        %v2314 = vadd.f32 %v2308, %v2312
        %2315 = vst [vmem:[%s408] sm:$0xff] %v2313
        %2316 = vst [vmem:[%s408 + $0x8] sm:$0xff] %v2314
        %s2317 = sand.u32 %s223, 1
        %s2318 = scalar_lea.sflag [#allocation6], %s2317
        %s2319 = sand.u32 %s223, 1
        %s2320 = smul.addr %s2319, 16
        %s2321 = scalar_lea.vmem [#allocation15], %s2320
        // Predicated region
        $region81: #{tpu_custom_call.1} parent=51 // pred_check
          %p2322 = pneg %p233
        $region82: #{tpu_custom_call.1} parent=51 // pred_check_branch
          %2324 = sbr.rel (%p2322) target = $region84
        $region83: #{tpu_custom_call.1} parent=51 // pred_region
          %s2325 = smul.u32 2, %s33
          %s2327 = ssub.s32 256, 256
          %2328 = vsyncadd %s2318, %s2327
          %s2329 = smul.addr %s32, 8
          %s2330 = sadd.s32 %s2325, %s2329
          %s2331 = smul.addr %s2330, 128
          %s2332 = scalar_lea.hbm %s8, %s2331
          %s2333 = sshll.u32 %s2321, 4
          %s2334 = int_to_ptr.vmem [resolvable:$true] %s2333
          %2339 = dma.vmem_to_hbm [thread:$0]  %s2334, 256, %s2332, %s2318, 128, 128, 8
        $region84: #{tpu_custom_call.1} parent=51 // pred_fallthru
          _
      $region52: #{tpu_custom_call.1} parent=5 // pred_fallthru
        _
      %p2340 = scmp.le.s32.totalorder 2, %s23
      // Predicated region
      $region85: #{tpu_custom_call.1} parent=5 // pred_check
        %p2341 = pneg %p2340
      $region86: #{tpu_custom_call.1} parent=5 // pred_check_branch
        %2343 = sbr.rel (%p2341) target = $region88
      $region87: #{tpu_custom_call.1} parent=5 // pred_region
        %s2344 = ssub.s32 %s23, 2
        // Predicated region
        $region89: #{tpu_custom_call.1} parent=87 // pred_check
          %p2345 = pneg %p239
        $region90: #{tpu_custom_call.1} parent=87 // pred_check_branch
          %2347 = sbr.rel (%p2345) target = $region92
        $region91: #{tpu_custom_call.1} parent=87 // pred_region
          %s2348 = sand.u32 %s224, 1
          %s2349 = scalar_lea.sflag [#allocation6], %s2348
          %s2350 = sand.u32 %s224, 1
          %s2351 = smul.addr %s2350, 16
          %s2352 = scalar_lea.vmem [#allocation15], %s2351
          %2353 = dma.done %s2349, 256
        $region92: #{tpu_custom_call.1} parent=87 // pred_fallthru
          _
      $region88: #{tpu_custom_call.1} parent=5 // pred_fallthru
        _
    $region6: #{tpu_custom_call.1} parent=1 // loop_footer
      %s27 = sadd.s32 1, %s23
    $region7: #{tpu_custom_call.1} parent=1 // loop_footer_branch
      %22 = sbr.rel target = $region3
    $region8: #{tpu_custom_call.1} parent=1 // loop_exit
      _
    %2354 = vsyncpa [#allocation5], 1
    %s2355 = scalar_lea.sflag [#allocation5], 1
    %2356 = vsyncpa %s2355, 1
    %2357 = vsyncpa [#allocation8], 1
    %2358 = vsyncpa [#allocation11], 1
    %2359 = vsyncpa [#allocation14], 1
    %2360 = vsyncpa [#allocation6], 1
    %s2361 = scalar_lea.sflag [#allocation6], 1
    %2362 = vsyncpa %s2361, 1

</llo_original>
